<compile_context>
chip_gen: v7x
topology: tpu7x:2x2x1
jax: 0.10.0
libtpu: 0.0.40
codegen_flags: <defaults>
</compile_context>

<pallas_src>
import math
import functools

import jax
import jax.numpy as jnp
import numpy as np
from jax.experimental import pallas as pl
from jax.experimental.pallas import tpu as pltpu

# Full-f32 matmul precision everywhere (kernel dots, wrapper einsums and the pure-JAX
# reference) so the Pallas path and the reference agree to well below the tolerance.
jax.config.update("jax_default_matmul_precision", "highest")

EPSILON = 1e-8

_FILTERS = ("f00", "f01", "f02", "f10", "f11", "f22")
_FILTER_SRC = {"f00": 0, "f01": 0, "f02": 0, "f10": 1, "f11": 1, "f22": 2}
# Columns of the packed angular tensor [Y_0 | Y_1 | Y_2] used by each filter
# (one column per m_j term of that filter).
_FILTER_YCOLS = {
    "f00": (0,),
    "f01": (1, 2, 3),
    "f02": (4, 5, 6, 7, 8),
    "f10": (1, 2, 3),
    "f11": (1, 2, 3),
    "f22": (4, 5, 6, 7, 8),
}


# ----------------------------------------------------------------------------- kernel
def _fused_conv_kernel(rbf_ref, w1_ref, b1_ref, w2_ref, b2_ref, mask_ref,
                       y_ref, g_ref, e_ref, s_ref, out_ref, *, N, C, total, ycols):
    """All six TFN filters fused into a single kernel.

    rbf_ref : [P, R]      flattened pair RBF features (P = N*N, pair p = a*N + b)
    w1_ref  : [R, 6H]     concatenated radial-net layer-1 weights (pre-transposed)
    b1_ref  : [1, 6H]
    w2_ref  : [6H, 6C]    block-diagonal radial-net layer-2 weights (pre-transposed)
    b2_ref  : [1, 6C]
    mask_ref: [P, 1]      0 where d_ij < EPSILON (applied to every filter except f00)
    y_ref   : [P, 9]      packed angular factors [Y_0 | Y_1 | Y_2]
    g_ref   : [Jt, N, T]  zero-padded CG(x)layer-input blocks:
                          g[jj, b, off_t + f*I_t + i] = sum_k cg_t[i, j(jj), k]*x_t[b, f, k]
    e_ref   : [6C, T]     constant 0/1 lane-expansion matrix (radial -> per-(f, i) lane)
    s_ref   : [N, P]      constant 0/1 neighbour row-sum matrix (s[a, a*N + b] = 1)
    out_ref : [N, T]      out[a, off_t + f*I_t + i] =
                          sum_{b, j} radial_t[a, b, f] * Y_t[a, b, j] * g_t[i, j, b, f]
    """
    P = N * N

    # (1) six radial MLPs, batched into two MXU matmuls.
    h = jnp.dot(rbf_ref[...], w1_ref[...], preferred_element_type=jnp.float32) + b1_ref[...]
    h = jnp.maximum(h, 0.0)                                                      # ReLU
    radial = jnp.dot(h, w2_ref[...], preferred_element_type=jnp.float32) + b2_ref[...]  # [P, 6C]

    # (2) mask every filter except f00 (the first C lanes) where d_ij < EPSILON.
    col = jax.lax.broadcasted_iota(jnp.int32, radial.shape, 1)
    keep = (col < C).astype(jnp.float32)
    radial = radial * (keep + (1.0 - keep) * mask_ref[...])

    # (3) angular x CG x layer-input factor, accumulated once per (filter, j) term
    #     (hoisted out of any harmonic-index loop, pure VPU, no cross-lane reduces):
    #     z[p, q] = sum_jj Y[p, ycols[jj]] * g[jj, b(p), q]
    yall = y_ref[...]
    z = jnp.zeros((P, total), jnp.float32)
    for jj, yc in enumerate(ycols):
        g_b = g_ref[jj]                                                          # [N, T]
        g_p = jnp.broadcast_to(g_b[None, :, :], (N, N, total)).reshape(P, total)  # tile over a
        z = z + yall[:, yc:yc + 1] * g_p

    # (4) expand radial [P, 6C] -> [P, T] with a constant 0/1 matmul (MXU), multiply,
    # (5) and reduce over neighbours b with one more constant-matrix MXU matmul.
    rexp = jnp.dot(radial, e_ref[...], preferred_element_type=jnp.float32)       # [P, T]
    rw = rexp * z
    out_ref[...] = jnp.dot(s_ref[...], rw, preferred_element_type=jnp.float32)   # [N, T]


# ----------------------------------------------------------------------------- glue
def _unit_vectors(v):
    n = jnp.sqrt(jnp.maximum(jnp.sum(v * v, axis=-1, keepdims=True), EPSILON))
    return v / n


def _y2(rij):
    x, y, z = rij[..., 0], rij[..., 1], rij[..., 2]
    r2 = jnp.maximum(jnp.sum(rij * rij, axis=-1), EPSILON)
    return jnp.stack([x * y / r2,
                      y * z / r2,
                      (-x * x - y * y + 2.0 * z * z) / (2.0 * math.sqrt(3.0) * r2),
                      z * x / r2,
                      (x * x - y * y) / (2.0 * r2)], axis=-1)


def _eijk():
    e = np.zeros((3, 3, 3), np.float32)
    e[0, 1, 2] = e[1, 2, 0] = e[2, 0, 1] = 1.0
    e[0, 2, 1] = e[2, 1, 0] = e[1, 0, 2] = -1.0
    return jnp.asarray(e)


class ConvolutionPallas:
    """Pallas port of the PyTorch `Convolution` module (single fused TPU kernel)."""

    def __init__(self, rbf_count, output_dim, key):
        self.rbf_count = rbf_count
        self.output_dim = output_dim
        self.params = {}
        keys = jax.random.split(key, len(_FILTERS))
        for name, k in zip(_FILTERS, keys):
            k1, k2, k3, k4 = jax.random.split(k, 4)
            # RadialFunction shapes: W1[H,R], b1[H], W2[C,H], b2[C] with H = R.
            w1 = jax.random.normal(k1, (rbf_count, rbf_count), jnp.float32) / math.sqrt(rbf_count)
            b1 = 0.1 * jax.random.normal(k2, (rbf_count,), jnp.float32)
            w2 = jax.random.normal(k3, (output_dim, rbf_count), jnp.float32) / math.sqrt(rbf_count)
            b2 = 0.1 * jax.random.normal(k4, (output_dim,), jnp.float32)
            self.params[name] = (w1, b1, w2, b2)

        # Fused radial-net weights: concatenated layer-1, block-diagonal layer-2.
        H, C, F = rbf_count, output_dim, len(_FILTERS)
        self.w1cat = jnp.concatenate([self.params[n][0].T for n in _FILTERS], axis=1)    # [R, 6H]
        self.b1cat = jnp.concatenate([self.params[n][1] for n in _FILTERS]).reshape(1, F * H)
        w2blk = jnp.zeros((F * H, F * C), jnp.float32)
        for t, n in enumerate(_FILTERS):
            w2blk = w2blk.at[t * H:(t + 1) * H, t * C:(t + 1) * C].set(self.params[n][2].T)
        self.w2blk = w2blk                                                               # [6H, 6C]
        self.b2cat = jnp.concatenate([self.params[n][3] for n in _FILTERS]).reshape(1, F * C)

    # -------- per-filter Clebsch-Gordan constants (torch semantics, incl. broadcast) ----
    @staticmethod
    def _cg(name, d0):
        if name == "f00":
            return jnp.eye(d0, dtype=jnp.float32)[:, None, :]     # [d, 1, d]
        if name in ("f01", "f11"):
            return _eijk()                                        # [3, 3, 3]
        if name == "f10":
            return jnp.eye(3, dtype=jnp.float32)[None, :, :]      # [1, 3, 3]
        return jnp.eye(5, dtype=jnp.float32)[:, :, None]          # f02 / f22: [5, 5, 1]

    # -------- one fused kernel call for one (x_l0, x_l1, x_l2) input triple --------
    def _fused_call(self, rbf_flat, yall, mask, xv_by_l, N):
        C = self.output_dim
        P = N * N

        # CG (x) layer-input tensors, packed lane-dense + zero-padded into one block.
        g_blocks, i_list, ycols = [], [], []
        d0 = xv_by_l[0].shape[-1]
        for name in _FILTERS:
            xv = xv_by_l[_FILTER_SRC[name]]
            cg = self._cg(name, d0)
            I, J, Kc = cg.shape
            Kx = xv.shape[-1]
            K = max(Kc, Kx)                                   # torch.einsum size-1 broadcast
            cg_b = jnp.broadcast_to(cg, (I, J, K))
            x_b = jnp.broadcast_to(xv, (N, C, K))
            g = jnp.einsum('ijk,bfk->jbfi', cg_b, x_b).reshape(J, N, C * I)   # [J, N, C*I]
            g_blocks.append(g)
            i_list.append(I)
            ycols.extend(_FILTER_YCOLS[name])
        total = C * sum(i_list)
        j_total = sum(g.shape[0] for g in g_blocks)

        g_all = jnp.zeros((j_total, N, total), jnp.float32)
        row = off = 0
        for g in g_blocks:
            J, _, Q = g.shape
            g_all = g_all.at[row:row + J, :, off:off + Q].set(g)
            row += J
            off += Q

        # Constant 0/1 matrices: radial lane-expansion and neighbour row-sum.
        e_np = np.zeros((len(_FILTERS) * C, total), np.float32)
        off = 0
        for t, It in enumerate(i_list):
            for f in range(C):
                e_np[t * C + f, off + f * It: off + (f + 1) * It] = 1.0
            off += C * It
        s_np = np.zeros((N, P), np.float32)
        for a in range(N):
            s_np[a, a * N:(a + 1) * N] = 1.0

        kernel = functools.partial(_fused_conv_kernel, N=N, C=C, total=total,
                                   ycols=tuple(ycols))
        out = pl.pallas_call(
            kernel,
            out_shape=jax.ShapeDtypeStruct((N, total), jnp.float32),
            in_specs=[pl.BlockSpec(memory_space=pltpu.MemorySpace.VMEM)] * 10,
            out_specs=pl.BlockSpec(memory_space=pltpu.MemorySpace.VMEM),
        )(rbf_flat, self.w1cat, self.b1cat, self.w2blk, self.b2cat, mask,
          yall, g_all, jnp.asarray(e_np), jnp.asarray(s_np))

        # Free slices / reshapes back to the PyTorch [N, C, 2l+1] per-filter layout.
        segs = {}
        off = 0
        for name, It in zip(_FILTERS, i_list):
            Q = C * It
            segs[name] = out[:, off:off + Q].reshape(N, C, It)
            off += Q
        return segs

    # -------- Pallas forward --------
    def __call__(self, input_tensor_list, rbf, rij):
        N = rbf.shape[0]
        P = N * N
        rbf_flat = rbf.reshape(P, self.rbf_count).astype(jnp.float32)
        dij = jnp.sqrt(jnp.sum(rij * rij, axis=-1))
        mask = jnp.where(dij < EPSILON, 0.0, 1.0).astype(jnp.float32).reshape(P, 1)
        y0 = jnp.ones((P, 1), jnp.float32)
        y1 = _unit_vectors(rij).reshape(P, 3).astype(jnp.float32)
        y2 = _y2(rij).reshape(P, 5).astype(jnp.float32)
        yall = jnp.concatenate([y0, y1, y2], axis=1)                             # [P, 9]

        xs = {l: [x.reshape(-1, x.shape[-2], x.shape[-1]).astype(jnp.float32)
                  for x in input_tensor_list.get(l, [])] for l in (0, 1, 2)}
        n_sets = len(xs[0])
        assert len(xs[1]) == n_sets and len(xs[2]) == n_sets, \
            "fused path expects matched l=0/1/2 feature lists (standard TFN layer)"
        # TODO(synk): ragged / missing-key input dicts would need per-group kernel variants.

        per_filter = {name: [] for name in _FILTERS}
        for idx in range(n_sets):
            segs = self._fused_call(rbf_flat, yall, mask,
                                    {0: xs[0][idx], 1: xs[1][idx], 2: xs[2][idx]}, N)
            for name in _FILTERS:
                per_filter[name].append(segs[name])

        # Assemble in the PyTorch Convolution.forward append order.
        out = {0: [], 1: [], 2: []}
        out[0] = per_filter["f00"] + per_filter["f10"]
        out[1] = per_filter["f01"] + per_filter["f11"]
        out[2] = per_filter["f02"] + per_filter["f22"]
        return out

    # -------- pure-JAX reference (mirrors the PyTorch graph) --------
    def _radial_ref(self, rbf, params):
        w1, b1, w2, b2 = params
        h = jax.nn.relu(b1 + jnp.tensordot(rbf, w1, axes=([-1], [1])))
        return b2 + jnp.tensordot(h, w2, axes=([-1], [1]))

    def _filter_ref(self, name, cg, y, use_mask, rbf, rij, x):
        radial = self._radial_ref(rbf, self.params[name])                    # [N, N, C]
        if use_mask:
            dij = jnp.sqrt(jnp.sum(rij * rij, axis=-1))
            radial = jnp.where((dij < EPSILON)[..., None], 0.0, radial)
        f = y[:, :, None, :] * radial[..., None]                             # [N, N, C, J]
        xv = x.reshape(-1, x.shape[-2], x.shape[-1])
        K = max(cg.shape[-1], xv.shape[-1])
        cg_b = jnp.broadcast_to(cg, cg.shape[:2] + (K,))
        x_b = jnp.broadcast_to(xv, xv.shape[:2] + (K,))
        return jnp.einsum('ijk,abfj,bfk->afi', cg_b, f, x_b)

    def reference(self, input_tensor_list, rbf, rij):
        N = rbf.shape[0]
        y0 = jnp.ones((N, N, 1), jnp.float32)
        y1 = _unit_vectors(rij)
        y2 = _y2(rij)
        out = {0: [], 1: [], 2: []}
        for key_l in input_tensor_list:
            for x in input_tensor_list[key_l]:
                if key_l == 0:
                    d = x.shape[-1]
                    out[0].append(self._filter_ref("f00", jnp.eye(d)[:, None, :], y0, False, rbf, rij, x))
                    out[1].append(self._filter_ref("f01", _eijk(), y1, True, rbf, rij, x))
                    out[2].append(self._filter_ref("f02", jnp.eye(5)[:, :, None], y2, True, rbf, rij, x))
                if key_l == 1:
                    out[0].append(self._filter_ref("f10", jnp.eye(3)[None, :, :], y1, True, rbf, rij, x))
                    out[1].append(self._filter_ref("f11", _eijk(), y1, True, rbf, rij, x))
                if key_l == 2:
                    out[2].append(self._filter_ref("f22", jnp.eye(5)[:, :, None], y2, True, rbf, rij, x))
        return out


# ----------------------------------------------------------------------------- main
if __name__ == "__main__":
    key = jax.random.PRNGKey(0)
    k_pos, k_rbf, k0, k1, k2, k_par = jax.random.split(key, 6)

    N, RBF_COUNT, OUTPUT_DIM = 8, 16, 4

    pos = jax.random.normal(k_pos, (N, 3), jnp.float32)
    rij = pos[:, None, :] - pos[None, :, :]            # [N, N, 3]  (zero on diagonal)
    rbf = jax.random.normal(k_rbf, (N, N, RBF_COUNT), jnp.float32)

    input_tensor_list = {
        0: [jax.random.normal(k0, (N, OUTPUT_DIM, 1), jnp.float32)],
        1: [jax.random.normal(k1, (N, OUTPUT_DIM, 3), jnp.float32)],
        2: [jax.random.normal(k2, (N, OUTPUT_DIM, 5), jnp.float32)],
    }

    conv = ConvolutionPallas(RBF_COUNT, OUTPUT_DIM, k_par)
    out = conv(input_tensor_list, rbf, rij)
    out = jax.tree_util.tree_map(jax.block_until_ready, out)

    ref = conv.reference(input_tensor_list, rbf, rij)
    for l in (0, 1, 2):
        for got, want in zip(out[l], ref[l]):
            np.testing.assert_allclose(np.asarray(got), np.asarray(want),
                                       rtol=1e-4, atol=1e-4)

    print("KERNEL_OK")
</pallas_src>

<mosaic_0001>
module attributes {stable_mosaic.version = 11 : i64} {
  func.func @_fused_conv_kernel(%arg0: memref<64x16xf32, #tpu.memory_space<vmem>>, %arg1: memref<16x96xf32, #tpu.memory_space<vmem>>, %arg2: memref<1x96xf32, #tpu.memory_space<vmem>>, %arg3: memref<96x24xf32, #tpu.memory_space<vmem>>, %arg4: memref<1x24xf32, #tpu.memory_space<vmem>>, %arg5: memref<64x1xf32, #tpu.memory_space<vmem>>, %arg6: memref<64x9xf32, #tpu.memory_space<vmem>>, %arg7: memref<20x8x72xf32, #tpu.memory_space<vmem>>, %arg8: memref<24x72xf32, #tpu.memory_space<vmem>>, %arg9: memref<8x64xf32, #tpu.memory_space<vmem>>, %arg10: memref<8x72xf32, #tpu.memory_space<vmem>>) attributes {dimension_semantics = [], scalar_prefetch = 0 : i64, scratch_operands = 0 : i64, tpu.core_type = #tpu.core_type<tc>} {
    %c0 = arith.constant 0 : index
    %c0_0 = arith.constant 0 : index
    %0 = vector.load %arg0[%c0, %c0_0] : memref<64x16xf32, #tpu.memory_space<vmem>>, vector<64x16xf32>
    %c0_1 = arith.constant 0 : index
    %c0_2 = arith.constant 0 : index
    %1 = vector.load %arg1[%c0_1, %c0_2] : memref<16x96xf32, #tpu.memory_space<vmem>>, vector<16x96xf32>
    %cst = arith.constant dense<0.000000e+00> : vector<64x96xf32>
    %2 = tpu.matmul %0, %1, %cst {dimension_numbers = #tpu.dot_dimension_numbers<[1], [0], [0], [1], [0, 0, 1, 1], [], []>, precision = #tpu.contract_precision<fp32>} : vector<64x16xf32>, vector<16x96xf32>, vector<64x96xf32> -> vector<64x96xf32>
    %c0_3 = arith.constant 0 : index
    %c0_4 = arith.constant 0 : index
    %3 = vector.load %arg2[%c0_3, %c0_4] : memref<1x96xf32, #tpu.memory_space<vmem>>, vector<1x96xf32>
    %4 = vector.broadcast %3 : vector<1x96xf32> to vector<64x96xf32>
    %5 = arith.addf %2, %4 : vector<64x96xf32>
    %cst_5 = arith.constant 0.000000e+00 : f32
    %6 = vector.broadcast %cst_5 : f32 to vector<64x96xf32>
    %7 = arith.maximumf %5, %6 : vector<64x96xf32>
    %c0_6 = arith.constant 0 : index
    %c0_7 = arith.constant 0 : index
    %8 = vector.load %arg3[%c0_6, %c0_7] : memref<96x24xf32, #tpu.memory_space<vmem>>, vector<96x24xf32>
    %cst_8 = arith.constant dense<0.000000e+00> : vector<64x24xf32>
    %9 = tpu.matmul %7, %8, %cst_8 {dimension_numbers = #tpu.dot_dimension_numbers<[1], [0], [0], [1], [0, 0, 1, 1], [], []>, precision = #tpu.contract_precision<fp32>} : vector<64x96xf32>, vector<96x24xf32>, vector<64x24xf32> -> vector<64x24xf32>
    %c0_9 = arith.constant 0 : index
    %c0_10 = arith.constant 0 : index
    %10 = vector.load %arg4[%c0_9, %c0_10] : memref<1x24xf32, #tpu.memory_space<vmem>>, vector<1x24xf32>
    %11 = vector.broadcast %10 : vector<1x24xf32> to vector<64x24xf32>
    %12 = arith.addf %9, %11 : vector<64x24xf32>
    %13 = tpu.iota {dimensions = array<i32: 1>} : vector<64x24xi32>
    %c4_i32 = arith.constant 4 : i32
    %14 = vector.broadcast %c4_i32 : i32 to vector<64x24xi32>
    %15 = arith.cmpi slt, %13, %14 : vector<64x24xi32>
    %16 = arith.extui %15 : vector<64x24xi1> to vector<64x24xi32>
    %17 = arith.sitofp %16 : vector<64x24xi32> to vector<64x24xf32>
    %cst_11 = arith.constant 1.000000e+00 : f32
    %18 = vector.broadcast %cst_11 : f32 to vector<64x24xf32>
    %19 = arith.subf %18, %17 : vector<64x24xf32>
    %c0_12 = arith.constant 0 : index
    %c0_13 = arith.constant 0 : index
    %20 = vector.load %arg5[%c0_12, %c0_13] : memref<64x1xf32, #tpu.memory_space<vmem>>, vector<64x1xf32>
    %21 = vector.broadcast %20 : vector<64x1xf32> to vector<64x24xf32>
    %22 = arith.mulf %19, %21 : vector<64x24xf32>
    %23 = arith.addf %17, %22 : vector<64x24xf32>
    %24 = arith.mulf %12, %23 : vector<64x24xf32>
    %c0_14 = arith.constant 0 : index
    %c0_15 = arith.constant 0 : index
    %25 = vector.load %arg6[%c0_14, %c0_15] : memref<64x9xf32, #tpu.memory_space<vmem>>, vector<64x9xf32>
    %cst_16 = arith.constant 0.000000e+00 : f32
    %26 = vector.broadcast %cst_16 : f32 to vector<64x72xf32>
    %c0_17 = arith.constant 0 : index
    %c0_18 = arith.constant 0 : index
    %c0_19 = arith.constant 0 : index
    %27 = vector.load %arg7[%c0_17, %c0_18, %c0_19] : memref<20x8x72xf32, #tpu.memory_space<vmem>>, vector<1x8x72xf32>
    %28 = vector.shape_cast %27 : vector<1x8x72xf32> to vector<8x72xf32>
    %29 = vector.shape_cast %28 : vector<8x72xf32> to vector<1x8x72xf32>
    %30 = vector.shape_cast %29 : vector<1x8x72xf32> to vector<1x8x72xf32>
    %31 = vector.broadcast %30 : vector<1x8x72xf32> to vector<8x8x72xf32>
    %32 = vector.shape_cast %31 : vector<8x8x72xf32> to vector<64x72xf32>
    %33 = vector.extract_strided_slice %25 {offsets = [0, 0], sizes = [64, 1], strides = [1, 1]} : vector<64x9xf32> to vector<64x1xf32>
    %34 = vector.broadcast %33 : vector<64x1xf32> to vector<64x72xf32>
    %35 = arith.mulf %34, %32 : vector<64x72xf32>
    %36 = arith.addf %26, %35 : vector<64x72xf32>
    %c1 = arith.constant 1 : index
    %c0_20 = arith.constant 0 : index
    %c0_21 = arith.constant 0 : index
    %37 = vector.load %arg7[%c1, %c0_20, %c0_21] : memref<20x8x72xf32, #tpu.memory_space<vmem>>, vector<1x8x72xf32>
    %38 = vector.shape_cast %37 : vector<1x8x72xf32> to vector<8x72xf32>
    %39 = vector.shape_cast %38 : vector<8x72xf32> to vector<1x8x72xf32>
    %40 = vector.shape_cast %39 : vector<1x8x72xf32> to vector<1x8x72xf32>
    %41 = vector.broadcast %40 : vector<1x8x72xf32> to vector<8x8x72xf32>
    %42 = vector.shape_cast %41 : vector<8x8x72xf32> to vector<64x72xf32>
    %43 = vector.extract_strided_slice %25 {offsets = [0, 1], sizes = [64, 1], strides = [1, 1]} : vector<64x9xf32> to vector<64x1xf32>
    %44 = vector.broadcast %43 : vector<64x1xf32> to vector<64x72xf32>
    %45 = arith.mulf %44, %42 : vector<64x72xf32>
    %46 = arith.addf %36, %45 : vector<64x72xf32>
    %c2 = arith.constant 2 : index
    %c0_22 = arith.constant 0 : index
    %c0_23 = arith.constant 0 : index
    %47 = vector.load %arg7[%c2, %c0_22, %c0_23] : memref<20x8x72xf32, #tpu.memory_space<vmem>>, vector<1x8x72xf32>
    %48 = vector.shape_cast %47 : vector<1x8x72xf32> to vector<8x72xf32>
    %49 = vector.shape_cast %48 : vector<8x72xf32> to vector<1x8x72xf32>
    %50 = vector.shape_cast %49 : vector<1x8x72xf32> to vector<1x8x72xf32>
    %51 = vector.broadcast %50 : vector<1x8x72xf32> to vector<8x8x72xf32>
    %52 = vector.shape_cast %51 : vector<8x8x72xf32> to vector<64x72xf32>
    %53 = vector.extract_strided_slice %25 {offsets = [0, 2], sizes = [64, 1], strides = [1, 1]} : vector<64x9xf32> to vector<64x1xf32>
    %54 = vector.broadcast %53 : vector<64x1xf32> to vector<64x72xf32>
    %55 = arith.mulf %54, %52 : vector<64x72xf32>
    %56 = arith.addf %46, %55 : vector<64x72xf32>
    %c3 = arith.constant 3 : index
    %c0_24 = arith.constant 0 : index
    %c0_25 = arith.constant 0 : index
    %57 = vector.load %arg7[%c3, %c0_24, %c0_25] : memref<20x8x72xf32, #tpu.memory_space<vmem>>, vector<1x8x72xf32>
    %58 = vector.shape_cast %57 : vector<1x8x72xf32> to vector<8x72xf32>
    %59 = vector.shape_cast %58 : vector<8x72xf32> to vector<1x8x72xf32>
    %60 = vector.shape_cast %59 : vector<1x8x72xf32> to vector<1x8x72xf32>
    %61 = vector.broadcast %60 : vector<1x8x72xf32> to vector<8x8x72xf32>
    %62 = vector.shape_cast %61 : vector<8x8x72xf32> to vector<64x72xf32>
    %63 = vector.extract_strided_slice %25 {offsets = [0, 3], sizes = [64, 1], strides = [1, 1]} : vector<64x9xf32> to vector<64x1xf32>
    %64 = vector.broadcast %63 : vector<64x1xf32> to vector<64x72xf32>
    %65 = arith.mulf %64, %62 : vector<64x72xf32>
    %66 = arith.addf %56, %65 : vector<64x72xf32>
    %c4 = arith.constant 4 : index
    %c0_26 = arith.constant 0 : index
    %c0_27 = arith.constant 0 : index
    %67 = vector.load %arg7[%c4, %c0_26, %c0_27] : memref<20x8x72xf32, #tpu.memory_space<vmem>>, vector<1x8x72xf32>
    %68 = vector.shape_cast %67 : vector<1x8x72xf32> to vector<8x72xf32>
    %69 = vector.shape_cast %68 : vector<8x72xf32> to vector<1x8x72xf32>
    %70 = vector.shape_cast %69 : vector<1x8x72xf32> to vector<1x8x72xf32>
    %71 = vector.broadcast %70 : vector<1x8x72xf32> to vector<8x8x72xf32>
    %72 = vector.shape_cast %71 : vector<8x8x72xf32> to vector<64x72xf32>
    %73 = vector.extract_strided_slice %25 {offsets = [0, 4], sizes = [64, 1], strides = [1, 1]} : vector<64x9xf32> to vector<64x1xf32>
    %74 = vector.broadcast %73 : vector<64x1xf32> to vector<64x72xf32>
    %75 = arith.mulf %74, %72 : vector<64x72xf32>
    %76 = arith.addf %66, %75 : vector<64x72xf32>
    %c5 = arith.constant 5 : index
    %c0_28 = arith.constant 0 : index
    %c0_29 = arith.constant 0 : index
    %77 = vector.load %arg7[%c5, %c0_28, %c0_29] : memref<20x8x72xf32, #tpu.memory_space<vmem>>, vector<1x8x72xf32>
    %78 = vector.shape_cast %77 : vector<1x8x72xf32> to vector<8x72xf32>
    %79 = vector.shape_cast %78 : vector<8x72xf32> to vector<1x8x72xf32>
    %80 = vector.shape_cast %79 : vector<1x8x72xf32> to vector<1x8x72xf32>
    %81 = vector.broadcast %80 : vector<1x8x72xf32> to vector<8x8x72xf32>
    %82 = vector.shape_cast %81 : vector<8x8x72xf32> to vector<64x72xf32>
    %83 = vector.extract_strided_slice %25 {offsets = [0, 5], sizes = [64, 1], strides = [1, 1]} : vector<64x9xf32> to vector<64x1xf32>
    %84 = vector.broadcast %83 : vector<64x1xf32> to vector<64x72xf32>
    %85 = arith.mulf %84, %82 : vector<64x72xf32>
    %86 = arith.addf %76, %85 : vector<64x72xf32>
    %c6 = arith.constant 6 : index
    %c0_30 = arith.constant 0 : index
    %c0_31 = arith.constant 0 : index
    %87 = vector.load %arg7[%c6, %c0_30, %c0_31] : memref<20x8x72xf32, #tpu.memory_space<vmem>>, vector<1x8x72xf32>
    %88 = vector.shape_cast %87 : vector<1x8x72xf32> to vector<8x72xf32>
    %89 = vector.shape_cast %88 : vector<8x72xf32> to vector<1x8x72xf32>
    %90 = vector.shape_cast %89 : vector<1x8x72xf32> to vector<1x8x72xf32>
    %91 = vector.broadcast %90 : vector<1x8x72xf32> to vector<8x8x72xf32>
    %92 = vector.shape_cast %91 : vector<8x8x72xf32> to vector<64x72xf32>
    %93 = vector.extract_strided_slice %25 {offsets = [0, 6], sizes = [64, 1], strides = [1, 1]} : vector<64x9xf32> to vector<64x1xf32>
    %94 = vector.broadcast %93 : vector<64x1xf32> to vector<64x72xf32>
    %95 = arith.mulf %94, %92 : vector<64x72xf32>
    %96 = arith.addf %86, %95 : vector<64x72xf32>
    %c7 = arith.constant 7 : index
    %c0_32 = arith.constant 0 : index
    %c0_33 = arith.constant 0 : index
    %97 = vector.load %arg7[%c7, %c0_32, %c0_33] : memref<20x8x72xf32, #tpu.memory_space<vmem>>, vector<1x8x72xf32>
    %98 = vector.shape_cast %97 : vector<1x8x72xf32> to vector<8x72xf32>
    %99 = vector.shape_cast %98 : vector<8x72xf32> to vector<1x8x72xf32>
    %100 = vector.shape_cast %99 : vector<1x8x72xf32> to vector<1x8x72xf32>
    %101 = vector.broadcast %100 : vector<1x8x72xf32> to vector<8x8x72xf32>
    %102 = vector.shape_cast %101 : vector<8x8x72xf32> to vector<64x72xf32>
    %103 = vector.extract_strided_slice %25 {offsets = [0, 7], sizes = [64, 1], strides = [1, 1]} : vector<64x9xf32> to vector<64x1xf32>
    %104 = vector.broadcast %103 : vector<64x1xf32> to vector<64x72xf32>
    %105 = arith.mulf %104, %102 : vector<64x72xf32>
    %106 = arith.addf %96, %105 : vector<64x72xf32>
    %c8 = arith.constant 8 : index
    %c0_34 = arith.constant 0 : index
    %c0_35 = arith.constant 0 : index
    %107 = vector.load %arg7[%c8, %c0_34, %c0_35] : memref<20x8x72xf32, #tpu.memory_space<vmem>>, vector<1x8x72xf32>
    %108 = vector.shape_cast %107 : vector<1x8x72xf32> to vector<8x72xf32>
    %109 = vector.shape_cast %108 : vector<8x72xf32> to vector<1x8x72xf32>
    %110 = vector.shape_cast %109 : vector<1x8x72xf32> to vector<1x8x72xf32>
    %111 = vector.broadcast %110 : vector<1x8x72xf32> to vector<8x8x72xf32>
    %112 = vector.shape_cast %111 : vector<8x8x72xf32> to vector<64x72xf32>
    %113 = vector.extract_strided_slice %25 {offsets = [0, 8], sizes = [64, 1], strides = [1, 1]} : vector<64x9xf32> to vector<64x1xf32>
    %114 = vector.broadcast %113 : vector<64x1xf32> to vector<64x72xf32>
    %115 = arith.mulf %114, %112 : vector<64x72xf32>
    %116 = arith.addf %106, %115 : vector<64x72xf32>
    %c9 = arith.constant 9 : index
    %c0_36 = arith.constant 0 : index
    %c0_37 = arith.constant 0 : index
    %117 = vector.load %arg7[%c9, %c0_36, %c0_37] : memref<20x8x72xf32, #tpu.memory_space<vmem>>, vector<1x8x72xf32>
    %118 = vector.shape_cast %117 : vector<1x8x72xf32> to vector<8x72xf32>
    %119 = vector.shape_cast %118 : vector<8x72xf32> to vector<1x8x72xf32>
    %120 = vector.shape_cast %119 : vector<1x8x72xf32> to vector<1x8x72xf32>
    %121 = vector.broadcast %120 : vector<1x8x72xf32> to vector<8x8x72xf32>
    %122 = vector.shape_cast %121 : vector<8x8x72xf32> to vector<64x72xf32>
    %123 = vector.extract_strided_slice %25 {offsets = [0, 1], sizes = [64, 1], strides = [1, 1]} : vector<64x9xf32> to vector<64x1xf32>
    %124 = vector.broadcast %123 : vector<64x1xf32> to vector<64x72xf32>
    %125 = arith.mulf %124, %122 : vector<64x72xf32>
    %126 = arith.addf %116, %125 : vector<64x72xf32>
    %c10 = arith.constant 10 : index
    %c0_38 = arith.constant 0 : index
    %c0_39 = arith.constant 0 : index
    %127 = vector.load %arg7[%c10, %c0_38, %c0_39] : memref<20x8x72xf32, #tpu.memory_space<vmem>>, vector<1x8x72xf32>
    %128 = vector.shape_cast %127 : vector<1x8x72xf32> to vector<8x72xf32>
    %129 = vector.shape_cast %128 : vector<8x72xf32> to vector<1x8x72xf32>
    %130 = vector.shape_cast %129 : vector<1x8x72xf32> to vector<1x8x72xf32>
    %131 = vector.broadcast %130 : vector<1x8x72xf32> to vector<8x8x72xf32>
    %132 = vector.shape_cast %131 : vector<8x8x72xf32> to vector<64x72xf32>
    %133 = vector.extract_strided_slice %25 {offsets = [0, 2], sizes = [64, 1], strides = [1, 1]} : vector<64x9xf32> to vector<64x1xf32>
    %134 = vector.broadcast %133 : vector<64x1xf32> to vector<64x72xf32>
    %135 = arith.mulf %134, %132 : vector<64x72xf32>
    %136 = arith.addf %126, %135 : vector<64x72xf32>
    %c11 = arith.constant 11 : index
    %c0_40 = arith.constant 0 : index
    %c0_41 = arith.constant 0 : index
    %137 = vector.load %arg7[%c11, %c0_40, %c0_41] : memref<20x8x72xf32, #tpu.memory_space<vmem>>, vector<1x8x72xf32>
    %138 = vector.shape_cast %137 : vector<1x8x72xf32> to vector<8x72xf32>
    %139 = vector.shape_cast %138 : vector<8x72xf32> to vector<1x8x72xf32>
    %140 = vector.shape_cast %139 : vector<1x8x72xf32> to vector<1x8x72xf32>
    %141 = vector.broadcast %140 : vector<1x8x72xf32> to vector<8x8x72xf32>
    %142 = vector.shape_cast %141 : vector<8x8x72xf32> to vector<64x72xf32>
    %143 = vector.extract_strided_slice %25 {offsets = [0, 3], sizes = [64, 1], strides = [1, 1]} : vector<64x9xf32> to vector<64x1xf32>
    %144 = vector.broadcast %143 : vector<64x1xf32> to vector<64x72xf32>
    %145 = arith.mulf %144, %142 : vector<64x72xf32>
    %146 = arith.addf %136, %145 : vector<64x72xf32>
    %c12 = arith.constant 12 : index
    %c0_42 = arith.constant 0 : index
    %c0_43 = arith.constant 0 : index
    %147 = vector.load %arg7[%c12, %c0_42, %c0_43] : memref<20x8x72xf32, #tpu.memory_space<vmem>>, vector<1x8x72xf32>
    %148 = vector.shape_cast %147 : vector<1x8x72xf32> to vector<8x72xf32>
    %149 = vector.shape_cast %148 : vector<8x72xf32> to vector<1x8x72xf32>
    %150 = vector.shape_cast %149 : vector<1x8x72xf32> to vector<1x8x72xf32>
    %151 = vector.broadcast %150 : vector<1x8x72xf32> to vector<8x8x72xf32>
    %152 = vector.shape_cast %151 : vector<8x8x72xf32> to vector<64x72xf32>
    %153 = vector.extract_strided_slice %25 {offsets = [0, 1], sizes = [64, 1], strides = [1, 1]} : vector<64x9xf32> to vector<64x1xf32>
    %154 = vector.broadcast %153 : vector<64x1xf32> to vector<64x72xf32>
    %155 = arith.mulf %154, %152 : vector<64x72xf32>
    %156 = arith.addf %146, %155 : vector<64x72xf32>
    %c13 = arith.constant 13 : index
    %c0_44 = arith.constant 0 : index
    %c0_45 = arith.constant 0 : index
    %157 = vector.load %arg7[%c13, %c0_44, %c0_45] : memref<20x8x72xf32, #tpu.memory_space<vmem>>, vector<1x8x72xf32>
    %158 = vector.shape_cast %157 : vector<1x8x72xf32> to vector<8x72xf32>
    %159 = vector.shape_cast %158 : vector<8x72xf32> to vector<1x8x72xf32>
    %160 = vector.shape_cast %159 : vector<1x8x72xf32> to vector<1x8x72xf32>
    %161 = vector.broadcast %160 : vector<1x8x72xf32> to vector<8x8x72xf32>
    %162 = vector.shape_cast %161 : vector<8x8x72xf32> to vector<64x72xf32>
    %163 = vector.extract_strided_slice %25 {offsets = [0, 2], sizes = [64, 1], strides = [1, 1]} : vector<64x9xf32> to vector<64x1xf32>
    %164 = vector.broadcast %163 : vector<64x1xf32> to vector<64x72xf32>
    %165 = arith.mulf %164, %162 : vector<64x72xf32>
    %166 = arith.addf %156, %165 : vector<64x72xf32>
    %c14 = arith.constant 14 : index
    %c0_46 = arith.constant 0 : index
    %c0_47 = arith.constant 0 : index
    %167 = vector.load %arg7[%c14, %c0_46, %c0_47] : memref<20x8x72xf32, #tpu.memory_space<vmem>>, vector<1x8x72xf32>
    %168 = vector.shape_cast %167 : vector<1x8x72xf32> to vector<8x72xf32>
    %169 = vector.shape_cast %168 : vector<8x72xf32> to vector<1x8x72xf32>
    %170 = vector.shape_cast %169 : vector<1x8x72xf32> to vector<1x8x72xf32>
    %171 = vector.broadcast %170 : vector<1x8x72xf32> to vector<8x8x72xf32>
    %172 = vector.shape_cast %171 : vector<8x8x72xf32> to vector<64x72xf32>
    %173 = vector.extract_strided_slice %25 {offsets = [0, 3], sizes = [64, 1], strides = [1, 1]} : vector<64x9xf32> to vector<64x1xf32>
    %174 = vector.broadcast %173 : vector<64x1xf32> to vector<64x72xf32>
    %175 = arith.mulf %174, %172 : vector<64x72xf32>
    %176 = arith.addf %166, %175 : vector<64x72xf32>
    %c15 = arith.constant 15 : index
    %c0_48 = arith.constant 0 : index
    %c0_49 = arith.constant 0 : index
    %177 = vector.load %arg7[%c15, %c0_48, %c0_49] : memref<20x8x72xf32, #tpu.memory_space<vmem>>, vector<1x8x72xf32>
    %178 = vector.shape_cast %177 : vector<1x8x72xf32> to vector<8x72xf32>
    %179 = vector.shape_cast %178 : vector<8x72xf32> to vector<1x8x72xf32>
    %180 = vector.shape_cast %179 : vector<1x8x72xf32> to vector<1x8x72xf32>
    %181 = vector.broadcast %180 : vector<1x8x72xf32> to vector<8x8x72xf32>
    %182 = vector.shape_cast %181 : vector<8x8x72xf32> to vector<64x72xf32>
    %183 = vector.extract_strided_slice %25 {offsets = [0, 4], sizes = [64, 1], strides = [1, 1]} : vector<64x9xf32> to vector<64x1xf32>
    %184 = vector.broadcast %183 : vector<64x1xf32> to vector<64x72xf32>
    %185 = arith.mulf %184, %182 : vector<64x72xf32>
    %186 = arith.addf %176, %185 : vector<64x72xf32>
    %c16 = arith.constant 16 : index
    %c0_50 = arith.constant 0 : index
    %c0_51 = arith.constant 0 : index
    %187 = vector.load %arg7[%c16, %c0_50, %c0_51] : memref<20x8x72xf32, #tpu.memory_space<vmem>>, vector<1x8x72xf32>
    %188 = vector.shape_cast %187 : vector<1x8x72xf32> to vector<8x72xf32>
    %189 = vector.shape_cast %188 : vector<8x72xf32> to vector<1x8x72xf32>
    %190 = vector.shape_cast %189 : vector<1x8x72xf32> to vector<1x8x72xf32>
    %191 = vector.broadcast %190 : vector<1x8x72xf32> to vector<8x8x72xf32>
    %192 = vector.shape_cast %191 : vector<8x8x72xf32> to vector<64x72xf32>
    %193 = vector.extract_strided_slice %25 {offsets = [0, 5], sizes = [64, 1], strides = [1, 1]} : vector<64x9xf32> to vector<64x1xf32>
    %194 = vector.broadcast %193 : vector<64x1xf32> to vector<64x72xf32>
    %195 = arith.mulf %194, %192 : vector<64x72xf32>
    %196 = arith.addf %186, %195 : vector<64x72xf32>
    %c17 = arith.constant 17 : index
    %c0_52 = arith.constant 0 : index
    %c0_53 = arith.constant 0 : index
    %197 = vector.load %arg7[%c17, %c0_52, %c0_53] : memref<20x8x72xf32, #tpu.memory_space<vmem>>, vector<1x8x72xf32>
    %198 = vector.shape_cast %197 : vector<1x8x72xf32> to vector<8x72xf32>
    %199 = vector.shape_cast %198 : vector<8x72xf32> to vector<1x8x72xf32>
    %200 = vector.shape_cast %199 : vector<1x8x72xf32> to vector<1x8x72xf32>
    %201 = vector.broadcast %200 : vector<1x8x72xf32> to vector<8x8x72xf32>
    %202 = vector.shape_cast %201 : vector<8x8x72xf32> to vector<64x72xf32>
    %203 = vector.extract_strided_slice %25 {offsets = [0, 6], sizes = [64, 1], strides = [1, 1]} : vector<64x9xf32> to vector<64x1xf32>
    %204 = vector.broadcast %203 : vector<64x1xf32> to vector<64x72xf32>
    %205 = arith.mulf %204, %202 : vector<64x72xf32>
    %206 = arith.addf %196, %205 : vector<64x72xf32>
    %c18 = arith.constant 18 : index
    %c0_54 = arith.constant 0 : index
    %c0_55 = arith.constant 0 : index
    %207 = vector.load %arg7[%c18, %c0_54, %c0_55] : memref<20x8x72xf32, #tpu.memory_space<vmem>>, vector<1x8x72xf32>
    %208 = vector.shape_cast %207 : vector<1x8x72xf32> to vector<8x72xf32>
    %209 = vector.shape_cast %208 : vector<8x72xf32> to vector<1x8x72xf32>
    %210 = vector.shape_cast %209 : vector<1x8x72xf32> to vector<1x8x72xf32>
    %211 = vector.broadcast %210 : vector<1x8x72xf32> to vector<8x8x72xf32>
    %212 = vector.shape_cast %211 : vector<8x8x72xf32> to vector<64x72xf32>
    %213 = vector.extract_strided_slice %25 {offsets = [0, 7], sizes = [64, 1], strides = [1, 1]} : vector<64x9xf32> to vector<64x1xf32>
    %214 = vector.broadcast %213 : vector<64x1xf32> to vector<64x72xf32>
    %215 = arith.mulf %214, %212 : vector<64x72xf32>
    %216 = arith.addf %206, %215 : vector<64x72xf32>
    %c19 = arith.constant 19 : index
    %c0_56 = arith.constant 0 : index
    %c0_57 = arith.constant 0 : index
    %217 = vector.load %arg7[%c19, %c0_56, %c0_57] : memref<20x8x72xf32, #tpu.memory_space<vmem>>, vector<1x8x72xf32>
    %218 = vector.shape_cast %217 : vector<1x8x72xf32> to vector<8x72xf32>
    %219 = vector.shape_cast %218 : vector<8x72xf32> to vector<1x8x72xf32>
    %220 = vector.shape_cast %219 : vector<1x8x72xf32> to vector<1x8x72xf32>
    %221 = vector.broadcast %220 : vector<1x8x72xf32> to vector<8x8x72xf32>
    %222 = vector.shape_cast %221 : vector<8x8x72xf32> to vector<64x72xf32>
    %223 = vector.extract_strided_slice %25 {offsets = [0, 8], sizes = [64, 1], strides = [1, 1]} : vector<64x9xf32> to vector<64x1xf32>
    %224 = vector.broadcast %223 : vector<64x1xf32> to vector<64x72xf32>
    %225 = arith.mulf %224, %222 : vector<64x72xf32>
    %226 = arith.addf %216, %225 : vector<64x72xf32>
    %c0_58 = arith.constant 0 : index
    %c0_59 = arith.constant 0 : index
    %227 = vector.load %arg8[%c0_58, %c0_59] : memref<24x72xf32, #tpu.memory_space<vmem>>, vector<24x72xf32>
    %cst_60 = arith.constant dense<0.000000e+00> : vector<64x72xf32>
    %228 = tpu.matmul %24, %227, %cst_60 {dimension_numbers = #tpu.dot_dimension_numbers<[1], [0], [0], [1], [0, 0, 1, 1], [], []>, precision = #tpu.contract_precision<fp32>} : vector<64x24xf32>, vector<24x72xf32>, vector<64x72xf32> -> vector<64x72xf32>
    %229 = arith.mulf %228, %226 : vector<64x72xf32>
    %c0_61 = arith.constant 0 : index
    %c0_62 = arith.constant 0 : index
    %230 = vector.load %arg9[%c0_61, %c0_62] : memref<8x64xf32, #tpu.memory_space<vmem>>, vector<8x64xf32>
    %cst_63 = arith.constant dense<0.000000e+00> : vector<8x72xf32>
    %231 = tpu.matmul %230, %229, %cst_63 {dimension_numbers = #tpu.dot_dimension_numbers<[1], [0], [0], [1], [0, 0, 1, 1], [], []>, precision = #tpu.contract_precision<fp32>} : vector<8x64xf32>, vector<64x72xf32>, vector<8x72xf32> -> vector<8x72xf32>
    %c0_64 = arith.constant 0 : index
    %c0_65 = arith.constant 0 : index
    %232 = vector.load %arg10[%c0_64, %c0_65] : memref<8x72xf32, #tpu.memory_space<vmem>>, vector<8x72xf32>
    tpu.vector_store %arg10[%c0_64, %c0_65], %231 {strides = array<i32>} : memref<8x72xf32, #tpu.memory_space<vmem>>, vector<8x72xf32>,
    return
  }
}

</mosaic_0001>

<llo_original>
// kernel: tpu_custom_call.1
$region0: #{tpu_custom_call.1}
  #allocation0 [shape = 'u32[]', space=smem, size = 0x4, offset = 0x4, fixed_abs, tag = 'smem constant byte address 0x4 - core index']
  #allocation1 [shape = 'u32[144,128]{1,0:T(1,128)}', space=vmem, size = 0x12000, scoped, tag = 'internal scratch']
  %s0 = inlined_call_operand.vmem [shape: f32[64,16], index: 0, kind: input, shape index: {}]
  %s1 = inlined_call_operand.vmem [shape: f32[16,96], index: 1, kind: input, shape index: {}]
  %s2 = inlined_call_operand.vmem [shape: f32[1,96], index: 2, kind: input, shape index: {}]
  %s3 = inlined_call_operand.vmem [shape: f32[96,24], index: 3, kind: input, shape index: {}]
  %s4 = inlined_call_operand.vmem [shape: f32[1,24], index: 4, kind: input, shape index: {}]
  %s5 = inlined_call_operand.vmem [shape: f32[64,1], index: 5, kind: input, shape index: {}]
  %s6 = inlined_call_operand.vmem [shape: f32[64,9], index: 6, kind: input, shape index: {}]
  %s7 = inlined_call_operand.vmem [shape: f32[20,8,72], index: 7, kind: input, shape index: {}]
  %s8 = inlined_call_operand.vmem [shape: f32[24,72], index: 8, kind: input, shape index: {}]
  %s9 = inlined_call_operand.vmem [shape: f32[8,64], index: 9, kind: input, shape index: {}]
  %s10 = inlined_call_operand.hbm [shape: f32[8,72], index: 10, kind: output, shape index: {}]
  %s11 = sld [smem:[#allocation0]]
  $region50: #{tpu_custom_call.1} parent=0
    _
  %s13 = ssub.s32 1, %s11
  %s14 = scalar_select 0, %s13, %s11
  $region1: #{tpu_custom_call.1} parent=0
    #allocation2 [shape = 'u8[4096]{0}', space=vmem, size = 0x1000, scoped, tag = 'output window, operand 0, single buffered']
    #allocation3 [shape = 's32[1]{0}', space=sflag, size = 0x4, scoped, tag = 'scoped memory for tpu_custom_call.1']
    %15 = vsyncpa [#allocation3], 0
    // Predicated region
    $region2: #{tpu_custom_call.1} parent=1 // pred_check
      _
    $region3: #{tpu_custom_call.1} parent=1 // pred_check_branch
      %17 = sbr.rel (0) target = $region5
    $region4: #{tpu_custom_call.1} parent=1 // pred_region
      _
    $region5: #{tpu_custom_call.1} parent=1 // pred_fallthru
      _
    // Predicated region
    $region6: #{tpu_custom_call.1} parent=1 // pred_check
      _
    $region7: #{tpu_custom_call.1} parent=1 // pred_check_branch
      %19 = sbr.rel (0) target = $region9
    $region8: #{tpu_custom_call.1} parent=1 // pred_region
      _
    $region9: #{tpu_custom_call.1} parent=1 // pred_fallthru
      _
    // Predicated region
    $region10: #{tpu_custom_call.1} parent=1 // pred_check
      _
    $region11: #{tpu_custom_call.1} parent=1 // pred_check_branch
      %21 = sbr.rel (0) target = $region13
    $region12: #{tpu_custom_call.1} parent=1 // pred_region
      _
    $region13: #{tpu_custom_call.1} parent=1 // pred_fallthru
      _
    // Predicated region
    $region14: #{tpu_custom_call.1} parent=1 // pred_check
      _
    $region15: #{tpu_custom_call.1} parent=1 // pred_check_branch
      %23 = sbr.rel (0) target = $region17
    $region16: #{tpu_custom_call.1} parent=1 // pred_region
      _
    $region17: #{tpu_custom_call.1} parent=1 // pred_fallthru
      _
    // Predicated region
    $region18: #{tpu_custom_call.1} parent=1 // pred_check
      _
    $region19: #{tpu_custom_call.1} parent=1 // pred_check_branch
      %25 = sbr.rel (0) target = $region21
    $region20: #{tpu_custom_call.1} parent=1 // pred_region
      _
    $region21: #{tpu_custom_call.1} parent=1 // pred_fallthru
      _
    // Predicated region
    $region22: #{tpu_custom_call.1} parent=1 // pred_check
      _
    $region23: #{tpu_custom_call.1} parent=1 // pred_check_branch
      %27 = sbr.rel (0) target = $region25
    $region24: #{tpu_custom_call.1} parent=1 // pred_region
      _
    $region25: #{tpu_custom_call.1} parent=1 // pred_fallthru
      _
    // Predicated region
    $region26: #{tpu_custom_call.1} parent=1 // pred_check
      _
    $region27: #{tpu_custom_call.1} parent=1 // pred_check_branch
      %29 = sbr.rel (0) target = $region29
    $region28: #{tpu_custom_call.1} parent=1 // pred_region
      _
    $region29: #{tpu_custom_call.1} parent=1 // pred_fallthru
      _
    // Predicated region
    $region30: #{tpu_custom_call.1} parent=1 // pred_check
      _
    $region31: #{tpu_custom_call.1} parent=1 // pred_check_branch
      %31 = sbr.rel (0) target = $region33
    $region32: #{tpu_custom_call.1} parent=1 // pred_region
      _
    $region33: #{tpu_custom_call.1} parent=1 // pred_fallthru
      _
    // Predicated region
    $region34: #{tpu_custom_call.1} parent=1 // pred_check
      _
    $region35: #{tpu_custom_call.1} parent=1 // pred_check_branch
      %33 = sbr.rel (0) target = $region37
    $region36: #{tpu_custom_call.1} parent=1 // pred_region
      _
    $region37: #{tpu_custom_call.1} parent=1 // pred_fallthru
      _
    // Predicated region
    $region38: #{tpu_custom_call.1} parent=1 // pred_check
      _
    $region39: #{tpu_custom_call.1} parent=1 // pred_check_branch
      %35 = sbr.rel (0) target = $region41
    $region40: #{tpu_custom_call.1} parent=1 // pred_region
      _
    $region41: #{tpu_custom_call.1} parent=1 // pred_fallthru
      _
    %v36 = vld [vmem:[%s0] sm:$0xff]
    %v37 = vld [vmem:[%s0 + $0x8] sm:$0xff]
    %v38 = vld [vmem:[%s0 + $0x10] sm:$0xff]
    %v39 = vld [vmem:[%s0 + $0x18] sm:$0xff]
    %v40 = vld [vmem:[%s0 + $0x20] sm:$0xff]
    %v41 = vld [vmem:[%s0 + $0x28] sm:$0xff]
    %v42 = vld [vmem:[%s0 + $0x30] sm:$0xff]
    %v43 = vld [vmem:[%s0 + $0x38] sm:$0xff]
    %v44 = vld [vmem:[%s1] sm:$0xff]
    %v45 = vld [vmem:[%s1 + $0x8] sm:$0xff]
    %v46 = vld [vmem:[%s2] sm:$0x1]
    %v48 = vlaneseq
    %v49 = vshrl.u32 %v48, 7
    %v50 = vsub.s32 0, %v49
    %v51 = vrot.slane %v46, %v50
    %vm53 = vcmask 130048
    %v55 = vsel %vm53, %v36, 0
    %v58 = vsel %vm53, %v37, 0
    %v61 = vsel %vm53, %v38, 0
    %v64 = vsel %vm53, %v39, 0
    %v67 = vsel %vm53, %v40, 0
    %v70 = vsel %vm53, %v41, 0
    %v73 = vsel %vm53, %v42, 0
    %v76 = vsel %vm53, %v43, 0
    %78 = vmatprep.subr.mxu0 0.0
    %v79 = vand.u32 %v44, 4294901760
    %80 = vmatpush1.msra.mxu0 %v79
    %81 = vmatprep.subr.mxu0 0.0
    %v82 = vand.u32 %v45, 4294901760
    %83 = vmatpush1.msra.mxu0 %v82
    %84 = vmatprep.subr.mxu0 0.0
    %85 = vmatpush1.msra.mxu0 0.0
    %86 = vmatprep.subr.mxu0 0.0
    %87 = vmatpush1.msra.mxu0 0.0
    %88 = vmatprep.subr.mxu0 0.0
    %89 = vmatpush1.msra.mxu0 0.0
    %90 = vmatprep.subr.mxu0 0.0
    %91 = vmatpush1.msra.mxu0 0.0
    %92 = vmatprep.subr.mxu0 0.0
    %93 = vmatpush1.msra.mxu0 0.0
    %94 = vmatprep.subr.mxu0 0.0
    %95 = vmatpush1.msra.mxu0 0.0
    %96 = vmatprep.subr.mxu0 0.0
    %97 = vmatpush1.msra.mxu0 0.0
    %98 = vmatprep.subr.mxu0 0.0
    %99 = vmatpush1.msra.mxu0 0.0
    %100 = vmatprep.subr.mxu0 0.0
    %101 = vmatpush1.msra.mxu0 0.0
    %102 = vmatprep.subr.mxu0 0.0
    %103 = vmatpush1.msra.mxu0 0.0
    %104 = vmatprep.subr.mxu0 0.0
    %105 = vmatpush1.msra.mxu0 0.0
    %106 = vmatprep.subr.mxu0 0.0
    %107 = vmatpush1.msra.mxu0 0.0
    %108 = vmatprep.subr.mxu0 0.0
    %109 = vmatpush1.msra.mxu0 0.0
    %110 = vmatprep.subr.mxu0 0.0
    %111 = vmatpush1.msra.mxu0 0.0
    %112 = vmatprep.subr.mxu0 0.0
    %113 = vmatpush1.msra.mxu0 0.0
    %114 = vmatprep.subr.mxu0 0.0
    %115 = vmatpush1.msra.mxu0 0.0
    %116 = vmatprep.subr.mxu0 0.0
    %117 = vmatpush1.msra.mxu0 0.0
    %118 = vmatprep.subr.mxu0 0.0
    %119 = vmatpush1.msra.mxu0 0.0
    %120 = vmatprep.subr.mxu0 0.0
    %121 = vmatpush1.msra.mxu0 0.0
    %122 = vmatprep.subr.mxu0 0.0
    %123 = vmatpush1.msra.mxu0 0.0
    %124 = vmatprep.subr.mxu0 0.0
    %125 = vmatpush1.msra.mxu0 0.0
    %126 = vmatprep.subr.mxu0 0.0
    %127 = vmatpush1.msra.mxu0 0.0
    %128 = vmatprep.subr.mxu0 0.0
    %129 = vmatpush1.msra.mxu0 0.0
    %130 = vmatprep.subr.mxu0 0.0
    %131 = vmatpush1.msra.mxu0 0.0
    %132 = vmatprep.subr.mxu0 0.0
    %133 = vmatpush1.msra.mxu0 0.0
    %134 = vmatprep.subr.mxu0 0.0
    %135 = vmatpush1.msra.mxu0 0.0
    %136 = vmatprep.subr.mxu0 0.0
    %137 = vmatpush1.msra.mxu0 0.0
    %138 = vmatprep.subr.mxu0 0.0
    %139 = vmatpush1.msra.mxu0 0.0
    %140 = vmatprep.subr.mxu0 0.0
    %141 = vmatpush1.msra.mxu0 0.0
    %142 = vmatprep.subr.mxu0 0.0
    %143 = vmatpush1.msra.mxu0 0.0
    %144 = vmatprep.mubr.f32.mxu0 0.0
    %v145 = vand.u32 %v55, 4294901760
    %v146 = vsub.f32 %v55, %v145
    %v147 = vand.u32 %v146, 4294901760
    %v148 = vsub.f32 %v146, %v147
    %v149 = vand.u32 %v148, 4294901760
    %150 = vmatmul.mubr.f32.gmra.mrb[0].mxu0 %v149
    %v151 = vpop.f32.mrb[0].mxu0
    %v152 = vadd.f32 %v51, %v151
    %v153 = vpop.f32.mrb[0].mxu0
    %154 = vmatprep.mubr.f32.mxu0 0.0
    %v155 = vand.u32 %v58, 4294901760
    %v156 = vsub.f32 %v58, %v155
    %v157 = vand.u32 %v156, 4294901760
    %v158 = vsub.f32 %v156, %v157
    %v159 = vand.u32 %v158, 4294901760
    %160 = vmatmul.mubr.f32.gmra.mrb[0].mxu0 %v159
    %v161 = vpop.f32.mrb[0].mxu0
    %v162 = vadd.f32 %v51, %v161
    %v163 = vpop.f32.mrb[0].mxu0
    %164 = vmatprep.mubr.f32.mxu0 0.0
    %v165 = vand.u32 %v61, 4294901760
    %v166 = vsub.f32 %v61, %v165
    %v167 = vand.u32 %v166, 4294901760
    %v168 = vsub.f32 %v166, %v167
    %v169 = vand.u32 %v168, 4294901760
    %170 = vmatmul.mubr.f32.gmra.mrb[0].mxu0 %v169
    %v171 = vpop.f32.mrb[0].mxu0
    %v172 = vadd.f32 %v51, %v171
    %v173 = vpop.f32.mrb[0].mxu0
    %174 = vmatprep.mubr.f32.mxu0 0.0
    %v175 = vand.u32 %v64, 4294901760
    %v176 = vsub.f32 %v64, %v175
    %v177 = vand.u32 %v176, 4294901760
    %v178 = vsub.f32 %v176, %v177
    %v179 = vand.u32 %v178, 4294901760
    %180 = vmatmul.mubr.f32.gmra.mrb[0].mxu0 %v179
    %v181 = vpop.f32.mrb[0].mxu0
    %v182 = vadd.f32 %v51, %v181
    %v183 = vpop.f32.mrb[0].mxu0
    %184 = vmatprep.mubr.f32.mxu0 0.0
    %v185 = vand.u32 %v67, 4294901760
    %v186 = vsub.f32 %v67, %v185
    %v187 = vand.u32 %v186, 4294901760
    %v188 = vsub.f32 %v186, %v187
    %v189 = vand.u32 %v188, 4294901760
    %190 = vmatmul.mubr.f32.gmra.mrb[0].mxu0 %v189
    %v191 = vpop.f32.mrb[0].mxu0
    %v192 = vadd.f32 %v51, %v191
    %v193 = vpop.f32.mrb[0].mxu0
    %194 = vmatprep.mubr.f32.mxu0 0.0
    %v195 = vand.u32 %v70, 4294901760
    %v196 = vsub.f32 %v70, %v195
    %v197 = vand.u32 %v196, 4294901760
    %v198 = vsub.f32 %v196, %v197
    %v199 = vand.u32 %v198, 4294901760
    %200 = vmatmul.mubr.f32.gmra.mrb[0].mxu0 %v199
    %v201 = vpop.f32.mrb[0].mxu0
    %v202 = vadd.f32 %v51, %v201
    %v203 = vpop.f32.mrb[0].mxu0
    %204 = vmatprep.mubr.f32.mxu0 0.0
    %v205 = vand.u32 %v73, 4294901760
    %v206 = vsub.f32 %v73, %v205
    %v207 = vand.u32 %v206, 4294901760
    %v208 = vsub.f32 %v206, %v207
    %v209 = vand.u32 %v208, 4294901760
    %210 = vmatmul.mubr.f32.gmra.mrb[0].mxu0 %v209
    %v211 = vpop.f32.mrb[0].mxu0
    %v212 = vadd.f32 %v51, %v211
    %v213 = vpop.f32.mrb[0].mxu0
    %214 = vmatprep.mubr.f32.mxu0 0.0
    %v215 = vand.u32 %v76, 4294901760
    %v216 = vsub.f32 %v76, %v215
    %v217 = vand.u32 %v216, 4294901760
    %v218 = vsub.f32 %v216, %v217
    %v219 = vand.u32 %v218, 4294901760
    %220 = vmatmul.mubr.f32.gmra.mrb[0].mxu0 %v219
    %v221 = vpop.f32.mrb[0].mxu0
    %v222 = vadd.f32 %v51, %v221
    %v223 = vpop.f32.mrb[0].mxu0
    %224 = vdwg.mxu0
    %225 = vmatprep.subr.mxu0 0.0
    %v226 = vand.u32 %v44, 4294901760
    %v227 = vsub.f32 %v44, %v226
    %v228 = vand.u32 %v227, 4294901760
    %v229 = vsub.f32 %v227, %v228
    %v230 = vand.u32 %v229, 4294901760
    %231 = vmatpush1.msra.mxu0 %v230
    %232 = vmatprep.subr.mxu0 0.0
    %v233 = vand.u32 %v45, 4294901760
    %v234 = vsub.f32 %v45, %v233
    %v235 = vand.u32 %v234, 4294901760
    %v236 = vsub.f32 %v234, %v235
    %v237 = vand.u32 %v236, 4294901760
    %238 = vmatpush1.msra.mxu0 %v237
    %239 = vmatprep.subr.mxu0 0.0
    %240 = vmatpush1.msra.mxu0 0.0
    %241 = vmatprep.subr.mxu0 0.0
    %242 = vmatpush1.msra.mxu0 0.0
    %243 = vmatprep.subr.mxu0 0.0
    %244 = vmatpush1.msra.mxu0 0.0
    %245 = vmatprep.subr.mxu0 0.0
    %246 = vmatpush1.msra.mxu0 0.0
    %247 = vmatprep.subr.mxu0 0.0
    %248 = vmatpush1.msra.mxu0 0.0
    %249 = vmatprep.subr.mxu0 0.0
    %250 = vmatpush1.msra.mxu0 0.0
    %251 = vmatprep.subr.mxu0 0.0
    %252 = vmatpush1.msra.mxu0 0.0
    %253 = vmatprep.subr.mxu0 0.0
    %254 = vmatpush1.msra.mxu0 0.0
    %255 = vmatprep.subr.mxu0 0.0
    %256 = vmatpush1.msra.mxu0 0.0
    %257 = vmatprep.subr.mxu0 0.0
    %258 = vmatpush1.msra.mxu0 0.0
    %259 = vmatprep.subr.mxu0 0.0
    %260 = vmatpush1.msra.mxu0 0.0
    %261 = vmatprep.subr.mxu0 0.0
    %262 = vmatpush1.msra.mxu0 0.0
    %263 = vmatprep.subr.mxu0 0.0
    %264 = vmatpush1.msra.mxu0 0.0
    %265 = vmatprep.subr.mxu0 0.0
    %266 = vmatpush1.msra.mxu0 0.0
    %267 = vmatprep.subr.mxu0 0.0
    %268 = vmatpush1.msra.mxu0 0.0
    %269 = vmatprep.subr.mxu0 0.0
    %270 = vmatpush1.msra.mxu0 0.0
    %271 = vmatprep.subr.mxu0 0.0
    %272 = vmatpush1.msra.mxu0 0.0
    %273 = vmatprep.subr.mxu0 0.0
    %274 = vmatpush1.msra.mxu0 0.0
    %275 = vmatprep.subr.mxu0 0.0
    %276 = vmatpush1.msra.mxu0 0.0
    %277 = vmatprep.subr.mxu0 0.0
    %278 = vmatpush1.msra.mxu0 0.0
    %279 = vmatprep.subr.mxu0 0.0
    %280 = vmatpush1.msra.mxu0 0.0
    %281 = vmatprep.subr.mxu0 0.0
    %282 = vmatpush1.msra.mxu0 0.0
    %283 = vmatprep.subr.mxu0 0.0
    %284 = vmatpush1.msra.mxu0 0.0
    %285 = vmatprep.subr.mxu0 0.0
    %286 = vmatpush1.msra.mxu0 0.0
    %287 = vmatprep.subr.mxu0 0.0
    %288 = vmatpush1.msra.mxu0 0.0
    %289 = vmatprep.subr.mxu0 0.0
    %290 = vmatpush1.msra.mxu0 0.0
    %291 = vmatprep.subr.mxu0 0.0
    %292 = vmatpush1.msra.mxu0 0.0
    %293 = vmatprep.subr.mxu0 0.0
    %294 = vmatpush1.msra.mxu0 0.0
    %295 = vmatprep.subr.mxu0 0.0
    %296 = vmatpush1.msra.mxu0 0.0
    %297 = vmatprep.subr.mxu0 0.0
    %298 = vmatpush1.msra.mxu0 0.0
    %299 = vmatprep.mubr.f32.mxu0 0.0
    %v300 = vand.u32 %v55, 4294901760
    %301 = vmatmul.mubr.f32.gmra.mrb[0].mxu0 %v300
    %v302 = vpop.f32.mrb[0].mxu0
    %v303 = vadd.f32 %v152, %v302
    %v304 = vpop.f32.mrb[0].mxu0
    %305 = vmatprep.mubr.f32.mxu0 0.0
    %v306 = vand.u32 %v58, 4294901760
    %307 = vmatmul.mubr.f32.gmra.mrb[0].mxu0 %v306
    %v308 = vpop.f32.mrb[0].mxu0
    %v309 = vadd.f32 %v162, %v308
    %v310 = vpop.f32.mrb[0].mxu0
    %311 = vmatprep.mubr.f32.mxu0 0.0
    %v312 = vand.u32 %v61, 4294901760
    %313 = vmatmul.mubr.f32.gmra.mrb[0].mxu0 %v312
    %v314 = vpop.f32.mrb[0].mxu0
    %v315 = vadd.f32 %v172, %v314
    %v316 = vpop.f32.mrb[0].mxu0
    %317 = vmatprep.mubr.f32.mxu0 0.0
    %v318 = vand.u32 %v64, 4294901760
    %319 = vmatmul.mubr.f32.gmra.mrb[0].mxu0 %v318
    %v320 = vpop.f32.mrb[0].mxu0
    %v321 = vadd.f32 %v182, %v320
    %v322 = vpop.f32.mrb[0].mxu0
    %323 = vmatprep.mubr.f32.mxu0 0.0
    %v324 = vand.u32 %v67, 4294901760
    %325 = vmatmul.mubr.f32.gmra.mrb[0].mxu0 %v324
    %v326 = vpop.f32.mrb[0].mxu0
    %v327 = vadd.f32 %v192, %v326
    %v328 = vpop.f32.mrb[0].mxu0
    %329 = vmatprep.mubr.f32.mxu0 0.0
    %v330 = vand.u32 %v70, 4294901760
    %331 = vmatmul.mubr.f32.gmra.mrb[0].mxu0 %v330
    %v332 = vpop.f32.mrb[0].mxu0
    %v333 = vadd.f32 %v202, %v332
    %v334 = vpop.f32.mrb[0].mxu0
    %335 = vmatprep.mubr.f32.mxu0 0.0
    %v336 = vand.u32 %v73, 4294901760
    %337 = vmatmul.mubr.f32.gmra.mrb[0].mxu0 %v336
    %v338 = vpop.f32.mrb[0].mxu0
    %v339 = vadd.f32 %v212, %v338
    %v340 = vpop.f32.mrb[0].mxu0
    %341 = vmatprep.mubr.f32.mxu0 0.0
    %v342 = vand.u32 %v76, 4294901760
    %343 = vmatmul.mubr.f32.gmra.mrb[0].mxu0 %v342
    %v344 = vpop.f32.mrb[0].mxu0
    %v345 = vadd.f32 %v222, %v344
    %v346 = vpop.f32.mrb[0].mxu0
    %347 = vdwg.mxu0
    %348 = vmatprep.subr.mxu0 0.0
    %v349 = vand.u32 %v44, 4294901760
    %v350 = vsub.f32 %v44, %v349
    %351 = vmatpush1.msra.mxu0 %v350
    %352 = vmatprep.subr.mxu0 0.0
    %v353 = vand.u32 %v45, 4294901760
    %v354 = vsub.f32 %v45, %v353
    %355 = vmatpush1.msra.mxu0 %v354
    %356 = vmatprep.subr.mxu0 0.0
    %357 = vmatpush1.msra.mxu0 0.0
    %358 = vmatprep.subr.mxu0 0.0
    %359 = vmatpush1.msra.mxu0 0.0
    %360 = vmatprep.subr.mxu0 0.0
    %361 = vmatpush1.msra.mxu0 0.0
    %362 = vmatprep.subr.mxu0 0.0
    %363 = vmatpush1.msra.mxu0 0.0
    %364 = vmatprep.subr.mxu0 0.0
    %365 = vmatpush1.msra.mxu0 0.0
    %366 = vmatprep.subr.mxu0 0.0
    %367 = vmatpush1.msra.mxu0 0.0
    %368 = vmatprep.subr.mxu0 0.0
    %369 = vmatpush1.msra.mxu0 0.0
    %370 = vmatprep.subr.mxu0 0.0
    %371 = vmatpush1.msra.mxu0 0.0
    %372 = vmatprep.subr.mxu0 0.0
    %373 = vmatpush1.msra.mxu0 0.0
    %374 = vmatprep.subr.mxu0 0.0
    %375 = vmatpush1.msra.mxu0 0.0
    %376 = vmatprep.subr.mxu0 0.0
    %377 = vmatpush1.msra.mxu0 0.0
    %378 = vmatprep.subr.mxu0 0.0
    %379 = vmatpush1.msra.mxu0 0.0
    %380 = vmatprep.subr.mxu0 0.0
    %381 = vmatpush1.msra.mxu0 0.0
    %382 = vmatprep.subr.mxu0 0.0
    %383 = vmatpush1.msra.mxu0 0.0
    %384 = vmatprep.subr.mxu0 0.0
    %385 = vmatpush1.msra.mxu0 0.0
    %386 = vmatprep.subr.mxu0 0.0
    %387 = vmatpush1.msra.mxu0 0.0
    %388 = vmatprep.subr.mxu0 0.0
    %389 = vmatpush1.msra.mxu0 0.0
    %390 = vmatprep.subr.mxu0 0.0
    %391 = vmatpush1.msra.mxu0 0.0
    %392 = vmatprep.subr.mxu0 0.0
    %393 = vmatpush1.msra.mxu0 0.0
    %394 = vmatprep.subr.mxu0 0.0
    %395 = vmatpush1.msra.mxu0 0.0
    %396 = vmatprep.subr.mxu0 0.0
    %397 = vmatpush1.msra.mxu0 0.0
    %398 = vmatprep.subr.mxu0 0.0
    %399 = vmatpush1.msra.mxu0 0.0
    %400 = vmatprep.subr.mxu0 0.0
    %401 = vmatpush1.msra.mxu0 0.0
    %402 = vmatprep.subr.mxu0 0.0
    %403 = vmatpush1.msra.mxu0 0.0
    %404 = vmatprep.subr.mxu0 0.0
    %405 = vmatpush1.msra.mxu0 0.0
    %406 = vmatprep.subr.mxu0 0.0
    %407 = vmatpush1.msra.mxu0 0.0
    %408 = vmatprep.subr.mxu0 0.0
    %409 = vmatpush1.msra.mxu0 0.0
    %410 = vmatprep.subr.mxu0 0.0
    %411 = vmatpush1.msra.mxu0 0.0
    %412 = vmatprep.subr.mxu0 0.0
    %413 = vmatpush1.msra.mxu0 0.0
    %414 = vmatprep.subr.mxu0 0.0
    %415 = vmatpush1.msra.mxu0 0.0
    %416 = vmatprep.mubr.f32.mxu0 0.0
    %v417 = vand.u32 %v55, 4294901760
    %v418 = vsub.f32 %v55, %v417
    %419 = vmatmul.mubr.f32.gmra.mrb[0].mxu0 %v418
    %v420 = vpop.f32.mrb[0].mxu0
    %v421 = vadd.f32 %v303, %v420
    %v422 = vpop.f32.mrb[0].mxu0
    %423 = vmatprep.mubr.f32.mxu0 0.0
    %v424 = vand.u32 %v58, 4294901760
    %v425 = vsub.f32 %v58, %v424
    %426 = vmatmul.mubr.f32.gmra.mrb[0].mxu0 %v425
    %v427 = vpop.f32.mrb[0].mxu0
    %v428 = vadd.f32 %v309, %v427
    %v429 = vpop.f32.mrb[0].mxu0
    %430 = vmatprep.mubr.f32.mxu0 0.0
    %v431 = vand.u32 %v61, 4294901760
    %v432 = vsub.f32 %v61, %v431
    %433 = vmatmul.mubr.f32.gmra.mrb[0].mxu0 %v432
    %v434 = vpop.f32.mrb[0].mxu0
    %v435 = vadd.f32 %v315, %v434
    %v436 = vpop.f32.mrb[0].mxu0
    %437 = vmatprep.mubr.f32.mxu0 0.0
    %v438 = vand.u32 %v64, 4294901760
    %v439 = vsub.f32 %v64, %v438
    %440 = vmatmul.mubr.f32.gmra.mrb[0].mxu0 %v439
    %v441 = vpop.f32.mrb[0].mxu0
    %v442 = vadd.f32 %v321, %v441
    %v443 = vpop.f32.mrb[0].mxu0
    %444 = vmatprep.mubr.f32.mxu0 0.0
    %v445 = vand.u32 %v67, 4294901760
    %v446 = vsub.f32 %v67, %v445
    %447 = vmatmul.mubr.f32.gmra.mrb[0].mxu0 %v446
    %v448 = vpop.f32.mrb[0].mxu0
    %v449 = vadd.f32 %v327, %v448
    %v450 = vpop.f32.mrb[0].mxu0
    %451 = vmatprep.mubr.f32.mxu0 0.0
    %v452 = vand.u32 %v70, 4294901760
    %v453 = vsub.f32 %v70, %v452
    %454 = vmatmul.mubr.f32.gmra.mrb[0].mxu0 %v453
    %v455 = vpop.f32.mrb[0].mxu0
    %v456 = vadd.f32 %v333, %v455
    %v457 = vpop.f32.mrb[0].mxu0
    %458 = vmatprep.mubr.f32.mxu0 0.0
    %v459 = vand.u32 %v73, 4294901760
    %v460 = vsub.f32 %v73, %v459
    %461 = vmatmul.mubr.f32.gmra.mrb[0].mxu0 %v460
    %v462 = vpop.f32.mrb[0].mxu0
    %v463 = vadd.f32 %v339, %v462
    %v464 = vpop.f32.mrb[0].mxu0
    %465 = vmatprep.mubr.f32.mxu0 0.0
    %v466 = vand.u32 %v76, 4294901760
    %v467 = vsub.f32 %v76, %v466
    %468 = vmatmul.mubr.f32.gmra.mrb[0].mxu0 %v467
    %v469 = vpop.f32.mrb[0].mxu0
    %v470 = vadd.f32 %v345, %v469
    %v471 = vpop.f32.mrb[0].mxu0
    %472 = vdwg.mxu0
    %473 = vmatprep.subr.mxu0 0.0
    %v474 = vand.u32 %v44, 4294901760
    %475 = vmatpush1.msra.mxu0 %v474
    %476 = vmatprep.subr.mxu0 0.0
    %v477 = vand.u32 %v45, 4294901760
    %478 = vmatpush1.msra.mxu0 %v477
    %479 = vmatprep.subr.mxu0 0.0
    %480 = vmatpush1.msra.mxu0 0.0
    %481 = vmatprep.subr.mxu0 0.0
    %482 = vmatpush1.msra.mxu0 0.0
    %483 = vmatprep.subr.mxu0 0.0
    %484 = vmatpush1.msra.mxu0 0.0
    %485 = vmatprep.subr.mxu0 0.0
    %486 = vmatpush1.msra.mxu0 0.0
    %487 = vmatprep.subr.mxu0 0.0
    %488 = vmatpush1.msra.mxu0 0.0
    %489 = vmatprep.subr.mxu0 0.0
    %490 = vmatpush1.msra.mxu0 0.0
    %491 = vmatprep.subr.mxu0 0.0
    %492 = vmatpush1.msra.mxu0 0.0
    %493 = vmatprep.subr.mxu0 0.0
    %494 = vmatpush1.msra.mxu0 0.0
    %495 = vmatprep.subr.mxu0 0.0
    %496 = vmatpush1.msra.mxu0 0.0
    %497 = vmatprep.subr.mxu0 0.0
    %498 = vmatpush1.msra.mxu0 0.0
    %499 = vmatprep.subr.mxu0 0.0
    %500 = vmatpush1.msra.mxu0 0.0
    %501 = vmatprep.subr.mxu0 0.0
    %502 = vmatpush1.msra.mxu0 0.0
    %503 = vmatprep.subr.mxu0 0.0
    %504 = vmatpush1.msra.mxu0 0.0
    %505 = vmatprep.subr.mxu0 0.0
    %506 = vmatpush1.msra.mxu0 0.0
    %507 = vmatprep.subr.mxu0 0.0
    %508 = vmatpush1.msra.mxu0 0.0
    %509 = vmatprep.subr.mxu0 0.0
    %510 = vmatpush1.msra.mxu0 0.0
    %511 = vmatprep.subr.mxu0 0.0
    %512 = vmatpush1.msra.mxu0 0.0
    %513 = vmatprep.subr.mxu0 0.0
    %514 = vmatpush1.msra.mxu0 0.0
    %515 = vmatprep.subr.mxu0 0.0
    %516 = vmatpush1.msra.mxu0 0.0
    %517 = vmatprep.subr.mxu0 0.0
    %518 = vmatpush1.msra.mxu0 0.0
    %519 = vmatprep.subr.mxu0 0.0
    %520 = vmatpush1.msra.mxu0 0.0
    %521 = vmatprep.subr.mxu0 0.0
    %522 = vmatpush1.msra.mxu0 0.0
    %523 = vmatprep.subr.mxu0 0.0
    %524 = vmatpush1.msra.mxu0 0.0
    %525 = vmatprep.subr.mxu0 0.0
    %526 = vmatpush1.msra.mxu0 0.0
    %527 = vmatprep.subr.mxu0 0.0
    %528 = vmatpush1.msra.mxu0 0.0
    %529 = vmatprep.subr.mxu0 0.0
    %530 = vmatpush1.msra.mxu0 0.0
    %531 = vmatprep.subr.mxu0 0.0
    %532 = vmatpush1.msra.mxu0 0.0
    %533 = vmatprep.subr.mxu0 0.0
    %534 = vmatpush1.msra.mxu0 0.0
    %535 = vmatprep.subr.mxu0 0.0
    %536 = vmatpush1.msra.mxu0 0.0
    %537 = vmatprep.subr.mxu0 0.0
    %538 = vmatpush1.msra.mxu0 0.0
    %539 = vmatprep.mubr.f32.mxu0 0.0
    %v540 = vand.u32 %v55, 4294901760
    %v541 = vsub.f32 %v55, %v540
    %v542 = vand.u32 %v541, 4294901760
    %543 = vmatmul.mubr.f32.gmra.mrb[0].mxu0 %v542
    %v544 = vpop.f32.mrb[0].mxu0
    %v545 = vadd.f32 %v421, %v544
    %v546 = vpop.f32.mrb[0].mxu0
    %547 = vmatprep.mubr.f32.mxu0 0.0
    %v548 = vand.u32 %v58, 4294901760
    %v549 = vsub.f32 %v58, %v548
    %v550 = vand.u32 %v549, 4294901760
    %551 = vmatmul.mubr.f32.gmra.mrb[0].mxu0 %v550
    %v552 = vpop.f32.mrb[0].mxu0
    %v553 = vadd.f32 %v428, %v552
    %v554 = vpop.f32.mrb[0].mxu0
    %555 = vmatprep.mubr.f32.mxu0 0.0
    %v556 = vand.u32 %v61, 4294901760
    %v557 = vsub.f32 %v61, %v556
    %v558 = vand.u32 %v557, 4294901760
    %559 = vmatmul.mubr.f32.gmra.mrb[0].mxu0 %v558
    %v560 = vpop.f32.mrb[0].mxu0
    %v561 = vadd.f32 %v435, %v560
    %v562 = vpop.f32.mrb[0].mxu0
    %563 = vmatprep.mubr.f32.mxu0 0.0
    %v564 = vand.u32 %v64, 4294901760
    %v565 = vsub.f32 %v64, %v564
    %v566 = vand.u32 %v565, 4294901760
    %567 = vmatmul.mubr.f32.gmra.mrb[0].mxu0 %v566
    %v568 = vpop.f32.mrb[0].mxu0
    %v569 = vadd.f32 %v442, %v568
    %v570 = vpop.f32.mrb[0].mxu0
    %571 = vmatprep.mubr.f32.mxu0 0.0
    %v572 = vand.u32 %v67, 4294901760
    %v573 = vsub.f32 %v67, %v572
    %v574 = vand.u32 %v573, 4294901760
    %575 = vmatmul.mubr.f32.gmra.mrb[0].mxu0 %v574
    %v576 = vpop.f32.mrb[0].mxu0
    %v577 = vadd.f32 %v449, %v576
    %v578 = vpop.f32.mrb[0].mxu0
    %579 = vmatprep.mubr.f32.mxu0 0.0
    %v580 = vand.u32 %v70, 4294901760
    %v581 = vsub.f32 %v70, %v580
    %v582 = vand.u32 %v581, 4294901760
    %583 = vmatmul.mubr.f32.gmra.mrb[0].mxu0 %v582
    %v584 = vpop.f32.mrb[0].mxu0
    %v585 = vadd.f32 %v456, %v584
    %v586 = vpop.f32.mrb[0].mxu0
    %587 = vmatprep.mubr.f32.mxu0 0.0
    %v588 = vand.u32 %v73, 4294901760
    %v589 = vsub.f32 %v73, %v588
    %v590 = vand.u32 %v589, 4294901760
    %591 = vmatmul.mubr.f32.gmra.mrb[0].mxu0 %v590
    %v592 = vpop.f32.mrb[0].mxu0
    %v593 = vadd.f32 %v463, %v592
    %v594 = vpop.f32.mrb[0].mxu0
    %595 = vmatprep.mubr.f32.mxu0 0.0
    %v596 = vand.u32 %v76, 4294901760
    %v597 = vsub.f32 %v76, %v596
    %v598 = vand.u32 %v597, 4294901760
    %599 = vmatmul.mubr.f32.gmra.mrb[0].mxu0 %v598
    %v600 = vpop.f32.mrb[0].mxu0
    %v601 = vadd.f32 %v470, %v600
    %v602 = vpop.f32.mrb[0].mxu0
    %603 = vdwg.mxu0
    %604 = vmatprep.subr.mxu0 0.0
    %v605 = vand.u32 %v44, 4294901760
    %v606 = vsub.f32 %v44, %v605
    %v607 = vand.u32 %v606, 4294901760
    %608 = vmatpush1.msra.mxu0 %v607
    %609 = vmatprep.subr.mxu0 0.0
    %v610 = vand.u32 %v45, 4294901760
    %v611 = vsub.f32 %v45, %v610
    %v612 = vand.u32 %v611, 4294901760
    %613 = vmatpush1.msra.mxu0 %v612
    %614 = vmatprep.subr.mxu0 0.0
    %615 = vmatpush1.msra.mxu0 0.0
    %616 = vmatprep.subr.mxu0 0.0
    %617 = vmatpush1.msra.mxu0 0.0
    %618 = vmatprep.subr.mxu0 0.0
    %619 = vmatpush1.msra.mxu0 0.0
    %620 = vmatprep.subr.mxu0 0.0
    %621 = vmatpush1.msra.mxu0 0.0
    %622 = vmatprep.subr.mxu0 0.0
    %623 = vmatpush1.msra.mxu0 0.0
    %624 = vmatprep.subr.mxu0 0.0
    %625 = vmatpush1.msra.mxu0 0.0
    %626 = vmatprep.subr.mxu0 0.0
    %627 = vmatpush1.msra.mxu0 0.0
    %628 = vmatprep.subr.mxu0 0.0
    %629 = vmatpush1.msra.mxu0 0.0
    %630 = vmatprep.subr.mxu0 0.0
    %631 = vmatpush1.msra.mxu0 0.0
    %632 = vmatprep.subr.mxu0 0.0
    %633 = vmatpush1.msra.mxu0 0.0
    %634 = vmatprep.subr.mxu0 0.0
    %635 = vmatpush1.msra.mxu0 0.0
    %636 = vmatprep.subr.mxu0 0.0
    %637 = vmatpush1.msra.mxu0 0.0
    %638 = vmatprep.subr.mxu0 0.0
    %639 = vmatpush1.msra.mxu0 0.0
    %640 = vmatprep.subr.mxu0 0.0
    %641 = vmatpush1.msra.mxu0 0.0
    %642 = vmatprep.subr.mxu0 0.0
    %643 = vmatpush1.msra.mxu0 0.0
    %644 = vmatprep.subr.mxu0 0.0
    %645 = vmatpush1.msra.mxu0 0.0
    %646 = vmatprep.subr.mxu0 0.0
    %647 = vmatpush1.msra.mxu0 0.0
    %648 = vmatprep.subr.mxu0 0.0
    %649 = vmatpush1.msra.mxu0 0.0
    %650 = vmatprep.subr.mxu0 0.0
    %651 = vmatpush1.msra.mxu0 0.0
    %652 = vmatprep.subr.mxu0 0.0
    %653 = vmatpush1.msra.mxu0 0.0
    %654 = vmatprep.subr.mxu0 0.0
    %655 = vmatpush1.msra.mxu0 0.0
    %656 = vmatprep.subr.mxu0 0.0
    %657 = vmatpush1.msra.mxu0 0.0
    %658 = vmatprep.subr.mxu0 0.0
    %659 = vmatpush1.msra.mxu0 0.0
    %660 = vmatprep.subr.mxu0 0.0
    %661 = vmatpush1.msra.mxu0 0.0
    %662 = vmatprep.subr.mxu0 0.0
    %663 = vmatpush1.msra.mxu0 0.0
    %664 = vmatprep.subr.mxu0 0.0
    %665 = vmatpush1.msra.mxu0 0.0
    %666 = vmatprep.subr.mxu0 0.0
    %667 = vmatpush1.msra.mxu0 0.0
    %668 = vmatprep.subr.mxu0 0.0
    %669 = vmatpush1.msra.mxu0 0.0
    %670 = vmatprep.subr.mxu0 0.0
    %671 = vmatpush1.msra.mxu0 0.0
    %672 = vmatprep.subr.mxu0 0.0
    %673 = vmatpush1.msra.mxu0 0.0
    %674 = vmatprep.mubr.f32.mxu0 0.0
    %v675 = vand.u32 %v55, 4294901760
    %676 = vmatmul.mubr.f32.gmra.mrb[0].mxu0 %v675
    %v677 = vpop.f32.mrb[0].mxu0
    %v678 = vadd.f32 %v545, %v677
    %v679 = vpop.f32.mrb[0].mxu0
    %680 = vmatprep.mubr.f32.mxu0 0.0
    %v681 = vand.u32 %v58, 4294901760
    %682 = vmatmul.mubr.f32.gmra.mrb[0].mxu0 %v681
    %v683 = vpop.f32.mrb[0].mxu0
    %v684 = vadd.f32 %v553, %v683
    %v685 = vpop.f32.mrb[0].mxu0
    %686 = vmatprep.mubr.f32.mxu0 0.0
    %v687 = vand.u32 %v61, 4294901760
    %688 = vmatmul.mubr.f32.gmra.mrb[0].mxu0 %v687
    %v689 = vpop.f32.mrb[0].mxu0
    %v690 = vadd.f32 %v561, %v689
    %v691 = vpop.f32.mrb[0].mxu0
    %692 = vmatprep.mubr.f32.mxu0 0.0
    %v693 = vand.u32 %v64, 4294901760
    %694 = vmatmul.mubr.f32.gmra.mrb[0].mxu0 %v693
    %v695 = vpop.f32.mrb[0].mxu0
    %v696 = vadd.f32 %v569, %v695
    %v697 = vpop.f32.mrb[0].mxu0
    %698 = vmatprep.mubr.f32.mxu0 0.0
    %v699 = vand.u32 %v67, 4294901760
    %700 = vmatmul.mubr.f32.gmra.mrb[0].mxu0 %v699
    %v701 = vpop.f32.mrb[0].mxu0
    %v702 = vadd.f32 %v577, %v701
    %v703 = vpop.f32.mrb[0].mxu0
    %704 = vmatprep.mubr.f32.mxu0 0.0
    %v705 = vand.u32 %v70, 4294901760
    %706 = vmatmul.mubr.f32.gmra.mrb[0].mxu0 %v705
    %v707 = vpop.f32.mrb[0].mxu0
    %v708 = vadd.f32 %v585, %v707
    %v709 = vpop.f32.mrb[0].mxu0
    %710 = vmatprep.mubr.f32.mxu0 0.0
    %v711 = vand.u32 %v73, 4294901760
    %712 = vmatmul.mubr.f32.gmra.mrb[0].mxu0 %v711
    %v713 = vpop.f32.mrb[0].mxu0
    %v714 = vadd.f32 %v593, %v713
    %v715 = vpop.f32.mrb[0].mxu0
    %716 = vmatprep.mubr.f32.mxu0 0.0
    %v717 = vand.u32 %v76, 4294901760
    %718 = vmatmul.mubr.f32.gmra.mrb[0].mxu0 %v717
    %v719 = vpop.f32.mrb[0].mxu0
    %v720 = vadd.f32 %v601, %v719
    %v721 = vpop.f32.mrb[0].mxu0
    %722 = vdwg.mxu0
    %723 = vmatprep.subr.mxu0 0.0
    %v724 = vand.u32 %v44, 4294901760
    %725 = vmatpush1.msra.mxu0 %v724
    %726 = vmatprep.subr.mxu0 0.0
    %v727 = vand.u32 %v45, 4294901760
    %728 = vmatpush1.msra.mxu0 %v727
    %729 = vmatprep.subr.mxu0 0.0
    %730 = vmatpush1.msra.mxu0 0.0
    %731 = vmatprep.subr.mxu0 0.0
    %732 = vmatpush1.msra.mxu0 0.0
    %733 = vmatprep.subr.mxu0 0.0
    %734 = vmatpush1.msra.mxu0 0.0
    %735 = vmatprep.subr.mxu0 0.0
    %736 = vmatpush1.msra.mxu0 0.0
    %737 = vmatprep.subr.mxu0 0.0
    %738 = vmatpush1.msra.mxu0 0.0
    %739 = vmatprep.subr.mxu0 0.0
    %740 = vmatpush1.msra.mxu0 0.0
    %741 = vmatprep.subr.mxu0 0.0
    %742 = vmatpush1.msra.mxu0 0.0
    %743 = vmatprep.subr.mxu0 0.0
    %744 = vmatpush1.msra.mxu0 0.0
    %745 = vmatprep.subr.mxu0 0.0
    %746 = vmatpush1.msra.mxu0 0.0
    %747 = vmatprep.subr.mxu0 0.0
    %748 = vmatpush1.msra.mxu0 0.0
    %749 = vmatprep.subr.mxu0 0.0
    %750 = vmatpush1.msra.mxu0 0.0
    %751 = vmatprep.subr.mxu0 0.0
    %752 = vmatpush1.msra.mxu0 0.0
    %753 = vmatprep.subr.mxu0 0.0
    %754 = vmatpush1.msra.mxu0 0.0
    %755 = vmatprep.subr.mxu0 0.0
    %756 = vmatpush1.msra.mxu0 0.0
    %757 = vmatprep.subr.mxu0 0.0
    %758 = vmatpush1.msra.mxu0 0.0
    %759 = vmatprep.subr.mxu0 0.0
    %760 = vmatpush1.msra.mxu0 0.0
    %761 = vmatprep.subr.mxu0 0.0
    %762 = vmatpush1.msra.mxu0 0.0
    %763 = vmatprep.subr.mxu0 0.0
    %764 = vmatpush1.msra.mxu0 0.0
    %765 = vmatprep.subr.mxu0 0.0
    %766 = vmatpush1.msra.mxu0 0.0
    %767 = vmatprep.subr.mxu0 0.0
    %768 = vmatpush1.msra.mxu0 0.0
    %769 = vmatprep.subr.mxu0 0.0
    %770 = vmatpush1.msra.mxu0 0.0
    %771 = vmatprep.subr.mxu0 0.0
    %772 = vmatpush1.msra.mxu0 0.0
    %773 = vmatprep.subr.mxu0 0.0
    %774 = vmatpush1.msra.mxu0 0.0
    %775 = vmatprep.subr.mxu0 0.0
    %776 = vmatpush1.msra.mxu0 0.0
    %777 = vmatprep.subr.mxu0 0.0
    %778 = vmatpush1.msra.mxu0 0.0
    %779 = vmatprep.subr.mxu0 0.0
    %780 = vmatpush1.msra.mxu0 0.0
    %781 = vmatprep.subr.mxu0 0.0
    %782 = vmatpush1.msra.mxu0 0.0
    %783 = vmatprep.subr.mxu0 0.0
    %784 = vmatpush1.msra.mxu0 0.0
    %785 = vmatprep.subr.mxu0 0.0
    %786 = vmatpush1.msra.mxu0 0.0
    %787 = vmatprep.subr.mxu0 0.0
    %788 = vmatpush1.msra.mxu0 0.0
    %789 = vmatprep.mubr.f32.mxu0 0.0
    %v790 = vand.u32 %v55, 4294901760
    %791 = vmatmul.mubr.f32.gmra.mrb[0].mxu0 %v790
    %v792 = vpop.f32.mrb[0].mxu0
    %v793 = vadd.f32 %v678, %v792
    %v794 = vpop.f32.mrb[0].mxu0
    %795 = vmatprep.mubr.f32.mxu0 0.0
    %v796 = vand.u32 %v58, 4294901760
    %797 = vmatmul.mubr.f32.gmra.mrb[0].mxu0 %v796
    %v798 = vpop.f32.mrb[0].mxu0
    %v799 = vadd.f32 %v684, %v798
    %v800 = vpop.f32.mrb[0].mxu0
    %801 = vmatprep.mubr.f32.mxu0 0.0
    %v802 = vand.u32 %v61, 4294901760
    %803 = vmatmul.mubr.f32.gmra.mrb[0].mxu0 %v802
    %v804 = vpop.f32.mrb[0].mxu0
    %v805 = vadd.f32 %v690, %v804
    %v806 = vpop.f32.mrb[0].mxu0
    %807 = vmatprep.mubr.f32.mxu0 0.0
    %v808 = vand.u32 %v64, 4294901760
    %809 = vmatmul.mubr.f32.gmra.mrb[0].mxu0 %v808
    %v810 = vpop.f32.mrb[0].mxu0
    %v811 = vadd.f32 %v696, %v810
    %v812 = vpop.f32.mrb[0].mxu0
    %813 = vmatprep.mubr.f32.mxu0 0.0
    %v814 = vand.u32 %v67, 4294901760
    %815 = vmatmul.mubr.f32.gmra.mrb[0].mxu0 %v814
    %v816 = vpop.f32.mrb[0].mxu0
    %v817 = vadd.f32 %v702, %v816
    %v818 = vpop.f32.mrb[0].mxu0
    %819 = vmatprep.mubr.f32.mxu0 0.0
    %v820 = vand.u32 %v70, 4294901760
    %821 = vmatmul.mubr.f32.gmra.mrb[0].mxu0 %v820
    %v822 = vpop.f32.mrb[0].mxu0
    %v823 = vadd.f32 %v708, %v822
    %v824 = vpop.f32.mrb[0].mxu0
    %825 = vmatprep.mubr.f32.mxu0 0.0
    %v826 = vand.u32 %v73, 4294901760
    %827 = vmatmul.mubr.f32.gmra.mrb[0].mxu0 %v826
    %v828 = vpop.f32.mrb[0].mxu0
    %v829 = vadd.f32 %v714, %v828
    %v830 = vpop.f32.mrb[0].mxu0
    %831 = vmatprep.mubr.f32.mxu0 0.0
    %v832 = vand.u32 %v76, 4294901760
    %833 = vmatmul.mubr.f32.gmra.mrb[0].mxu0 %v832
    %v834 = vpop.f32.mrb[0].mxu0
    %v835 = vadd.f32 %v720, %v834
    %v836 = vpop.f32.mrb[0].mxu0
    %837 = vdwg.mxu0
    %v838 = vmax.f32 %v793, 0.0
    %v839 = vmax.f32 %v799, 0.0
    %v840 = vmax.f32 %v805, 0.0
    %v841 = vmax.f32 %v811, 0.0
    %v842 = vmax.f32 %v817, 0.0
    %v843 = vmax.f32 %v823, 0.0
    %v844 = vmax.f32 %v829, 0.0
    %v845 = vmax.f32 %v835, 0.0
    %v846 = vld [vmem:[%s3] sm:$0xff]
    %v847 = vld [vmem:[%s3 + $0x8] sm:$0xff]
    %v848 = vld [vmem:[%s3 + $0x10] sm:$0xff]
    %v849 = vld [vmem:[%s3 + $0x18] sm:$0xff]
    %v850 = vld [vmem:[%s3 + $0x20] sm:$0xff]
    %v851 = vld [vmem:[%s3 + $0x28] sm:$0xff]
    %v852 = vld [vmem:[%s3 + $0x30] sm:$0xff]
    %v853 = vld [vmem:[%s3 + $0x38] sm:$0xff]
    %v854 = vld [vmem:[%s3 + $0x40] sm:$0xff]
    %v855 = vld [vmem:[%s3 + $0x48] sm:$0xff]
    %v856 = vld [vmem:[%s3 + $0x50] sm:$0xff]
    %v857 = vld [vmem:[%s3 + $0x58] sm:$0xff]
    %v858 = vld [vmem:[%s4] sm:$0x1]
    %v860 = vlaneseq
    %v861 = vshrl.u32 %v860, 7
    %v862 = vsub.s32 0, %v861
    %v863 = vrot.slane %v858, %v862
    %vm865 = vcmask 785408
    %v867 = vsel %vm865, %v838, 0
    %v870 = vsel %vm865, %v839, 0
    %v873 = vsel %vm865, %v840, 0
    %v876 = vsel %vm865, %v841, 0
    %v879 = vsel %vm865, %v842, 0
    %v882 = vsel %vm865, %v843, 0
    %v885 = vsel %vm865, %v844, 0
    %v888 = vsel %vm865, %v845, 0
    %890 = vmatprep.subr.mxu0 0.0
    %v891 = vand.u32 %v846, 4294901760
    %892 = vmatpush1.msra.mxu0 %v891
    %893 = vmatprep.subr.mxu0 0.0
    %v894 = vand.u32 %v847, 4294901760
    %895 = vmatpush1.msra.mxu0 %v894
    %896 = vmatprep.subr.mxu0 0.0
    %v897 = vand.u32 %v848, 4294901760
    %898 = vmatpush1.msra.mxu0 %v897
    %899 = vmatprep.subr.mxu0 0.0
    %v900 = vand.u32 %v849, 4294901760
    %901 = vmatpush1.msra.mxu0 %v900
    %902 = vmatprep.subr.mxu0 0.0
    %v903 = vand.u32 %v850, 4294901760
    %904 = vmatpush1.msra.mxu0 %v903
    %905 = vmatprep.subr.mxu0 0.0
    %v906 = vand.u32 %v851, 4294901760
    %907 = vmatpush1.msra.mxu0 %v906
    %908 = vmatprep.subr.mxu0 0.0
    %v909 = vand.u32 %v852, 4294901760
    %910 = vmatpush1.msra.mxu0 %v909
    %911 = vmatprep.subr.mxu0 0.0
    %v912 = vand.u32 %v853, 4294901760
    %913 = vmatpush1.msra.mxu0 %v912
    %914 = vmatprep.subr.mxu0 0.0
    %v915 = vand.u32 %v854, 4294901760
    %916 = vmatpush1.msra.mxu0 %v915
    %917 = vmatprep.subr.mxu0 0.0
    %v918 = vand.u32 %v855, 4294901760
    %919 = vmatpush1.msra.mxu0 %v918
    %920 = vmatprep.subr.mxu0 0.0
    %v921 = vand.u32 %v856, 4294901760
    %922 = vmatpush1.msra.mxu0 %v921
    %923 = vmatprep.subr.mxu0 0.0
    %v924 = vand.u32 %v857, 4294901760
    %925 = vmatpush1.msra.mxu0 %v924
    %926 = vmatprep.subr.mxu0 0.0
    %927 = vmatpush1.msra.mxu0 0.0
    %928 = vmatprep.subr.mxu0 0.0
    %929 = vmatpush1.msra.mxu0 0.0
    %930 = vmatprep.subr.mxu0 0.0
    %931 = vmatpush1.msra.mxu0 0.0
    %932 = vmatprep.subr.mxu0 0.0
    %933 = vmatpush1.msra.mxu0 0.0
    %934 = vmatprep.subr.mxu0 0.0
    %935 = vmatpush1.msra.mxu0 0.0
    %936 = vmatprep.subr.mxu0 0.0
    %937 = vmatpush1.msra.mxu0 0.0
    %938 = vmatprep.subr.mxu0 0.0
    %939 = vmatpush1.msra.mxu0 0.0
    %940 = vmatprep.subr.mxu0 0.0
    %941 = vmatpush1.msra.mxu0 0.0
    %942 = vmatprep.subr.mxu0 0.0
    %943 = vmatpush1.msra.mxu0 0.0
    %944 = vmatprep.subr.mxu0 0.0
    %945 = vmatpush1.msra.mxu0 0.0
    %946 = vmatprep.subr.mxu0 0.0
    %947 = vmatpush1.msra.mxu0 0.0
    %948 = vmatprep.subr.mxu0 0.0
    %949 = vmatpush1.msra.mxu0 0.0
    %950 = vmatprep.subr.mxu0 0.0
    %951 = vmatpush1.msra.mxu0 0.0
    %952 = vmatprep.subr.mxu0 0.0
    %953 = vmatpush1.msra.mxu0 0.0
    %954 = vmatprep.subr.mxu0 0.0
    %955 = vmatpush1.msra.mxu0 0.0
    %956 = vmatprep.subr.mxu0 0.0
    %957 = vmatpush1.msra.mxu0 0.0
    %958 = vmatprep.subr.mxu0 0.0
    %959 = vmatpush1.msra.mxu0 0.0
    %960 = vmatprep.subr.mxu0 0.0
    %961 = vmatpush1.msra.mxu0 0.0
    %962 = vmatprep.subr.mxu0 0.0
    %963 = vmatpush1.msra.mxu0 0.0
    %964 = vmatprep.subr.mxu0 0.0
    %965 = vmatpush1.msra.mxu0 0.0
    %966 = vmatprep.mubr.f32.mxu0 0.0
    %v967 = vand.u32 %v867, 4294901760
    %v968 = vsub.f32 %v867, %v967
    %v969 = vand.u32 %v968, 4294901760
    %v970 = vsub.f32 %v968, %v969
    %v971 = vand.u32 %v970, 4294901760
    %972 = vmatmul.mubr.f32.gmra.mrb[0].mxu0 %v971
    %v973 = vpop.f32.mrb[0].mxu0
    %v974 = vadd.f32 %v863, %v973
    %v975 = vpop.f32.mrb[0].mxu0
    %976 = vmatprep.mubr.f32.mxu0 0.0
    %v977 = vand.u32 %v870, 4294901760
    %v978 = vsub.f32 %v870, %v977
    %v979 = vand.u32 %v978, 4294901760
    %v980 = vsub.f32 %v978, %v979
    %v981 = vand.u32 %v980, 4294901760
    %982 = vmatmul.mubr.f32.gmra.mrb[0].mxu0 %v981
    %v983 = vpop.f32.mrb[0].mxu0
    %v984 = vadd.f32 %v863, %v983
    %v985 = vpop.f32.mrb[0].mxu0
    %986 = vmatprep.mubr.f32.mxu0 0.0
    %v987 = vand.u32 %v873, 4294901760
    %v988 = vsub.f32 %v873, %v987
    %v989 = vand.u32 %v988, 4294901760
    %v990 = vsub.f32 %v988, %v989
    %v991 = vand.u32 %v990, 4294901760
    %992 = vmatmul.mubr.f32.gmra.mrb[0].mxu0 %v991
    %v993 = vpop.f32.mrb[0].mxu0
    %v994 = vadd.f32 %v863, %v993
    %v995 = vpop.f32.mrb[0].mxu0
    %996 = vmatprep.mubr.f32.mxu0 0.0
    %v997 = vand.u32 %v876, 4294901760
    %v998 = vsub.f32 %v876, %v997
    %v999 = vand.u32 %v998, 4294901760
    %v1000 = vsub.f32 %v998, %v999
    %v1001 = vand.u32 %v1000, 4294901760
    %1002 = vmatmul.mubr.f32.gmra.mrb[0].mxu0 %v1001
    %v1003 = vpop.f32.mrb[0].mxu0
    %v1004 = vadd.f32 %v863, %v1003
    %v1005 = vpop.f32.mrb[0].mxu0
    %1006 = vmatprep.mubr.f32.mxu0 0.0
    %v1007 = vand.u32 %v879, 4294901760
    %v1008 = vsub.f32 %v879, %v1007
    %v1009 = vand.u32 %v1008, 4294901760
    %v1010 = vsub.f32 %v1008, %v1009
    %v1011 = vand.u32 %v1010, 4294901760
    %1012 = vmatmul.mubr.f32.gmra.mrb[0].mxu0 %v1011
    %v1013 = vpop.f32.mrb[0].mxu0
    %v1014 = vadd.f32 %v863, %v1013
    %v1015 = vpop.f32.mrb[0].mxu0
    %1016 = vmatprep.mubr.f32.mxu0 0.0
    %v1017 = vand.u32 %v882, 4294901760
    %v1018 = vsub.f32 %v882, %v1017
    %v1019 = vand.u32 %v1018, 4294901760
    %v1020 = vsub.f32 %v1018, %v1019
    %v1021 = vand.u32 %v1020, 4294901760
    %1022 = vmatmul.mubr.f32.gmra.mrb[0].mxu0 %v1021
    %v1023 = vpop.f32.mrb[0].mxu0
    %v1024 = vadd.f32 %v863, %v1023
    %v1025 = vpop.f32.mrb[0].mxu0
    %1026 = vmatprep.mubr.f32.mxu0 0.0
    %v1027 = vand.u32 %v885, 4294901760
    %v1028 = vsub.f32 %v885, %v1027
    %v1029 = vand.u32 %v1028, 4294901760
    %v1030 = vsub.f32 %v1028, %v1029
    %v1031 = vand.u32 %v1030, 4294901760
    %1032 = vmatmul.mubr.f32.gmra.mrb[0].mxu0 %v1031
    %v1033 = vpop.f32.mrb[0].mxu0
    %v1034 = vadd.f32 %v863, %v1033
    %v1035 = vpop.f32.mrb[0].mxu0
    %1036 = vmatprep.mubr.f32.mxu0 0.0
    %v1037 = vand.u32 %v888, 4294901760
    %v1038 = vsub.f32 %v888, %v1037
    %v1039 = vand.u32 %v1038, 4294901760
    %v1040 = vsub.f32 %v1038, %v1039
    %v1041 = vand.u32 %v1040, 4294901760
    %1042 = vmatmul.mubr.f32.gmra.mrb[0].mxu0 %v1041
    %v1043 = vpop.f32.mrb[0].mxu0
    %v1044 = vadd.f32 %v863, %v1043
    %v1045 = vpop.f32.mrb[0].mxu0
    %1046 = vdwg.mxu0
    %1047 = vmatprep.subr.mxu0 0.0
    %v1048 = vand.u32 %v846, 4294901760
    %v1049 = vsub.f32 %v846, %v1048
    %v1050 = vand.u32 %v1049, 4294901760
    %v1051 = vsub.f32 %v1049, %v1050
    %v1052 = vand.u32 %v1051, 4294901760
    %1053 = vmatpush1.msra.mxu0 %v1052
    %1054 = vmatprep.subr.mxu0 0.0
    %v1055 = vand.u32 %v847, 4294901760
    %v1056 = vsub.f32 %v847, %v1055
    %v1057 = vand.u32 %v1056, 4294901760
    %v1058 = vsub.f32 %v1056, %v1057
    %v1059 = vand.u32 %v1058, 4294901760
    %1060 = vmatpush1.msra.mxu0 %v1059
    %1061 = vmatprep.subr.mxu0 0.0
    %v1062 = vand.u32 %v848, 4294901760
    %v1063 = vsub.f32 %v848, %v1062
    %v1064 = vand.u32 %v1063, 4294901760
    %v1065 = vsub.f32 %v1063, %v1064
    %v1066 = vand.u32 %v1065, 4294901760
    %1067 = vmatpush1.msra.mxu0 %v1066
    %1068 = vmatprep.subr.mxu0 0.0
    %v1069 = vand.u32 %v849, 4294901760
    %v1070 = vsub.f32 %v849, %v1069
    %v1071 = vand.u32 %v1070, 4294901760
    %v1072 = vsub.f32 %v1070, %v1071
    %v1073 = vand.u32 %v1072, 4294901760
    %1074 = vmatpush1.msra.mxu0 %v1073
    %1075 = vmatprep.subr.mxu0 0.0
    %v1076 = vand.u32 %v850, 4294901760
    %v1077 = vsub.f32 %v850, %v1076
    %v1078 = vand.u32 %v1077, 4294901760
    %v1079 = vsub.f32 %v1077, %v1078
    %v1080 = vand.u32 %v1079, 4294901760
    %1081 = vmatpush1.msra.mxu0 %v1080
    %1082 = vmatprep.subr.mxu0 0.0
    %v1083 = vand.u32 %v851, 4294901760
    %v1084 = vsub.f32 %v851, %v1083
    %v1085 = vand.u32 %v1084, 4294901760
    %v1086 = vsub.f32 %v1084, %v1085
    %v1087 = vand.u32 %v1086, 4294901760
    %1088 = vmatpush1.msra.mxu0 %v1087
    %1089 = vmatprep.subr.mxu0 0.0
    %v1090 = vand.u32 %v852, 4294901760
    %v1091 = vsub.f32 %v852, %v1090
    %v1092 = vand.u32 %v1091, 4294901760
    %v1093 = vsub.f32 %v1091, %v1092
    %v1094 = vand.u32 %v1093, 4294901760
    %1095 = vmatpush1.msra.mxu0 %v1094
    %1096 = vmatprep.subr.mxu0 0.0
    %v1097 = vand.u32 %v853, 4294901760
    %v1098 = vsub.f32 %v853, %v1097
    %v1099 = vand.u32 %v1098, 4294901760
    %v1100 = vsub.f32 %v1098, %v1099
    %v1101 = vand.u32 %v1100, 4294901760
    %1102 = vmatpush1.msra.mxu0 %v1101
    %1103 = vmatprep.subr.mxu0 0.0
    %v1104 = vand.u32 %v854, 4294901760
    %v1105 = vsub.f32 %v854, %v1104
    %v1106 = vand.u32 %v1105, 4294901760
    %v1107 = vsub.f32 %v1105, %v1106
    %v1108 = vand.u32 %v1107, 4294901760
    %1109 = vmatpush1.msra.mxu0 %v1108
    %1110 = vmatprep.subr.mxu0 0.0
    %v1111 = vand.u32 %v855, 4294901760
    %v1112 = vsub.f32 %v855, %v1111
    %v1113 = vand.u32 %v1112, 4294901760
    %v1114 = vsub.f32 %v1112, %v1113
    %v1115 = vand.u32 %v1114, 4294901760
    %1116 = vmatpush1.msra.mxu0 %v1115
    %1117 = vmatprep.subr.mxu0 0.0
    %v1118 = vand.u32 %v856, 4294901760
    %v1119 = vsub.f32 %v856, %v1118
    %v1120 = vand.u32 %v1119, 4294901760
    %v1121 = vsub.f32 %v1119, %v1120
    %v1122 = vand.u32 %v1121, 4294901760
    %1123 = vmatpush1.msra.mxu0 %v1122
    %1124 = vmatprep.subr.mxu0 0.0
    %v1125 = vand.u32 %v857, 4294901760
    %v1126 = vsub.f32 %v857, %v1125
    %v1127 = vand.u32 %v1126, 4294901760
    %v1128 = vsub.f32 %v1126, %v1127
    %v1129 = vand.u32 %v1128, 4294901760
    %1130 = vmatpush1.msra.mxu0 %v1129
    %1131 = vmatprep.subr.mxu0 0.0
    %1132 = vmatpush1.msra.mxu0 0.0
    %1133 = vmatprep.subr.mxu0 0.0
    %1134 = vmatpush1.msra.mxu0 0.0
    %1135 = vmatprep.subr.mxu0 0.0
    %1136 = vmatpush1.msra.mxu0 0.0
    %1137 = vmatprep.subr.mxu0 0.0
    %1138 = vmatpush1.msra.mxu0 0.0
    %1139 = vmatprep.subr.mxu0 0.0
    %1140 = vmatpush1.msra.mxu0 0.0
    %1141 = vmatprep.subr.mxu0 0.0
    %1142 = vmatpush1.msra.mxu0 0.0
    %1143 = vmatprep.subr.mxu0 0.0
    %1144 = vmatpush1.msra.mxu0 0.0
    %1145 = vmatprep.subr.mxu0 0.0
    %1146 = vmatpush1.msra.mxu0 0.0
    %1147 = vmatprep.subr.mxu0 0.0
    %1148 = vmatpush1.msra.mxu0 0.0
    %1149 = vmatprep.subr.mxu0 0.0
    %1150 = vmatpush1.msra.mxu0 0.0
    %1151 = vmatprep.subr.mxu0 0.0
    %1152 = vmatpush1.msra.mxu0 0.0
    %1153 = vmatprep.subr.mxu0 0.0
    %1154 = vmatpush1.msra.mxu0 0.0
    %1155 = vmatprep.subr.mxu0 0.0
    %1156 = vmatpush1.msra.mxu0 0.0
    %1157 = vmatprep.subr.mxu0 0.0
    %1158 = vmatpush1.msra.mxu0 0.0
    %1159 = vmatprep.subr.mxu0 0.0
    %1160 = vmatpush1.msra.mxu0 0.0
    %1161 = vmatprep.subr.mxu0 0.0
    %1162 = vmatpush1.msra.mxu0 0.0
    %1163 = vmatprep.subr.mxu0 0.0
    %1164 = vmatpush1.msra.mxu0 0.0
    %1165 = vmatprep.subr.mxu0 0.0
    %1166 = vmatpush1.msra.mxu0 0.0
    %1167 = vmatprep.subr.mxu0 0.0
    %1168 = vmatpush1.msra.mxu0 0.0
    %1169 = vmatprep.subr.mxu0 0.0
    %1170 = vmatpush1.msra.mxu0 0.0
    %1171 = vmatprep.mubr.f32.mxu0 0.0
    %v1172 = vand.u32 %v867, 4294901760
    %1173 = vmatmul.mubr.f32.gmra.mrb[0].mxu0 %v1172
    %v1174 = vpop.f32.mrb[0].mxu0
    %v1175 = vadd.f32 %v974, %v1174
    %v1176 = vpop.f32.mrb[0].mxu0
    %1177 = vmatprep.mubr.f32.mxu0 0.0
    %v1178 = vand.u32 %v870, 4294901760
    %1179 = vmatmul.mubr.f32.gmra.mrb[0].mxu0 %v1178
    %v1180 = vpop.f32.mrb[0].mxu0
    %v1181 = vadd.f32 %v984, %v1180
    %v1182 = vpop.f32.mrb[0].mxu0
    %1183 = vmatprep.mubr.f32.mxu0 0.0
    %v1184 = vand.u32 %v873, 4294901760
    %1185 = vmatmul.mubr.f32.gmra.mrb[0].mxu0 %v1184
    %v1186 = vpop.f32.mrb[0].mxu0
    %v1187 = vadd.f32 %v994, %v1186
    %v1188 = vpop.f32.mrb[0].mxu0
    %1189 = vmatprep.mubr.f32.mxu0 0.0
    %v1190 = vand.u32 %v876, 4294901760
    %1191 = vmatmul.mubr.f32.gmra.mrb[0].mxu0 %v1190
    %v1192 = vpop.f32.mrb[0].mxu0
    %v1193 = vadd.f32 %v1004, %v1192
    %v1194 = vpop.f32.mrb[0].mxu0
    %1195 = vmatprep.mubr.f32.mxu0 0.0
    %v1196 = vand.u32 %v879, 4294901760
    %1197 = vmatmul.mubr.f32.gmra.mrb[0].mxu0 %v1196
    %v1198 = vpop.f32.mrb[0].mxu0
    %v1199 = vadd.f32 %v1014, %v1198
    %v1200 = vpop.f32.mrb[0].mxu0
    %1201 = vmatprep.mubr.f32.mxu0 0.0
    %v1202 = vand.u32 %v882, 4294901760
    %1203 = vmatmul.mubr.f32.gmra.mrb[0].mxu0 %v1202
    %v1204 = vpop.f32.mrb[0].mxu0
    %v1205 = vadd.f32 %v1024, %v1204
    %v1206 = vpop.f32.mrb[0].mxu0
    %1207 = vmatprep.mubr.f32.mxu0 0.0
    %v1208 = vand.u32 %v885, 4294901760
    %1209 = vmatmul.mubr.f32.gmra.mrb[0].mxu0 %v1208
    %v1210 = vpop.f32.mrb[0].mxu0
    %v1211 = vadd.f32 %v1034, %v1210
    %v1212 = vpop.f32.mrb[0].mxu0
    %1213 = vmatprep.mubr.f32.mxu0 0.0
    %v1214 = vand.u32 %v888, 4294901760
    %1215 = vmatmul.mubr.f32.gmra.mrb[0].mxu0 %v1214
    %v1216 = vpop.f32.mrb[0].mxu0
    %v1217 = vadd.f32 %v1044, %v1216
    %v1218 = vpop.f32.mrb[0].mxu0
    %1219 = vdwg.mxu0
    %1220 = vmatprep.subr.mxu0 0.0
    %v1221 = vand.u32 %v846, 4294901760
    %v1222 = vsub.f32 %v846, %v1221
    %1223 = vmatpush1.msra.mxu0 %v1222
    %1224 = vmatprep.subr.mxu0 0.0
    %v1225 = vand.u32 %v847, 4294901760
    %v1226 = vsub.f32 %v847, %v1225
    %1227 = vmatpush1.msra.mxu0 %v1226
    %1228 = vmatprep.subr.mxu0 0.0
    %v1229 = vand.u32 %v848, 4294901760
    %v1230 = vsub.f32 %v848, %v1229
    %1231 = vmatpush1.msra.mxu0 %v1230
    %1232 = vmatprep.subr.mxu0 0.0
    %v1233 = vand.u32 %v849, 4294901760
    %v1234 = vsub.f32 %v849, %v1233
    %1235 = vmatpush1.msra.mxu0 %v1234
    %1236 = vmatprep.subr.mxu0 0.0
    %v1237 = vand.u32 %v850, 4294901760
    %v1238 = vsub.f32 %v850, %v1237
    %1239 = vmatpush1.msra.mxu0 %v1238
    %1240 = vmatprep.subr.mxu0 0.0
    %v1241 = vand.u32 %v851, 4294901760
    %v1242 = vsub.f32 %v851, %v1241
    %1243 = vmatpush1.msra.mxu0 %v1242
    %1244 = vmatprep.subr.mxu0 0.0
    %v1245 = vand.u32 %v852, 4294901760
    %v1246 = vsub.f32 %v852, %v1245
    %1247 = vmatpush1.msra.mxu0 %v1246
    %1248 = vmatprep.subr.mxu0 0.0
    %v1249 = vand.u32 %v853, 4294901760
    %v1250 = vsub.f32 %v853, %v1249
    %1251 = vmatpush1.msra.mxu0 %v1250
    %1252 = vmatprep.subr.mxu0 0.0
    %v1253 = vand.u32 %v854, 4294901760
    %v1254 = vsub.f32 %v854, %v1253
    %1255 = vmatpush1.msra.mxu0 %v1254
    %1256 = vmatprep.subr.mxu0 0.0
    %v1257 = vand.u32 %v855, 4294901760
    %v1258 = vsub.f32 %v855, %v1257
    %1259 = vmatpush1.msra.mxu0 %v1258
    %1260 = vmatprep.subr.mxu0 0.0
    %v1261 = vand.u32 %v856, 4294901760
    %v1262 = vsub.f32 %v856, %v1261
    %1263 = vmatpush1.msra.mxu0 %v1262
    %1264 = vmatprep.subr.mxu0 0.0
    %v1265 = vand.u32 %v857, 4294901760
    %v1266 = vsub.f32 %v857, %v1265
    %1267 = vmatpush1.msra.mxu0 %v1266
    %1268 = vmatprep.subr.mxu0 0.0
    %1269 = vmatpush1.msra.mxu0 0.0
    %1270 = vmatprep.subr.mxu0 0.0
    %1271 = vmatpush1.msra.mxu0 0.0
    %1272 = vmatprep.subr.mxu0 0.0
    %1273 = vmatpush1.msra.mxu0 0.0
    %1274 = vmatprep.subr.mxu0 0.0
    %1275 = vmatpush1.msra.mxu0 0.0
    %1276 = vmatprep.subr.mxu0 0.0
    %1277 = vmatpush1.msra.mxu0 0.0
    %1278 = vmatprep.subr.mxu0 0.0
    %1279 = vmatpush1.msra.mxu0 0.0
    %1280 = vmatprep.subr.mxu0 0.0
    %1281 = vmatpush1.msra.mxu0 0.0
    %1282 = vmatprep.subr.mxu0 0.0
    %1283 = vmatpush1.msra.mxu0 0.0
    %1284 = vmatprep.subr.mxu0 0.0
    %1285 = vmatpush1.msra.mxu0 0.0
    %1286 = vmatprep.subr.mxu0 0.0
    %1287 = vmatpush1.msra.mxu0 0.0
    %1288 = vmatprep.subr.mxu0 0.0
    %1289 = vmatpush1.msra.mxu0 0.0
    %1290 = vmatprep.subr.mxu0 0.0
    %1291 = vmatpush1.msra.mxu0 0.0
    %1292 = vmatprep.subr.mxu0 0.0
    %1293 = vmatpush1.msra.mxu0 0.0
    %1294 = vmatprep.subr.mxu0 0.0
    %1295 = vmatpush1.msra.mxu0 0.0
    %1296 = vmatprep.subr.mxu0 0.0
    %1297 = vmatpush1.msra.mxu0 0.0
    %1298 = vmatprep.subr.mxu0 0.0
    %1299 = vmatpush1.msra.mxu0 0.0
    %1300 = vmatprep.subr.mxu0 0.0
    %1301 = vmatpush1.msra.mxu0 0.0
    %1302 = vmatprep.subr.mxu0 0.0
    %1303 = vmatpush1.msra.mxu0 0.0
    %1304 = vmatprep.subr.mxu0 0.0
    %1305 = vmatpush1.msra.mxu0 0.0
    %1306 = vmatprep.subr.mxu0 0.0
    %1307 = vmatpush1.msra.mxu0 0.0
    %1308 = vmatprep.mubr.f32.mxu0 0.0
    %v1309 = vand.u32 %v867, 4294901760
    %v1310 = vsub.f32 %v867, %v1309
    %1311 = vmatmul.mubr.f32.gmra.mrb[0].mxu0 %v1310
    %v1312 = vpop.f32.mrb[0].mxu0
    %v1313 = vadd.f32 %v1175, %v1312
    %v1314 = vpop.f32.mrb[0].mxu0
    %1315 = vmatprep.mubr.f32.mxu0 0.0
    %v1316 = vand.u32 %v870, 4294901760
    %v1317 = vsub.f32 %v870, %v1316
    %1318 = vmatmul.mubr.f32.gmra.mrb[0].mxu0 %v1317
    %v1319 = vpop.f32.mrb[0].mxu0
    %v1320 = vadd.f32 %v1181, %v1319
    %v1321 = vpop.f32.mrb[0].mxu0
    %1322 = vmatprep.mubr.f32.mxu0 0.0
    %v1323 = vand.u32 %v873, 4294901760
    %v1324 = vsub.f32 %v873, %v1323
    %1325 = vmatmul.mubr.f32.gmra.mrb[0].mxu0 %v1324
    %v1326 = vpop.f32.mrb[0].mxu0
    %v1327 = vadd.f32 %v1187, %v1326
    %v1328 = vpop.f32.mrb[0].mxu0
    %1329 = vmatprep.mubr.f32.mxu0 0.0
    %v1330 = vand.u32 %v876, 4294901760
    %v1331 = vsub.f32 %v876, %v1330
    %1332 = vmatmul.mubr.f32.gmra.mrb[0].mxu0 %v1331
    %v1333 = vpop.f32.mrb[0].mxu0
    %v1334 = vadd.f32 %v1193, %v1333
    %v1335 = vpop.f32.mrb[0].mxu0
    %1336 = vmatprep.mubr.f32.mxu0 0.0
    %v1337 = vand.u32 %v879, 4294901760
    %v1338 = vsub.f32 %v879, %v1337
    %1339 = vmatmul.mubr.f32.gmra.mrb[0].mxu0 %v1338
    %v1340 = vpop.f32.mrb[0].mxu0
    %v1341 = vadd.f32 %v1199, %v1340
    %v1342 = vpop.f32.mrb[0].mxu0
    %1343 = vmatprep.mubr.f32.mxu0 0.0
    %v1344 = vand.u32 %v882, 4294901760
    %v1345 = vsub.f32 %v882, %v1344
    %1346 = vmatmul.mubr.f32.gmra.mrb[0].mxu0 %v1345
    %v1347 = vpop.f32.mrb[0].mxu0
    %v1348 = vadd.f32 %v1205, %v1347
    %v1349 = vpop.f32.mrb[0].mxu0
    %1350 = vmatprep.mubr.f32.mxu0 0.0
    %v1351 = vand.u32 %v885, 4294901760
    %v1352 = vsub.f32 %v885, %v1351
    %1353 = vmatmul.mubr.f32.gmra.mrb[0].mxu0 %v1352
    %v1354 = vpop.f32.mrb[0].mxu0
    %v1355 = vadd.f32 %v1211, %v1354
    %v1356 = vpop.f32.mrb[0].mxu0
    %1357 = vmatprep.mubr.f32.mxu0 0.0
    %v1358 = vand.u32 %v888, 4294901760
    %v1359 = vsub.f32 %v888, %v1358
    %1360 = vmatmul.mubr.f32.gmra.mrb[0].mxu0 %v1359
    %v1361 = vpop.f32.mrb[0].mxu0
    %v1362 = vadd.f32 %v1217, %v1361
    %v1363 = vpop.f32.mrb[0].mxu0
    %1364 = vdwg.mxu0
    %1365 = vmatprep.subr.mxu0 0.0
    %v1366 = vand.u32 %v846, 4294901760
    %1367 = vmatpush1.msra.mxu0 %v1366
    %1368 = vmatprep.subr.mxu0 0.0
    %v1369 = vand.u32 %v847, 4294901760
    %1370 = vmatpush1.msra.mxu0 %v1369
    %1371 = vmatprep.subr.mxu0 0.0
    %v1372 = vand.u32 %v848, 4294901760
    %1373 = vmatpush1.msra.mxu0 %v1372
    %1374 = vmatprep.subr.mxu0 0.0
    %v1375 = vand.u32 %v849, 4294901760
    %1376 = vmatpush1.msra.mxu0 %v1375
    %1377 = vmatprep.subr.mxu0 0.0
    %v1378 = vand.u32 %v850, 4294901760
    %1379 = vmatpush1.msra.mxu0 %v1378
    %1380 = vmatprep.subr.mxu0 0.0
    %v1381 = vand.u32 %v851, 4294901760
    %1382 = vmatpush1.msra.mxu0 %v1381
    %1383 = vmatprep.subr.mxu0 0.0
    %v1384 = vand.u32 %v852, 4294901760
    %1385 = vmatpush1.msra.mxu0 %v1384
    %1386 = vmatprep.subr.mxu0 0.0
    %v1387 = vand.u32 %v853, 4294901760
    %1388 = vmatpush1.msra.mxu0 %v1387
    %1389 = vmatprep.subr.mxu0 0.0
    %v1390 = vand.u32 %v854, 4294901760
    %1391 = vmatpush1.msra.mxu0 %v1390
    %1392 = vmatprep.subr.mxu0 0.0
    %v1393 = vand.u32 %v855, 4294901760
    %1394 = vmatpush1.msra.mxu0 %v1393
    %1395 = vmatprep.subr.mxu0 0.0
    %v1396 = vand.u32 %v856, 4294901760
    %1397 = vmatpush1.msra.mxu0 %v1396
    %1398 = vmatprep.subr.mxu0 0.0
    %v1399 = vand.u32 %v857, 4294901760
    %1400 = vmatpush1.msra.mxu0 %v1399
    %1401 = vmatprep.subr.mxu0 0.0
    %1402 = vmatpush1.msra.mxu0 0.0
    %1403 = vmatprep.subr.mxu0 0.0
    %1404 = vmatpush1.msra.mxu0 0.0
    %1405 = vmatprep.subr.mxu0 0.0
    %1406 = vmatpush1.msra.mxu0 0.0
    %1407 = vmatprep.subr.mxu0 0.0
    %1408 = vmatpush1.msra.mxu0 0.0
    %1409 = vmatprep.subr.mxu0 0.0
    %1410 = vmatpush1.msra.mxu0 0.0
    %1411 = vmatprep.subr.mxu0 0.0
    %1412 = vmatpush1.msra.mxu0 0.0
    %1413 = vmatprep.subr.mxu0 0.0
    %1414 = vmatpush1.msra.mxu0 0.0
    %1415 = vmatprep.subr.mxu0 0.0
    %1416 = vmatpush1.msra.mxu0 0.0
    %1417 = vmatprep.subr.mxu0 0.0
    %1418 = vmatpush1.msra.mxu0 0.0
    %1419 = vmatprep.subr.mxu0 0.0
    %1420 = vmatpush1.msra.mxu0 0.0
    %1421 = vmatprep.subr.mxu0 0.0
    %1422 = vmatpush1.msra.mxu0 0.0
    %1423 = vmatprep.subr.mxu0 0.0
    %1424 = vmatpush1.msra.mxu0 0.0
    %1425 = vmatprep.subr.mxu0 0.0
    %1426 = vmatpush1.msra.mxu0 0.0
    %1427 = vmatprep.subr.mxu0 0.0
    %1428 = vmatpush1.msra.mxu0 0.0
    %1429 = vmatprep.subr.mxu0 0.0
    %1430 = vmatpush1.msra.mxu0 0.0
    %1431 = vmatprep.subr.mxu0 0.0
    %1432 = vmatpush1.msra.mxu0 0.0
    %1433 = vmatprep.subr.mxu0 0.0
    %1434 = vmatpush1.msra.mxu0 0.0
    %1435 = vmatprep.subr.mxu0 0.0
    %1436 = vmatpush1.msra.mxu0 0.0
    %1437 = vmatprep.subr.mxu0 0.0
    %1438 = vmatpush1.msra.mxu0 0.0
    %1439 = vmatprep.subr.mxu0 0.0
    %1440 = vmatpush1.msra.mxu0 0.0
    %1441 = vmatprep.mubr.f32.mxu0 0.0
    %v1442 = vand.u32 %v867, 4294901760
    %v1443 = vsub.f32 %v867, %v1442
    %v1444 = vand.u32 %v1443, 4294901760
    %1445 = vmatmul.mubr.f32.gmra.mrb[0].mxu0 %v1444
    %v1446 = vpop.f32.mrb[0].mxu0
    %v1447 = vadd.f32 %v1313, %v1446
    %v1448 = vpop.f32.mrb[0].mxu0
    %1449 = vmatprep.mubr.f32.mxu0 0.0
    %v1450 = vand.u32 %v870, 4294901760
    %v1451 = vsub.f32 %v870, %v1450
    %v1452 = vand.u32 %v1451, 4294901760
    %1453 = vmatmul.mubr.f32.gmra.mrb[0].mxu0 %v1452
    %v1454 = vpop.f32.mrb[0].mxu0
    %v1455 = vadd.f32 %v1320, %v1454
    %v1456 = vpop.f32.mrb[0].mxu0
    %1457 = vmatprep.mubr.f32.mxu0 0.0
    %v1458 = vand.u32 %v873, 4294901760
    %v1459 = vsub.f32 %v873, %v1458
    %v1460 = vand.u32 %v1459, 4294901760
    %1461 = vmatmul.mubr.f32.gmra.mrb[0].mxu0 %v1460
    %v1462 = vpop.f32.mrb[0].mxu0
    %v1463 = vadd.f32 %v1327, %v1462
    %v1464 = vpop.f32.mrb[0].mxu0
    %1465 = vmatprep.mubr.f32.mxu0 0.0
    %v1466 = vand.u32 %v876, 4294901760
    %v1467 = vsub.f32 %v876, %v1466
    %v1468 = vand.u32 %v1467, 4294901760
    %1469 = vmatmul.mubr.f32.gmra.mrb[0].mxu0 %v1468
    %v1470 = vpop.f32.mrb[0].mxu0
    %v1471 = vadd.f32 %v1334, %v1470
    %v1472 = vpop.f32.mrb[0].mxu0
    %1473 = vmatprep.mubr.f32.mxu0 0.0
    %v1474 = vand.u32 %v879, 4294901760
    %v1475 = vsub.f32 %v879, %v1474
    %v1476 = vand.u32 %v1475, 4294901760
    %1477 = vmatmul.mubr.f32.gmra.mrb[0].mxu0 %v1476
    %v1478 = vpop.f32.mrb[0].mxu0
    %v1479 = vadd.f32 %v1341, %v1478
    %v1480 = vpop.f32.mrb[0].mxu0
    %1481 = vmatprep.mubr.f32.mxu0 0.0
    %v1482 = vand.u32 %v882, 4294901760
    %v1483 = vsub.f32 %v882, %v1482
    %v1484 = vand.u32 %v1483, 4294901760
    %1485 = vmatmul.mubr.f32.gmra.mrb[0].mxu0 %v1484
    %v1486 = vpop.f32.mrb[0].mxu0
    %v1487 = vadd.f32 %v1348, %v1486
    %v1488 = vpop.f32.mrb[0].mxu0
    %1489 = vmatprep.mubr.f32.mxu0 0.0
    %v1490 = vand.u32 %v885, 4294901760
    %v1491 = vsub.f32 %v885, %v1490
    %v1492 = vand.u32 %v1491, 4294901760
    %1493 = vmatmul.mubr.f32.gmra.mrb[0].mxu0 %v1492
    %v1494 = vpop.f32.mrb[0].mxu0
    %v1495 = vadd.f32 %v1355, %v1494
    %v1496 = vpop.f32.mrb[0].mxu0
    %1497 = vmatprep.mubr.f32.mxu0 0.0
    %v1498 = vand.u32 %v888, 4294901760
    %v1499 = vsub.f32 %v888, %v1498
    %v1500 = vand.u32 %v1499, 4294901760
    %1501 = vmatmul.mubr.f32.gmra.mrb[0].mxu0 %v1500
    %v1502 = vpop.f32.mrb[0].mxu0
    %v1503 = vadd.f32 %v1362, %v1502
    %v1504 = vpop.f32.mrb[0].mxu0
    %1505 = vdwg.mxu0
    %1506 = vmatprep.subr.mxu0 0.0
    %v1507 = vand.u32 %v846, 4294901760
    %v1508 = vsub.f32 %v846, %v1507
    %v1509 = vand.u32 %v1508, 4294901760
    %1510 = vmatpush1.msra.mxu0 %v1509
    %1511 = vmatprep.subr.mxu0 0.0
    %v1512 = vand.u32 %v847, 4294901760
    %v1513 = vsub.f32 %v847, %v1512
    %v1514 = vand.u32 %v1513, 4294901760
    %1515 = vmatpush1.msra.mxu0 %v1514
    %1516 = vmatprep.subr.mxu0 0.0
    %v1517 = vand.u32 %v848, 4294901760
    %v1518 = vsub.f32 %v848, %v1517
    %v1519 = vand.u32 %v1518, 4294901760
    %1520 = vmatpush1.msra.mxu0 %v1519
    %1521 = vmatprep.subr.mxu0 0.0
    %v1522 = vand.u32 %v849, 4294901760
    %v1523 = vsub.f32 %v849, %v1522
    %v1524 = vand.u32 %v1523, 4294901760
    %1525 = vmatpush1.msra.mxu0 %v1524
    %1526 = vmatprep.subr.mxu0 0.0
    %v1527 = vand.u32 %v850, 4294901760
    %v1528 = vsub.f32 %v850, %v1527
    %v1529 = vand.u32 %v1528, 4294901760
    %1530 = vmatpush1.msra.mxu0 %v1529
    %1531 = vmatprep.subr.mxu0 0.0
    %v1532 = vand.u32 %v851, 4294901760
    %v1533 = vsub.f32 %v851, %v1532
    %v1534 = vand.u32 %v1533, 4294901760
    %1535 = vmatpush1.msra.mxu0 %v1534
    %1536 = vmatprep.subr.mxu0 0.0
    %v1537 = vand.u32 %v852, 4294901760
    %v1538 = vsub.f32 %v852, %v1537
    %v1539 = vand.u32 %v1538, 4294901760
    %1540 = vmatpush1.msra.mxu0 %v1539
    %1541 = vmatprep.subr.mxu0 0.0
    %v1542 = vand.u32 %v853, 4294901760
    %v1543 = vsub.f32 %v853, %v1542
    %v1544 = vand.u32 %v1543, 4294901760
    %1545 = vmatpush1.msra.mxu0 %v1544
    %1546 = vmatprep.subr.mxu0 0.0
    %v1547 = vand.u32 %v854, 4294901760
    %v1548 = vsub.f32 %v854, %v1547
    %v1549 = vand.u32 %v1548, 4294901760
    %1550 = vmatpush1.msra.mxu0 %v1549
    %1551 = vmatprep.subr.mxu0 0.0
    %v1552 = vand.u32 %v855, 4294901760
    %v1553 = vsub.f32 %v855, %v1552
    %v1554 = vand.u32 %v1553, 4294901760
    %1555 = vmatpush1.msra.mxu0 %v1554
    %1556 = vmatprep.subr.mxu0 0.0
    %v1557 = vand.u32 %v856, 4294901760
    %v1558 = vsub.f32 %v856, %v1557
    %v1559 = vand.u32 %v1558, 4294901760
    %1560 = vmatpush1.msra.mxu0 %v1559
    %1561 = vmatprep.subr.mxu0 0.0
    %v1562 = vand.u32 %v857, 4294901760
    %v1563 = vsub.f32 %v857, %v1562
    %v1564 = vand.u32 %v1563, 4294901760
    %1565 = vmatpush1.msra.mxu0 %v1564
    %1566 = vmatprep.subr.mxu0 0.0
    %1567 = vmatpush1.msra.mxu0 0.0
    %1568 = vmatprep.subr.mxu0 0.0
    %1569 = vmatpush1.msra.mxu0 0.0
    %1570 = vmatprep.subr.mxu0 0.0
    %1571 = vmatpush1.msra.mxu0 0.0
    %1572 = vmatprep.subr.mxu0 0.0
    %1573 = vmatpush1.msra.mxu0 0.0
    %1574 = vmatprep.subr.mxu0 0.0
    %1575 = vmatpush1.msra.mxu0 0.0
    %1576 = vmatprep.subr.mxu0 0.0
    %1577 = vmatpush1.msra.mxu0 0.0
    %1578 = vmatprep.subr.mxu0 0.0
    %1579 = vmatpush1.msra.mxu0 0.0
    %1580 = vmatprep.subr.mxu0 0.0
    %1581 = vmatpush1.msra.mxu0 0.0
    %1582 = vmatprep.subr.mxu0 0.0
    %1583 = vmatpush1.msra.mxu0 0.0
    %1584 = vmatprep.subr.mxu0 0.0
    %1585 = vmatpush1.msra.mxu0 0.0
    %1586 = vmatprep.subr.mxu0 0.0
    %1587 = vmatpush1.msra.mxu0 0.0
    %1588 = vmatprep.subr.mxu0 0.0
    %1589 = vmatpush1.msra.mxu0 0.0
    %1590 = vmatprep.subr.mxu0 0.0
    %1591 = vmatpush1.msra.mxu0 0.0
    %1592 = vmatprep.subr.mxu0 0.0
    %1593 = vmatpush1.msra.mxu0 0.0
    %1594 = vmatprep.subr.mxu0 0.0
    %1595 = vmatpush1.msra.mxu0 0.0
    %1596 = vmatprep.subr.mxu0 0.0
    %1597 = vmatpush1.msra.mxu0 0.0
    %1598 = vmatprep.subr.mxu0 0.0
    %1599 = vmatpush1.msra.mxu0 0.0
    %1600 = vmatprep.subr.mxu0 0.0
    %1601 = vmatpush1.msra.mxu0 0.0
    %1602 = vmatprep.subr.mxu0 0.0
    %1603 = vmatpush1.msra.mxu0 0.0
    %1604 = vmatprep.subr.mxu0 0.0
    %1605 = vmatpush1.msra.mxu0 0.0
    %1606 = vmatprep.mubr.f32.mxu0 0.0
    %v1607 = vand.u32 %v867, 4294901760
    %1608 = vmatmul.mubr.f32.gmra.mrb[0].mxu0 %v1607
    %v1609 = vpop.f32.mrb[0].mxu0
    %v1610 = vadd.f32 %v1447, %v1609
    %v1611 = vpop.f32.mrb[0].mxu0
    %1612 = vmatprep.mubr.f32.mxu0 0.0
    %v1613 = vand.u32 %v870, 4294901760
    %1614 = vmatmul.mubr.f32.gmra.mrb[0].mxu0 %v1613
    %v1615 = vpop.f32.mrb[0].mxu0
    %v1616 = vadd.f32 %v1455, %v1615
    %v1617 = vpop.f32.mrb[0].mxu0
    %1618 = vmatprep.mubr.f32.mxu0 0.0
    %v1619 = vand.u32 %v873, 4294901760
    %1620 = vmatmul.mubr.f32.gmra.mrb[0].mxu0 %v1619
    %v1621 = vpop.f32.mrb[0].mxu0
    %v1622 = vadd.f32 %v1463, %v1621
    %v1623 = vpop.f32.mrb[0].mxu0
    %1624 = vmatprep.mubr.f32.mxu0 0.0
    %v1625 = vand.u32 %v876, 4294901760
    %1626 = vmatmul.mubr.f32.gmra.mrb[0].mxu0 %v1625
    %v1627 = vpop.f32.mrb[0].mxu0
    %v1628 = vadd.f32 %v1471, %v1627
    %v1629 = vpop.f32.mrb[0].mxu0
    %1630 = vmatprep.mubr.f32.mxu0 0.0
    %v1631 = vand.u32 %v879, 4294901760
    %1632 = vmatmul.mubr.f32.gmra.mrb[0].mxu0 %v1631
    %v1633 = vpop.f32.mrb[0].mxu0
    %v1634 = vadd.f32 %v1479, %v1633
    %v1635 = vpop.f32.mrb[0].mxu0
    %1636 = vmatprep.mubr.f32.mxu0 0.0
    %v1637 = vand.u32 %v882, 4294901760
    %1638 = vmatmul.mubr.f32.gmra.mrb[0].mxu0 %v1637
    %v1639 = vpop.f32.mrb[0].mxu0
    %v1640 = vadd.f32 %v1487, %v1639
    %v1641 = vpop.f32.mrb[0].mxu0
    %1642 = vmatprep.mubr.f32.mxu0 0.0
    %v1643 = vand.u32 %v885, 4294901760
    %1644 = vmatmul.mubr.f32.gmra.mrb[0].mxu0 %v1643
    %v1645 = vpop.f32.mrb[0].mxu0
    %v1646 = vadd.f32 %v1495, %v1645
    %v1647 = vpop.f32.mrb[0].mxu0
    %1648 = vmatprep.mubr.f32.mxu0 0.0
    %v1649 = vand.u32 %v888, 4294901760
    %1650 = vmatmul.mubr.f32.gmra.mrb[0].mxu0 %v1649
    %v1651 = vpop.f32.mrb[0].mxu0
    %v1652 = vadd.f32 %v1503, %v1651
    %v1653 = vpop.f32.mrb[0].mxu0
    %1654 = vdwg.mxu0
    %1655 = vmatprep.subr.mxu0 0.0
    %v1656 = vand.u32 %v846, 4294901760
    %1657 = vmatpush1.msra.mxu0 %v1656
    %1658 = vmatprep.subr.mxu0 0.0
    %v1659 = vand.u32 %v847, 4294901760
    %1660 = vmatpush1.msra.mxu0 %v1659
    %1661 = vmatprep.subr.mxu0 0.0
    %v1662 = vand.u32 %v848, 4294901760
    %1663 = vmatpush1.msra.mxu0 %v1662
    %1664 = vmatprep.subr.mxu0 0.0
    %v1665 = vand.u32 %v849, 4294901760
    %1666 = vmatpush1.msra.mxu0 %v1665
    %1667 = vmatprep.subr.mxu0 0.0
    %v1668 = vand.u32 %v850, 4294901760
    %1669 = vmatpush1.msra.mxu0 %v1668
    %1670 = vmatprep.subr.mxu0 0.0
    %v1671 = vand.u32 %v851, 4294901760
    %1672 = vmatpush1.msra.mxu0 %v1671
    %1673 = vmatprep.subr.mxu0 0.0
    %v1674 = vand.u32 %v852, 4294901760
    %1675 = vmatpush1.msra.mxu0 %v1674
    %1676 = vmatprep.subr.mxu0 0.0
    %v1677 = vand.u32 %v853, 4294901760
    %1678 = vmatpush1.msra.mxu0 %v1677
    %1679 = vmatprep.subr.mxu0 0.0
    %v1680 = vand.u32 %v854, 4294901760
    %1681 = vmatpush1.msra.mxu0 %v1680
    %1682 = vmatprep.subr.mxu0 0.0
    %v1683 = vand.u32 %v855, 4294901760
    %1684 = vmatpush1.msra.mxu0 %v1683
    %1685 = vmatprep.subr.mxu0 0.0
    %v1686 = vand.u32 %v856, 4294901760
    %1687 = vmatpush1.msra.mxu0 %v1686
    %1688 = vmatprep.subr.mxu0 0.0
    %v1689 = vand.u32 %v857, 4294901760
    %1690 = vmatpush1.msra.mxu0 %v1689
    %1691 = vmatprep.subr.mxu0 0.0
    %1692 = vmatpush1.msra.mxu0 0.0
    %1693 = vmatprep.subr.mxu0 0.0
    %1694 = vmatpush1.msra.mxu0 0.0
    %1695 = vmatprep.subr.mxu0 0.0
    %1696 = vmatpush1.msra.mxu0 0.0
    %1697 = vmatprep.subr.mxu0 0.0
    %1698 = vmatpush1.msra.mxu0 0.0
    %1699 = vmatprep.subr.mxu0 0.0
    %1700 = vmatpush1.msra.mxu0 0.0
    %1701 = vmatprep.subr.mxu0 0.0
    %1702 = vmatpush1.msra.mxu0 0.0
    %1703 = vmatprep.subr.mxu0 0.0
    %1704 = vmatpush1.msra.mxu0 0.0
    %1705 = vmatprep.subr.mxu0 0.0
    %1706 = vmatpush1.msra.mxu0 0.0
    %1707 = vmatprep.subr.mxu0 0.0
    %1708 = vmatpush1.msra.mxu0 0.0
    %1709 = vmatprep.subr.mxu0 0.0
    %1710 = vmatpush1.msra.mxu0 0.0
    %1711 = vmatprep.subr.mxu0 0.0
    %1712 = vmatpush1.msra.mxu0 0.0
    %1713 = vmatprep.subr.mxu0 0.0
    %1714 = vmatpush1.msra.mxu0 0.0
    %1715 = vmatprep.subr.mxu0 0.0
    %1716 = vmatpush1.msra.mxu0 0.0
    %1717 = vmatprep.subr.mxu0 0.0
    %1718 = vmatpush1.msra.mxu0 0.0
    %1719 = vmatprep.subr.mxu0 0.0
    %1720 = vmatpush1.msra.mxu0 0.0
    %1721 = vmatprep.subr.mxu0 0.0
    %1722 = vmatpush1.msra.mxu0 0.0
    %1723 = vmatprep.subr.mxu0 0.0
    %1724 = vmatpush1.msra.mxu0 0.0
    %1725 = vmatprep.subr.mxu0 0.0
    %1726 = vmatpush1.msra.mxu0 0.0
    %1727 = vmatprep.subr.mxu0 0.0
    %1728 = vmatpush1.msra.mxu0 0.0
    %1729 = vmatprep.subr.mxu0 0.0
    %1730 = vmatpush1.msra.mxu0 0.0
    %1731 = vmatprep.mubr.f32.mxu0 0.0
    %v1732 = vand.u32 %v867, 4294901760
    %1733 = vmatmul.mubr.f32.gmra.mrb[0].mxu0 %v1732
    %v1734 = vpop.f32.mrb[0].mxu0
    %v1735 = vadd.f32 %v1610, %v1734
    %v1736 = vpop.f32.mrb[0].mxu0
    %1737 = vmatprep.mubr.f32.mxu0 0.0
    %v1738 = vand.u32 %v870, 4294901760
    %1739 = vmatmul.mubr.f32.gmra.mrb[0].mxu0 %v1738
    %v1740 = vpop.f32.mrb[0].mxu0
    %v1741 = vadd.f32 %v1616, %v1740
    %v1742 = vpop.f32.mrb[0].mxu0
    %1743 = vmatprep.mubr.f32.mxu0 0.0
    %v1744 = vand.u32 %v873, 4294901760
    %1745 = vmatmul.mubr.f32.gmra.mrb[0].mxu0 %v1744
    %v1746 = vpop.f32.mrb[0].mxu0
    %v1747 = vadd.f32 %v1622, %v1746
    %v1748 = vpop.f32.mrb[0].mxu0
    %1749 = vmatprep.mubr.f32.mxu0 0.0
    %v1750 = vand.u32 %v876, 4294901760
    %1751 = vmatmul.mubr.f32.gmra.mrb[0].mxu0 %v1750
    %v1752 = vpop.f32.mrb[0].mxu0
    %v1753 = vadd.f32 %v1628, %v1752
    %v1754 = vpop.f32.mrb[0].mxu0
    %1755 = vmatprep.mubr.f32.mxu0 0.0
    %v1756 = vand.u32 %v879, 4294901760
    %1757 = vmatmul.mubr.f32.gmra.mrb[0].mxu0 %v1756
    %v1758 = vpop.f32.mrb[0].mxu0
    %v1759 = vadd.f32 %v1634, %v1758
    %v1760 = vpop.f32.mrb[0].mxu0
    %1761 = vmatprep.mubr.f32.mxu0 0.0
    %v1762 = vand.u32 %v882, 4294901760
    %1763 = vmatmul.mubr.f32.gmra.mrb[0].mxu0 %v1762
    %v1764 = vpop.f32.mrb[0].mxu0
    %v1765 = vadd.f32 %v1640, %v1764
    %v1766 = vpop.f32.mrb[0].mxu0
    %1767 = vmatprep.mubr.f32.mxu0 0.0
    %v1768 = vand.u32 %v885, 4294901760
    %1769 = vmatmul.mubr.f32.gmra.mrb[0].mxu0 %v1768
    %v1770 = vpop.f32.mrb[0].mxu0
    %v1771 = vadd.f32 %v1646, %v1770
    %v1772 = vpop.f32.mrb[0].mxu0
    %1773 = vmatprep.mubr.f32.mxu0 0.0
    %v1774 = vand.u32 %v888, 4294901760
    %1775 = vmatmul.mubr.f32.gmra.mrb[0].mxu0 %v1774
    %v1776 = vpop.f32.mrb[0].mxu0
    %v1777 = vadd.f32 %v1652, %v1776
    %v1778 = vpop.f32.mrb[0].mxu0
    %1779 = vdwg.mxu0
    %v1780 = vlaneseq
    %v1781 = vand.u32 %v1780, 127
    %vm1782 = vcmp.lt.s32.totalorder %v1781, 4
    %v1783 = vsel %vm1782, 1, 0
    %v1784 = vcvt.s32.f32 %v1783
    %v1785 = vsub.f32 1.0, %v1784
    %v1786 = vld [vmem:[%s5] sm:$0xff]
    %v1787 = vld [vmem:[%s5 + $0x8] sm:$0xff]
    %v1788 = vld [vmem:[%s5 + $0x10] sm:$0xff]
    %v1789 = vld [vmem:[%s5 + $0x18] sm:$0xff]
    %v1790 = vld [vmem:[%s5 + $0x20] sm:$0xff]
    %v1791 = vld [vmem:[%s5 + $0x28] sm:$0xff]
    %v1792 = vld [vmem:[%s5 + $0x30] sm:$0xff]
    %v1793 = vld [vmem:[%s5 + $0x38] sm:$0xff]
    %1795 = vset.pattern.permute.xlu0 0
    %1796 = vperm.xlu0 %1795, %v1786
    %v1797 = vpop.permute.xlu0 %1796
    %1800 = vset.pattern.permute.xlu0 0
    %1801 = vperm.xlu0 %1800, %v1787
    %v1802 = vpop.permute.xlu0 %1801
    %1805 = vset.pattern.permute.xlu0 0
    %1806 = vperm.xlu0 %1805, %v1788
    %v1807 = vpop.permute.xlu0 %1806
    %1810 = vset.pattern.permute.xlu0 0
    %1811 = vperm.xlu0 %1810, %v1789
    %v1812 = vpop.permute.xlu0 %1811
    %1815 = vset.pattern.permute.xlu0 0
    %1816 = vperm.xlu0 %1815, %v1790
    %v1817 = vpop.permute.xlu0 %1816
    %1820 = vset.pattern.permute.xlu0 0
    %1821 = vperm.xlu0 %1820, %v1791
    %v1822 = vpop.permute.xlu0 %1821
    %1825 = vset.pattern.permute.xlu0 0
    %1826 = vperm.xlu0 %1825, %v1792
    %v1827 = vpop.permute.xlu0 %1826
    %1830 = vset.pattern.permute.xlu0 0
    %1831 = vperm.xlu0 %1830, %v1793
    %v1832 = vpop.permute.xlu0 %1831
    %v1834 = vmul.f32 %v1785, %v1797
    %v1835 = vmul.f32 %v1785, %v1802
    %v1836 = vmul.f32 %v1785, %v1807
    %v1837 = vmul.f32 %v1785, %v1812
    %v1838 = vmul.f32 %v1785, %v1817
    %v1839 = vmul.f32 %v1785, %v1822
    %v1840 = vmul.f32 %v1785, %v1827
    %v1841 = vmul.f32 %v1785, %v1832
    %v1842 = vadd.f32 %v1784, %v1834
    %v1843 = vadd.f32 %v1784, %v1835
    %v1844 = vadd.f32 %v1784, %v1836
    %v1845 = vadd.f32 %v1784, %v1837
    %v1846 = vadd.f32 %v1784, %v1838
    %v1847 = vadd.f32 %v1784, %v1839
    %v1848 = vadd.f32 %v1784, %v1840
    %v1849 = vadd.f32 %v1784, %v1841
    %v1850 = vmul.f32 %v1735, %v1842
    %v1851 = vmul.f32 %v1741, %v1843
    %v1852 = vmul.f32 %v1747, %v1844
    %v1853 = vmul.f32 %v1753, %v1845
    %v1854 = vmul.f32 %v1759, %v1846
    %v1855 = vmul.f32 %v1765, %v1847
    %v1856 = vmul.f32 %v1771, %v1848
    %v1857 = vmul.f32 %v1777, %v1849
    %v1858 = vld [vmem:[%s6] sm:$0xff]
    %v1859 = vld [vmem:[%s6 + $0x8] sm:$0xff]
    %v1860 = vld [vmem:[%s6 + $0x10] sm:$0xff]
    %v1861 = vld [vmem:[%s6 + $0x18] sm:$0xff]
    %v1862 = vld [vmem:[%s6 + $0x20] sm:$0xff]
    %v1863 = vld [vmem:[%s6 + $0x28] sm:$0xff]
    %v1864 = vld [vmem:[%s6 + $0x30] sm:$0xff]
    %v1865 = vld [vmem:[%s6 + $0x38] sm:$0xff]
    %v1866 = vld [vmem:[%s7] sm:$0xff]
    %1868 = vset.pattern.permute.xlu0 0
    %1869 = vperm.xlu0 %1868, %v1858
    %v1870 = vpop.permute.xlu0 %1869
    %1873 = vset.pattern.permute.xlu0 0
    %1874 = vperm.xlu0 %1873, %v1859
    %v1875 = vpop.permute.xlu0 %1874
    %1878 = vset.pattern.permute.xlu0 0
    %1879 = vperm.xlu0 %1878, %v1860
    %v1880 = vpop.permute.xlu0 %1879
    %1883 = vset.pattern.permute.xlu0 0
    %1884 = vperm.xlu0 %1883, %v1861
    %v1885 = vpop.permute.xlu0 %1884
    %1888 = vset.pattern.permute.xlu0 0
    %1889 = vperm.xlu0 %1888, %v1862
    %v1890 = vpop.permute.xlu0 %1889
    %1893 = vset.pattern.permute.xlu0 0
    %1894 = vperm.xlu0 %1893, %v1863
    %v1895 = vpop.permute.xlu0 %1894
    %1898 = vset.pattern.permute.xlu0 0
    %1899 = vperm.xlu0 %1898, %v1864
    %v1900 = vpop.permute.xlu0 %1899
    %1903 = vset.pattern.permute.xlu0 0
    %1904 = vperm.xlu0 %1903, %v1865
    %v1905 = vpop.permute.xlu0 %1904
    %v1907 = vmul.f32 %v1870, %v1866
    %v1908 = vmul.f32 %v1875, %v1866
    %v1909 = vmul.f32 %v1880, %v1866
    %v1910 = vmul.f32 %v1885, %v1866
    %v1911 = vmul.f32 %v1890, %v1866
    %v1912 = vmul.f32 %v1895, %v1866
    %v1913 = vmul.f32 %v1900, %v1866
    %v1914 = vmul.f32 %v1905, %v1866
    %v1915 = vadd.f32 %v1907, 0.0
    %v1916 = vadd.f32 %v1908, 0.0
    %v1917 = vadd.f32 %v1909, 0.0
    %v1918 = vadd.f32 %v1910, 0.0
    %v1919 = vadd.f32 %v1911, 0.0
    %v1920 = vadd.f32 %v1912, 0.0
    %v1921 = vadd.f32 %v1913, 0.0
    %v1922 = vadd.f32 %v1914, 0.0
    %s1923 = scalar_lea.vmem %s7, 8
    %v1924 = vld [vmem:[%s1923] sm:$0xff]
    %1925 = vset.pattern.permute.xlu0 1
    %1926 = vperm.xlu0 %1925, %v1858
    %v1927 = vpop.permute.xlu0 %1926
    %1929 = vset.pattern.permute.xlu0 1
    %1930 = vperm.xlu0 %1929, %v1859
    %v1931 = vpop.permute.xlu0 %1930
    %1933 = vset.pattern.permute.xlu0 1
    %1934 = vperm.xlu0 %1933, %v1860
    %v1935 = vpop.permute.xlu0 %1934
    %1937 = vset.pattern.permute.xlu0 1
    %1938 = vperm.xlu0 %1937, %v1861
    %v1939 = vpop.permute.xlu0 %1938
    %1941 = vset.pattern.permute.xlu0 1
    %1942 = vperm.xlu0 %1941, %v1862
    %v1943 = vpop.permute.xlu0 %1942
    %1945 = vset.pattern.permute.xlu0 1
    %1946 = vperm.xlu0 %1945, %v1863
    %v1947 = vpop.permute.xlu0 %1946
    %1949 = vset.pattern.permute.xlu0 1
    %1950 = vperm.xlu0 %1949, %v1864
    %v1951 = vpop.permute.xlu0 %1950
    %1953 = vset.pattern.permute.xlu0 1
    %1954 = vperm.xlu0 %1953, %v1865
    %v1955 = vpop.permute.xlu0 %1954
    %v1957 = vmul.f32 %v1927, %v1924
    %v1958 = vmul.f32 %v1931, %v1924
    %v1959 = vmul.f32 %v1935, %v1924
    %v1960 = vmul.f32 %v1939, %v1924
    %v1961 = vmul.f32 %v1943, %v1924
    %v1962 = vmul.f32 %v1947, %v1924
    %v1963 = vmul.f32 %v1951, %v1924
    %v1964 = vmul.f32 %v1955, %v1924
    %v1965 = vadd.f32 %v1915, %v1957
    %v1966 = vadd.f32 %v1916, %v1958
    %v1967 = vadd.f32 %v1917, %v1959
    %v1968 = vadd.f32 %v1918, %v1960
    %v1969 = vadd.f32 %v1919, %v1961
    %v1970 = vadd.f32 %v1920, %v1962
    %v1971 = vadd.f32 %v1921, %v1963
    %v1972 = vadd.f32 %v1922, %v1964
    %s1973 = scalar_lea.vmem %s7, 16
    %v1974 = vld [vmem:[%s1973] sm:$0xff]
    %1975 = vset.pattern.permute.xlu0 2
    %1976 = vperm.xlu0 %1975, %v1858
    %v1977 = vpop.permute.xlu0 %1976
    %1979 = vset.pattern.permute.xlu0 2
    %1980 = vperm.xlu0 %1979, %v1859
    %v1981 = vpop.permute.xlu0 %1980
    %1983 = vset.pattern.permute.xlu0 2
    %1984 = vperm.xlu0 %1983, %v1860
    %v1985 = vpop.permute.xlu0 %1984
    %1987 = vset.pattern.permute.xlu0 2
    %1988 = vperm.xlu0 %1987, %v1861
    %v1989 = vpop.permute.xlu0 %1988
    %1991 = vset.pattern.permute.xlu0 2
    %1992 = vperm.xlu0 %1991, %v1862
    %v1993 = vpop.permute.xlu0 %1992
    %1995 = vset.pattern.permute.xlu0 2
    %1996 = vperm.xlu0 %1995, %v1863
    %v1997 = vpop.permute.xlu0 %1996
    %1999 = vset.pattern.permute.xlu0 2
    %2000 = vperm.xlu0 %1999, %v1864
    %v2001 = vpop.permute.xlu0 %2000
    %2003 = vset.pattern.permute.xlu0 2
    %2004 = vperm.xlu0 %2003, %v1865
    %v2005 = vpop.permute.xlu0 %2004
    %v2007 = vmul.f32 %v1977, %v1974
    %v2008 = vmul.f32 %v1981, %v1974
    %v2009 = vmul.f32 %v1985, %v1974
    %v2010 = vmul.f32 %v1989, %v1974
    %v2011 = vmul.f32 %v1993, %v1974
    %v2012 = vmul.f32 %v1997, %v1974
    %v2013 = vmul.f32 %v2001, %v1974
    %v2014 = vmul.f32 %v2005, %v1974
    %v2015 = vadd.f32 %v1965, %v2007
    %v2016 = vadd.f32 %v1966, %v2008
    %v2017 = vadd.f32 %v1967, %v2009
    %v2018 = vadd.f32 %v1968, %v2010
    %v2019 = vadd.f32 %v1969, %v2011
    %v2020 = vadd.f32 %v1970, %v2012
    %v2021 = vadd.f32 %v1971, %v2013
    %v2022 = vadd.f32 %v1972, %v2014
    %s2023 = scalar_lea.vmem %s7, 24
    %v2024 = vld [vmem:[%s2023] sm:$0xff]
    %2025 = vset.pattern.permute.xlu0 3
    %2026 = vperm.xlu0 %2025, %v1858
    %v2027 = vpop.permute.xlu0 %2026
    %2029 = vset.pattern.permute.xlu0 3
    %2030 = vperm.xlu0 %2029, %v1859
    %v2031 = vpop.permute.xlu0 %2030
    %2033 = vset.pattern.permute.xlu0 3
    %2034 = vperm.xlu0 %2033, %v1860
    %v2035 = vpop.permute.xlu0 %2034
    %2037 = vset.pattern.permute.xlu0 3
    %2038 = vperm.xlu0 %2037, %v1861
    %v2039 = vpop.permute.xlu0 %2038
    %2041 = vset.pattern.permute.xlu0 3
    %2042 = vperm.xlu0 %2041, %v1862
    %v2043 = vpop.permute.xlu0 %2042
    %2045 = vset.pattern.permute.xlu0 3
    %2046 = vperm.xlu0 %2045, %v1863
    %v2047 = vpop.permute.xlu0 %2046
    %2049 = vset.pattern.permute.xlu0 3
    %2050 = vperm.xlu0 %2049, %v1864
    %v2051 = vpop.permute.xlu0 %2050
    %2053 = vset.pattern.permute.xlu0 3
    %2054 = vperm.xlu0 %2053, %v1865
    %v2055 = vpop.permute.xlu0 %2054
    %v2057 = vmul.f32 %v2027, %v2024
    %v2058 = vmul.f32 %v2031, %v2024
    %v2059 = vmul.f32 %v2035, %v2024
    %v2060 = vmul.f32 %v2039, %v2024
    %v2061 = vmul.f32 %v2043, %v2024
    %v2062 = vmul.f32 %v2047, %v2024
    %v2063 = vmul.f32 %v2051, %v2024
    %v2064 = vmul.f32 %v2055, %v2024
    %v2065 = vadd.f32 %v2015, %v2057
    %v2066 = vadd.f32 %v2016, %v2058
    %v2067 = vadd.f32 %v2017, %v2059
    %v2068 = vadd.f32 %v2018, %v2060
    %v2069 = vadd.f32 %v2019, %v2061
    %v2070 = vadd.f32 %v2020, %v2062
    %v2071 = vadd.f32 %v2021, %v2063
    %v2072 = vadd.f32 %v2022, %v2064
    %s2073 = scalar_lea.vmem %s7, 32
    %v2074 = vld [vmem:[%s2073] sm:$0xff]
    %2075 = vset.pattern.permute.xlu0 4
    %2076 = vperm.xlu0 %2075, %v1858
    %v2077 = vpop.permute.xlu0 %2076
    %2079 = vset.pattern.permute.xlu0 4
    %2080 = vperm.xlu0 %2079, %v1859
    %v2081 = vpop.permute.xlu0 %2080
    %2083 = vset.pattern.permute.xlu0 4
    %2084 = vperm.xlu0 %2083, %v1860
    %v2085 = vpop.permute.xlu0 %2084
    %2087 = vset.pattern.permute.xlu0 4
    %2088 = vperm.xlu0 %2087, %v1861
    %v2089 = vpop.permute.xlu0 %2088
    %2091 = vset.pattern.permute.xlu0 4
    %2092 = vperm.xlu0 %2091, %v1862
    %v2093 = vpop.permute.xlu0 %2092
    %2095 = vset.pattern.permute.xlu0 4
    %2096 = vperm.xlu0 %2095, %v1863
    %v2097 = vpop.permute.xlu0 %2096
    %2099 = vset.pattern.permute.xlu0 4
    %2100 = vperm.xlu0 %2099, %v1864
    %v2101 = vpop.permute.xlu0 %2100
    %2103 = vset.pattern.permute.xlu0 4
    %2104 = vperm.xlu0 %2103, %v1865
    %v2105 = vpop.permute.xlu0 %2104
    %v2107 = vmul.f32 %v2077, %v2074
    %v2108 = vmul.f32 %v2081, %v2074
    %v2109 = vmul.f32 %v2085, %v2074
    %v2110 = vmul.f32 %v2089, %v2074
    %v2111 = vmul.f32 %v2093, %v2074
    %v2112 = vmul.f32 %v2097, %v2074
    %v2113 = vmul.f32 %v2101, %v2074
    %v2114 = vmul.f32 %v2105, %v2074
    %v2115 = vadd.f32 %v2065, %v2107
    %v2116 = vadd.f32 %v2066, %v2108
    %v2117 = vadd.f32 %v2067, %v2109
    %v2118 = vadd.f32 %v2068, %v2110
    %v2119 = vadd.f32 %v2069, %v2111
    %v2120 = vadd.f32 %v2070, %v2112
    %v2121 = vadd.f32 %v2071, %v2113
    %v2122 = vadd.f32 %v2072, %v2114
    %s2123 = scalar_lea.vmem %s7, 40
    %v2124 = vld [vmem:[%s2123] sm:$0xff]
    %2125 = vset.pattern.permute.xlu0 5
    %2126 = vperm.xlu0 %2125, %v1858
    %v2127 = vpop.permute.xlu0 %2126
    %2129 = vset.pattern.permute.xlu0 5
    %2130 = vperm.xlu0 %2129, %v1859
    %v2131 = vpop.permute.xlu0 %2130
    %2133 = vset.pattern.permute.xlu0 5
    %2134 = vperm.xlu0 %2133, %v1860
    %v2135 = vpop.permute.xlu0 %2134
    %2137 = vset.pattern.permute.xlu0 5
    %2138 = vperm.xlu0 %2137, %v1861
    %v2139 = vpop.permute.xlu0 %2138
    %2141 = vset.pattern.permute.xlu0 5
    %2142 = vperm.xlu0 %2141, %v1862
    %v2143 = vpop.permute.xlu0 %2142
    %2145 = vset.pattern.permute.xlu0 5
    %2146 = vperm.xlu0 %2145, %v1863
    %v2147 = vpop.permute.xlu0 %2146
    %2149 = vset.pattern.permute.xlu0 5
    %2150 = vperm.xlu0 %2149, %v1864
    %v2151 = vpop.permute.xlu0 %2150
    %2153 = vset.pattern.permute.xlu0 5
    %2154 = vperm.xlu0 %2153, %v1865
    %v2155 = vpop.permute.xlu0 %2154
    %v2157 = vmul.f32 %v2127, %v2124
    %v2158 = vmul.f32 %v2131, %v2124
    %v2159 = vmul.f32 %v2135, %v2124
    %v2160 = vmul.f32 %v2139, %v2124
    %v2161 = vmul.f32 %v2143, %v2124
    %v2162 = vmul.f32 %v2147, %v2124
    %v2163 = vmul.f32 %v2151, %v2124
    %v2164 = vmul.f32 %v2155, %v2124
    %v2165 = vadd.f32 %v2115, %v2157
    %v2166 = vadd.f32 %v2116, %v2158
    %v2167 = vadd.f32 %v2117, %v2159
    %v2168 = vadd.f32 %v2118, %v2160
    %v2169 = vadd.f32 %v2119, %v2161
    %v2170 = vadd.f32 %v2120, %v2162
    %v2171 = vadd.f32 %v2121, %v2163
    %v2172 = vadd.f32 %v2122, %v2164
    %s2173 = scalar_lea.vmem %s7, 48
    %v2174 = vld [vmem:[%s2173] sm:$0xff]
    %2175 = vset.pattern.permute.xlu0 6
    %2176 = vperm.xlu0 %2175, %v1858
    %v2177 = vpop.permute.xlu0 %2176
    %2179 = vset.pattern.permute.xlu0 6
    %2180 = vperm.xlu0 %2179, %v1859
    %v2181 = vpop.permute.xlu0 %2180
    %2183 = vset.pattern.permute.xlu0 6
    %2184 = vperm.xlu0 %2183, %v1860
    %v2185 = vpop.permute.xlu0 %2184
    %2187 = vset.pattern.permute.xlu0 6
    %2188 = vperm.xlu0 %2187, %v1861
    %v2189 = vpop.permute.xlu0 %2188
    %2191 = vset.pattern.permute.xlu0 6
    %2192 = vperm.xlu0 %2191, %v1862
    %v2193 = vpop.permute.xlu0 %2192
    %2195 = vset.pattern.permute.xlu0 6
    %2196 = vperm.xlu0 %2195, %v1863
    %v2197 = vpop.permute.xlu0 %2196
    %2199 = vset.pattern.permute.xlu0 6
    %2200 = vperm.xlu0 %2199, %v1864
    %v2201 = vpop.permute.xlu0 %2200
    %2203 = vset.pattern.permute.xlu0 6
    %2204 = vperm.xlu0 %2203, %v1865
    %v2205 = vpop.permute.xlu0 %2204
    %v2207 = vmul.f32 %v2177, %v2174
    %v2208 = vmul.f32 %v2181, %v2174
    %v2209 = vmul.f32 %v2185, %v2174
    %v2210 = vmul.f32 %v2189, %v2174
    %v2211 = vmul.f32 %v2193, %v2174
    %v2212 = vmul.f32 %v2197, %v2174
    %v2213 = vmul.f32 %v2201, %v2174
    %v2214 = vmul.f32 %v2205, %v2174
    %v2215 = vadd.f32 %v2165, %v2207
    %v2216 = vadd.f32 %v2166, %v2208
    %v2217 = vadd.f32 %v2167, %v2209
    %v2218 = vadd.f32 %v2168, %v2210
    %v2219 = vadd.f32 %v2169, %v2211
    %v2220 = vadd.f32 %v2170, %v2212
    %v2221 = vadd.f32 %v2171, %v2213
    %v2222 = vadd.f32 %v2172, %v2214
    %s2223 = scalar_lea.vmem %s7, 56
    %v2224 = vld [vmem:[%s2223] sm:$0xff]
    %2225 = vset.pattern.permute.xlu0 7
    %2226 = vperm.xlu0 %2225, %v1858
    %v2227 = vpop.permute.xlu0 %2226
    %2229 = vset.pattern.permute.xlu0 7
    %2230 = vperm.xlu0 %2229, %v1859
    %v2231 = vpop.permute.xlu0 %2230
    %2233 = vset.pattern.permute.xlu0 7
    %2234 = vperm.xlu0 %2233, %v1860
    %v2235 = vpop.permute.xlu0 %2234
    %2237 = vset.pattern.permute.xlu0 7
    %2238 = vperm.xlu0 %2237, %v1861
    %v2239 = vpop.permute.xlu0 %2238
    %2241 = vset.pattern.permute.xlu0 7
    %2242 = vperm.xlu0 %2241, %v1862
    %v2243 = vpop.permute.xlu0 %2242
    %2245 = vset.pattern.permute.xlu0 7
    %2246 = vperm.xlu0 %2245, %v1863
    %v2247 = vpop.permute.xlu0 %2246
    %2249 = vset.pattern.permute.xlu0 7
    %2250 = vperm.xlu0 %2249, %v1864
    %v2251 = vpop.permute.xlu0 %2250
    %2253 = vset.pattern.permute.xlu0 7
    %2254 = vperm.xlu0 %2253, %v1865
    %v2255 = vpop.permute.xlu0 %2254
    %v2257 = vmul.f32 %v2227, %v2224
    %v2258 = vmul.f32 %v2231, %v2224
    %v2259 = vmul.f32 %v2235, %v2224
    %v2260 = vmul.f32 %v2239, %v2224
    %v2261 = vmul.f32 %v2243, %v2224
    %v2262 = vmul.f32 %v2247, %v2224
    %v2263 = vmul.f32 %v2251, %v2224
    %v2264 = vmul.f32 %v2255, %v2224
    %v2265 = vadd.f32 %v2215, %v2257
    %v2266 = vadd.f32 %v2216, %v2258
    %v2267 = vadd.f32 %v2217, %v2259
    %v2268 = vadd.f32 %v2218, %v2260
    %v2269 = vadd.f32 %v2219, %v2261
    %v2270 = vadd.f32 %v2220, %v2262
    %v2271 = vadd.f32 %v2221, %v2263
    %v2272 = vadd.f32 %v2222, %v2264
    %s2273 = scalar_lea.vmem %s7, 64
    %v2274 = vld [vmem:[%s2273] sm:$0xff]
    %2275 = vset.pattern.permute.xlu0 8
    %2276 = vperm.xlu0 %2275, %v1858
    %v2277 = vpop.permute.xlu0 %2276
    %2279 = vset.pattern.permute.xlu0 8
    %2280 = vperm.xlu0 %2279, %v1859
    %v2281 = vpop.permute.xlu0 %2280
    %2283 = vset.pattern.permute.xlu0 8
    %2284 = vperm.xlu0 %2283, %v1860
    %v2285 = vpop.permute.xlu0 %2284
    %2287 = vset.pattern.permute.xlu0 8
    %2288 = vperm.xlu0 %2287, %v1861
    %v2289 = vpop.permute.xlu0 %2288
    %2291 = vset.pattern.permute.xlu0 8
    %2292 = vperm.xlu0 %2291, %v1862
    %v2293 = vpop.permute.xlu0 %2292
    %2295 = vset.pattern.permute.xlu0 8
    %2296 = vperm.xlu0 %2295, %v1863
    %v2297 = vpop.permute.xlu0 %2296
    %2299 = vset.pattern.permute.xlu0 8
    %2300 = vperm.xlu0 %2299, %v1864
    %v2301 = vpop.permute.xlu0 %2300
    %2303 = vset.pattern.permute.xlu0 8
    %2304 = vperm.xlu0 %2303, %v1865
    %v2305 = vpop.permute.xlu0 %2304
    %v2307 = vmul.f32 %v2277, %v2274
    %v2308 = vmul.f32 %v2281, %v2274
    %v2309 = vmul.f32 %v2285, %v2274
    %v2310 = vmul.f32 %v2289, %v2274
    %v2311 = vmul.f32 %v2293, %v2274
    %v2312 = vmul.f32 %v2297, %v2274
    %v2313 = vmul.f32 %v2301, %v2274
    %v2314 = vmul.f32 %v2305, %v2274
    %v2315 = vadd.f32 %v2265, %v2307
    %v2316 = vadd.f32 %v2266, %v2308
    %v2317 = vadd.f32 %v2267, %v2309
    %v2318 = vadd.f32 %v2268, %v2310
    %v2319 = vadd.f32 %v2269, %v2311
    %v2320 = vadd.f32 %v2270, %v2312
    %v2321 = vadd.f32 %v2271, %v2313
    %v2322 = vadd.f32 %v2272, %v2314
    %s2323 = scalar_lea.vmem %s7, 72
    %v2324 = vld [vmem:[%s2323] sm:$0xff]
    %v2325 = vmul.f32 %v1927, %v2324
    %v2326 = vmul.f32 %v1931, %v2324
    %v2327 = vmul.f32 %v1935, %v2324
    %v2328 = vmul.f32 %v1939, %v2324
    %v2329 = vmul.f32 %v1943, %v2324
    %v2330 = vmul.f32 %v1947, %v2324
    %v2331 = vmul.f32 %v1951, %v2324
    %v2332 = vmul.f32 %v1955, %v2324
    %v2333 = vadd.f32 %v2315, %v2325
    %v2334 = vadd.f32 %v2316, %v2326
    %v2335 = vadd.f32 %v2317, %v2327
    %v2336 = vadd.f32 %v2318, %v2328
    %v2337 = vadd.f32 %v2319, %v2329
    %v2338 = vadd.f32 %v2320, %v2330
    %v2339 = vadd.f32 %v2321, %v2331
    %v2340 = vadd.f32 %v2322, %v2332
    %s2341 = scalar_lea.vmem %s7, 80
    %v2342 = vld [vmem:[%s2341] sm:$0xff]
    %v2343 = vmul.f32 %v1977, %v2342
    %v2344 = vmul.f32 %v1981, %v2342
    %v2345 = vmul.f32 %v1985, %v2342
    %v2346 = vmul.f32 %v1989, %v2342
    %v2347 = vmul.f32 %v1993, %v2342
    %v2348 = vmul.f32 %v1997, %v2342
    %v2349 = vmul.f32 %v2001, %v2342
    %v2350 = vmul.f32 %v2005, %v2342
    %v2351 = vadd.f32 %v2333, %v2343
    %v2352 = vadd.f32 %v2334, %v2344
    %v2353 = vadd.f32 %v2335, %v2345
    %v2354 = vadd.f32 %v2336, %v2346
    %v2355 = vadd.f32 %v2337, %v2347
    %v2356 = vadd.f32 %v2338, %v2348
    %v2357 = vadd.f32 %v2339, %v2349
    %v2358 = vadd.f32 %v2340, %v2350
    %s2359 = scalar_lea.vmem %s7, 88
    %v2360 = vld [vmem:[%s2359] sm:$0xff]
    %v2361 = vmul.f32 %v2027, %v2360
    %v2362 = vmul.f32 %v2031, %v2360
    %v2363 = vmul.f32 %v2035, %v2360
    %v2364 = vmul.f32 %v2039, %v2360
    %v2365 = vmul.f32 %v2043, %v2360
    %v2366 = vmul.f32 %v2047, %v2360
    %v2367 = vmul.f32 %v2051, %v2360
    %v2368 = vmul.f32 %v2055, %v2360
    %v2369 = vadd.f32 %v2351, %v2361
    %v2370 = vadd.f32 %v2352, %v2362
    %v2371 = vadd.f32 %v2353, %v2363
    %v2372 = vadd.f32 %v2354, %v2364
    %v2373 = vadd.f32 %v2355, %v2365
    %v2374 = vadd.f32 %v2356, %v2366
    %v2375 = vadd.f32 %v2357, %v2367
    %v2376 = vadd.f32 %v2358, %v2368
    %s2377 = scalar_lea.vmem %s7, 96
    %v2378 = vld [vmem:[%s2377] sm:$0xff]
    %v2379 = vmul.f32 %v1927, %v2378
    %v2380 = vmul.f32 %v1931, %v2378
    %v2381 = vmul.f32 %v1935, %v2378
    %v2382 = vmul.f32 %v1939, %v2378
    %v2383 = vmul.f32 %v1943, %v2378
    %v2384 = vmul.f32 %v1947, %v2378
    %v2385 = vmul.f32 %v1951, %v2378
    %v2386 = vmul.f32 %v1955, %v2378
    %v2387 = vadd.f32 %v2369, %v2379
    %v2388 = vadd.f32 %v2370, %v2380
    %v2389 = vadd.f32 %v2371, %v2381
    %v2390 = vadd.f32 %v2372, %v2382
    %v2391 = vadd.f32 %v2373, %v2383
    %v2392 = vadd.f32 %v2374, %v2384
    %v2393 = vadd.f32 %v2375, %v2385
    %v2394 = vadd.f32 %v2376, %v2386
    %s2395 = scalar_lea.vmem %s7, 104
    %v2396 = vld [vmem:[%s2395] sm:$0xff]
    %v2397 = vmul.f32 %v1977, %v2396
    %v2398 = vmul.f32 %v1981, %v2396
    %v2399 = vmul.f32 %v1985, %v2396
    %v2400 = vmul.f32 %v1989, %v2396
    %v2401 = vmul.f32 %v1993, %v2396
    %v2402 = vmul.f32 %v1997, %v2396
    %v2403 = vmul.f32 %v2001, %v2396
    %v2404 = vmul.f32 %v2005, %v2396
    %v2405 = vadd.f32 %v2387, %v2397
    %v2406 = vadd.f32 %v2388, %v2398
    %v2407 = vadd.f32 %v2389, %v2399
    %v2408 = vadd.f32 %v2390, %v2400
    %v2409 = vadd.f32 %v2391, %v2401
    %v2410 = vadd.f32 %v2392, %v2402
    %v2411 = vadd.f32 %v2393, %v2403
    %v2412 = vadd.f32 %v2394, %v2404
    %s2413 = scalar_lea.vmem %s7, 112
    %v2414 = vld [vmem:[%s2413] sm:$0xff]
    %v2415 = vmul.f32 %v2027, %v2414
    %v2416 = vmul.f32 %v2031, %v2414
    %v2417 = vmul.f32 %v2035, %v2414
    %v2418 = vmul.f32 %v2039, %v2414
    %v2419 = vmul.f32 %v2043, %v2414
    %v2420 = vmul.f32 %v2047, %v2414
    %v2421 = vmul.f32 %v2051, %v2414
    %v2422 = vmul.f32 %v2055, %v2414
    %v2423 = vadd.f32 %v2405, %v2415
    %v2424 = vadd.f32 %v2406, %v2416
    %v2425 = vadd.f32 %v2407, %v2417
    %v2426 = vadd.f32 %v2408, %v2418
    %v2427 = vadd.f32 %v2409, %v2419
    %v2428 = vadd.f32 %v2410, %v2420
    %v2429 = vadd.f32 %v2411, %v2421
    %v2430 = vadd.f32 %v2412, %v2422
    %s2431 = scalar_lea.vmem %s7, 120
    %v2432 = vld [vmem:[%s2431] sm:$0xff]
    %v2433 = vmul.f32 %v2077, %v2432
    %v2434 = vmul.f32 %v2081, %v2432
    %v2435 = vmul.f32 %v2085, %v2432
    %v2436 = vmul.f32 %v2089, %v2432
    %v2437 = vmul.f32 %v2093, %v2432
    %v2438 = vmul.f32 %v2097, %v2432
    %v2439 = vmul.f32 %v2101, %v2432
    %v2440 = vmul.f32 %v2105, %v2432
    %v2441 = vadd.f32 %v2423, %v2433
    %v2442 = vadd.f32 %v2424, %v2434
    %v2443 = vadd.f32 %v2425, %v2435
    %v2444 = vadd.f32 %v2426, %v2436
    %v2445 = vadd.f32 %v2427, %v2437
    %v2446 = vadd.f32 %v2428, %v2438
    %v2447 = vadd.f32 %v2429, %v2439
    %v2448 = vadd.f32 %v2430, %v2440
    %s2449 = scalar_lea.vmem %s7, 128
    %v2450 = vld [vmem:[%s2449] sm:$0xff]
    %v2451 = vmul.f32 %v2127, %v2450
    %v2452 = vmul.f32 %v2131, %v2450
    %v2453 = vmul.f32 %v2135, %v2450
    %v2454 = vmul.f32 %v2139, %v2450
    %v2455 = vmul.f32 %v2143, %v2450
    %v2456 = vmul.f32 %v2147, %v2450
    %v2457 = vmul.f32 %v2151, %v2450
    %v2458 = vmul.f32 %v2155, %v2450
    %v2459 = vadd.f32 %v2441, %v2451
    %v2460 = vadd.f32 %v2442, %v2452
    %v2461 = vadd.f32 %v2443, %v2453
    %v2462 = vadd.f32 %v2444, %v2454
    %v2463 = vadd.f32 %v2445, %v2455
    %v2464 = vadd.f32 %v2446, %v2456
    %v2465 = vadd.f32 %v2447, %v2457
    %v2466 = vadd.f32 %v2448, %v2458
    %s2467 = scalar_lea.vmem %s7, 136
    %v2468 = vld [vmem:[%s2467] sm:$0xff]
    %v2469 = vmul.f32 %v2177, %v2468
    %v2470 = vmul.f32 %v2181, %v2468
    %v2471 = vmul.f32 %v2185, %v2468
    %v2472 = vmul.f32 %v2189, %v2468
    %v2473 = vmul.f32 %v2193, %v2468
    %v2474 = vmul.f32 %v2197, %v2468
    %v2475 = vmul.f32 %v2201, %v2468
    %v2476 = vmul.f32 %v2205, %v2468
    %v2477 = vadd.f32 %v2459, %v2469
    %v2478 = vadd.f32 %v2460, %v2470
    %v2479 = vadd.f32 %v2461, %v2471
    %v2480 = vadd.f32 %v2462, %v2472
    %v2481 = vadd.f32 %v2463, %v2473
    %v2482 = vadd.f32 %v2464, %v2474
    %v2483 = vadd.f32 %v2465, %v2475
    %v2484 = vadd.f32 %v2466, %v2476
    %s2485 = scalar_lea.vmem %s7, 144
    %v2486 = vld [vmem:[%s2485] sm:$0xff]
    %v2487 = vmul.f32 %v2227, %v2486
    %v2488 = vmul.f32 %v2231, %v2486
    %v2489 = vmul.f32 %v2235, %v2486
    %v2490 = vmul.f32 %v2239, %v2486
    %v2491 = vmul.f32 %v2243, %v2486
    %v2492 = vmul.f32 %v2247, %v2486
    %v2493 = vmul.f32 %v2251, %v2486
    %v2494 = vmul.f32 %v2255, %v2486
    %v2495 = vadd.f32 %v2477, %v2487
    %v2496 = vadd.f32 %v2478, %v2488
    %v2497 = vadd.f32 %v2479, %v2489
    %v2498 = vadd.f32 %v2480, %v2490
    %v2499 = vadd.f32 %v2481, %v2491
    %v2500 = vadd.f32 %v2482, %v2492
    %v2501 = vadd.f32 %v2483, %v2493
    %v2502 = vadd.f32 %v2484, %v2494
    %s2503 = scalar_lea.vmem %s7, 152
    %v2504 = vld [vmem:[%s2503] sm:$0xff]
    %v2505 = vmul.f32 %v2277, %v2504
    %v2506 = vmul.f32 %v2281, %v2504
    %v2507 = vmul.f32 %v2285, %v2504
    %v2508 = vmul.f32 %v2289, %v2504
    %v2509 = vmul.f32 %v2293, %v2504
    %v2510 = vmul.f32 %v2297, %v2504
    %v2511 = vmul.f32 %v2301, %v2504
    %v2512 = vmul.f32 %v2305, %v2504
    %v2513 = vadd.f32 %v2495, %v2505
    %v2514 = vadd.f32 %v2496, %v2506
    %v2515 = vadd.f32 %v2497, %v2507
    %v2516 = vadd.f32 %v2498, %v2508
    %v2517 = vadd.f32 %v2499, %v2509
    %v2518 = vadd.f32 %v2500, %v2510
    %v2519 = vadd.f32 %v2501, %v2511
    %v2520 = vadd.f32 %v2502, %v2512
    %v2521 = vld [vmem:[%s8] sm:$0xff]
    %v2522 = vld [vmem:[%s8 + $0x8] sm:$0xff]
    %v2523 = vld [vmem:[%s8 + $0x10] sm:$0xff]
    %vm2524 = vcmask 195584
    %v2526 = vsel %vm2524, %v1850, 0
    %v2529 = vsel %vm2524, %v1851, 0
    %v2532 = vsel %vm2524, %v1852, 0
    %v2535 = vsel %vm2524, %v1853, 0
    %v2538 = vsel %vm2524, %v1854, 0
    %v2541 = vsel %vm2524, %v1855, 0
    %v2544 = vsel %vm2524, %v1856, 0
    %v2547 = vsel %vm2524, %v1857, 0
    %2549 = vmatprep.subr.mxu0 0.0
    %v2550 = vand.u32 %v2521, 4294901760
    %2551 = vmatpush1.msra.mxu0 %v2550
    %2552 = vmatprep.subr.mxu0 0.0
    %v2553 = vand.u32 %v2522, 4294901760
    %2554 = vmatpush1.msra.mxu0 %v2553
    %2555 = vmatprep.subr.mxu0 0.0
    %v2556 = vand.u32 %v2523, 4294901760
    %2557 = vmatpush1.msra.mxu0 %v2556
    %2558 = vmatprep.subr.mxu0 0.0
    %2559 = vmatpush1.msra.mxu0 0.0
    %2560 = vmatprep.subr.mxu0 0.0
    %2561 = vmatpush1.msra.mxu0 0.0
    %2562 = vmatprep.subr.mxu0 0.0
    %2563 = vmatpush1.msra.mxu0 0.0
    %2564 = vmatprep.subr.mxu0 0.0
    %2565 = vmatpush1.msra.mxu0 0.0
    %2566 = vmatprep.subr.mxu0 0.0
    %2567 = vmatpush1.msra.mxu0 0.0
    %2568 = vmatprep.subr.mxu0 0.0
    %2569 = vmatpush1.msra.mxu0 0.0
    %2570 = vmatprep.subr.mxu0 0.0
    %2571 = vmatpush1.msra.mxu0 0.0
    %2572 = vmatprep.subr.mxu0 0.0
    %2573 = vmatpush1.msra.mxu0 0.0
    %2574 = vmatprep.subr.mxu0 0.0
    %2575 = vmatpush1.msra.mxu0 0.0
    %2576 = vmatprep.subr.mxu0 0.0
    %2577 = vmatpush1.msra.mxu0 0.0
    %2578 = vmatprep.subr.mxu0 0.0
    %2579 = vmatpush1.msra.mxu0 0.0
    %2580 = vmatprep.subr.mxu0 0.0
    %2581 = vmatpush1.msra.mxu0 0.0
    %2582 = vmatprep.subr.mxu0 0.0
    %2583 = vmatpush1.msra.mxu0 0.0
    %2584 = vmatprep.subr.mxu0 0.0
    %2585 = vmatpush1.msra.mxu0 0.0
    %2586 = vmatprep.subr.mxu0 0.0
    %2587 = vmatpush1.msra.mxu0 0.0
    %2588 = vmatprep.subr.mxu0 0.0
    %2589 = vmatpush1.msra.mxu0 0.0
    %2590 = vmatprep.subr.mxu0 0.0
    %2591 = vmatpush1.msra.mxu0 0.0
    %2592 = vmatprep.subr.mxu0 0.0
    %2593 = vmatpush1.msra.mxu0 0.0
    %2594 = vmatprep.subr.mxu0 0.0
    %2595 = vmatpush1.msra.mxu0 0.0
    %2596 = vmatprep.subr.mxu0 0.0
    %2597 = vmatpush1.msra.mxu0 0.0
    %2598 = vmatprep.subr.mxu0 0.0
    %2599 = vmatpush1.msra.mxu0 0.0
    %2600 = vmatprep.subr.mxu0 0.0
    %2601 = vmatpush1.msra.mxu0 0.0
    %2602 = vmatprep.subr.mxu0 0.0
    %2603 = vmatpush1.msra.mxu0 0.0
    %2604 = vmatprep.subr.mxu0 0.0
    %2605 = vmatpush1.msra.mxu0 0.0
    %2606 = vmatprep.subr.mxu0 0.0
    %2607 = vmatpush1.msra.mxu0 0.0
    %2608 = vmatprep.subr.mxu0 0.0
    %2609 = vmatpush1.msra.mxu0 0.0
    %2610 = vmatprep.subr.mxu0 0.0
    %2611 = vmatpush1.msra.mxu0 0.0
    %2612 = vmatprep.subr.mxu0 0.0
    %2613 = vmatpush1.msra.mxu0 0.0
    %2614 = vmatprep.subr.mxu0 0.0
    %2615 = vmatpush1.msra.mxu0 0.0
    %2616 = vmatprep.mubr.f32.mxu0 0.0
    %v2617 = vand.u32 %v2526, 4294901760
    %v2618 = vsub.f32 %v2526, %v2617
    %v2619 = vand.u32 %v2618, 4294901760
    %v2620 = vsub.f32 %v2618, %v2619
    %v2621 = vand.u32 %v2620, 4294901760
    %2622 = vmatmul.mubr.f32.gmra.mrb[0].mxu0 %v2621
    %v2623 = vpop.f32.mrb[0].mxu0
    %v2624 = vadd.f32 0.0, %v2623
    %v2625 = vpop.f32.mrb[0].mxu0
    %2626 = vmatprep.mubr.f32.mxu0 0.0
    %v2627 = vand.u32 %v2529, 4294901760
    %v2628 = vsub.f32 %v2529, %v2627
    %v2629 = vand.u32 %v2628, 4294901760
    %v2630 = vsub.f32 %v2628, %v2629
    %v2631 = vand.u32 %v2630, 4294901760
    %2632 = vmatmul.mubr.f32.gmra.mrb[0].mxu0 %v2631
    %v2633 = vpop.f32.mrb[0].mxu0
    %v2634 = vadd.f32 0.0, %v2633
    %v2635 = vpop.f32.mrb[0].mxu0
    %2636 = vmatprep.mubr.f32.mxu0 0.0
    %v2637 = vand.u32 %v2532, 4294901760
    %v2638 = vsub.f32 %v2532, %v2637
    %v2639 = vand.u32 %v2638, 4294901760
    %v2640 = vsub.f32 %v2638, %v2639
    %v2641 = vand.u32 %v2640, 4294901760
    %2642 = vmatmul.mubr.f32.gmra.mrb[0].mxu0 %v2641
    %v2643 = vpop.f32.mrb[0].mxu0
    %v2644 = vadd.f32 0.0, %v2643
    %v2645 = vpop.f32.mrb[0].mxu0
    %2646 = vmatprep.mubr.f32.mxu0 0.0
    %v2647 = vand.u32 %v2535, 4294901760
    %v2648 = vsub.f32 %v2535, %v2647
    %v2649 = vand.u32 %v2648, 4294901760
    %v2650 = vsub.f32 %v2648, %v2649
    %v2651 = vand.u32 %v2650, 4294901760
    %2652 = vmatmul.mubr.f32.gmra.mrb[0].mxu0 %v2651
    %v2653 = vpop.f32.mrb[0].mxu0
    %v2654 = vadd.f32 0.0, %v2653
    %v2655 = vpop.f32.mrb[0].mxu0
    %2656 = vmatprep.mubr.f32.mxu0 0.0
    %v2657 = vand.u32 %v2538, 4294901760
    %v2658 = vsub.f32 %v2538, %v2657
    %v2659 = vand.u32 %v2658, 4294901760
    %v2660 = vsub.f32 %v2658, %v2659
    %v2661 = vand.u32 %v2660, 4294901760
    %2662 = vmatmul.mubr.f32.gmra.mrb[0].mxu0 %v2661
    %v2663 = vpop.f32.mrb[0].mxu0
    %v2664 = vadd.f32 0.0, %v2663
    %v2665 = vpop.f32.mrb[0].mxu0
    %2666 = vmatprep.mubr.f32.mxu0 0.0
    %v2667 = vand.u32 %v2541, 4294901760
    %v2668 = vsub.f32 %v2541, %v2667
    %v2669 = vand.u32 %v2668, 4294901760
    %v2670 = vsub.f32 %v2668, %v2669
    %v2671 = vand.u32 %v2670, 4294901760
    %2672 = vmatmul.mubr.f32.gmra.mrb[0].mxu0 %v2671
    %v2673 = vpop.f32.mrb[0].mxu0
    %v2674 = vadd.f32 0.0, %v2673
    %v2675 = vpop.f32.mrb[0].mxu0
    %2676 = vmatprep.mubr.f32.mxu0 0.0
    %v2677 = vand.u32 %v2544, 4294901760
    %v2678 = vsub.f32 %v2544, %v2677
    %v2679 = vand.u32 %v2678, 4294901760
    %v2680 = vsub.f32 %v2678, %v2679
    %v2681 = vand.u32 %v2680, 4294901760
    %2682 = vmatmul.mubr.f32.gmra.mrb[0].mxu0 %v2681
    %v2683 = vpop.f32.mrb[0].mxu0
    %v2684 = vadd.f32 0.0, %v2683
    %v2685 = vpop.f32.mrb[0].mxu0
    %2686 = vmatprep.mubr.f32.mxu0 0.0
    %v2687 = vand.u32 %v2547, 4294901760
    %v2688 = vsub.f32 %v2547, %v2687
    %v2689 = vand.u32 %v2688, 4294901760
    %v2690 = vsub.f32 %v2688, %v2689
    %v2691 = vand.u32 %v2690, 4294901760
    %2692 = vmatmul.mubr.f32.gmra.mrb[0].mxu0 %v2691
    %v2693 = vpop.f32.mrb[0].mxu0
    %v2694 = vadd.f32 0.0, %v2693
    %v2695 = vpop.f32.mrb[0].mxu0
    %2696 = vdwg.mxu0
    %2697 = vmatprep.subr.mxu0 0.0
    %v2698 = vand.u32 %v2521, 4294901760
    %v2699 = vsub.f32 %v2521, %v2698
    %v2700 = vand.u32 %v2699, 4294901760
    %v2701 = vsub.f32 %v2699, %v2700
    %v2702 = vand.u32 %v2701, 4294901760
    %2703 = vmatpush1.msra.mxu0 %v2702
    %2704 = vmatprep.subr.mxu0 0.0
    %v2705 = vand.u32 %v2522, 4294901760
    %v2706 = vsub.f32 %v2522, %v2705
    %v2707 = vand.u32 %v2706, 4294901760
    %v2708 = vsub.f32 %v2706, %v2707
    %v2709 = vand.u32 %v2708, 4294901760
    %2710 = vmatpush1.msra.mxu0 %v2709
    %2711 = vmatprep.subr.mxu0 0.0
    %v2712 = vand.u32 %v2523, 4294901760
    %v2713 = vsub.f32 %v2523, %v2712
    %v2714 = vand.u32 %v2713, 4294901760
    %v2715 = vsub.f32 %v2713, %v2714
    %v2716 = vand.u32 %v2715, 4294901760
    %2717 = vmatpush1.msra.mxu0 %v2716
    %2718 = vmatprep.subr.mxu0 0.0
    %2719 = vmatpush1.msra.mxu0 0.0
    %2720 = vmatprep.subr.mxu0 0.0
    %2721 = vmatpush1.msra.mxu0 0.0
    %2722 = vmatprep.subr.mxu0 0.0
    %2723 = vmatpush1.msra.mxu0 0.0
    %2724 = vmatprep.subr.mxu0 0.0
    %2725 = vmatpush1.msra.mxu0 0.0
    %2726 = vmatprep.subr.mxu0 0.0
    %2727 = vmatpush1.msra.mxu0 0.0
    %2728 = vmatprep.subr.mxu0 0.0
    %2729 = vmatpush1.msra.mxu0 0.0
    %2730 = vmatprep.subr.mxu0 0.0
    %2731 = vmatpush1.msra.mxu0 0.0
    %2732 = vmatprep.subr.mxu0 0.0
    %2733 = vmatpush1.msra.mxu0 0.0
    %2734 = vmatprep.subr.mxu0 0.0
    %2735 = vmatpush1.msra.mxu0 0.0
    %2736 = vmatprep.subr.mxu0 0.0
    %2737 = vmatpush1.msra.mxu0 0.0
    %2738 = vmatprep.subr.mxu0 0.0
    %2739 = vmatpush1.msra.mxu0 0.0
    %2740 = vmatprep.subr.mxu0 0.0
    %2741 = vmatpush1.msra.mxu0 0.0
    %2742 = vmatprep.subr.mxu0 0.0
    %2743 = vmatpush1.msra.mxu0 0.0
    %2744 = vmatprep.subr.mxu0 0.0
    %2745 = vmatpush1.msra.mxu0 0.0
    %2746 = vmatprep.subr.mxu0 0.0
    %2747 = vmatpush1.msra.mxu0 0.0
    %2748 = vmatprep.subr.mxu0 0.0
    %2749 = vmatpush1.msra.mxu0 0.0
    %2750 = vmatprep.subr.mxu0 0.0
    %2751 = vmatpush1.msra.mxu0 0.0
    %2752 = vmatprep.subr.mxu0 0.0
    %2753 = vmatpush1.msra.mxu0 0.0
    %2754 = vmatprep.subr.mxu0 0.0
    %2755 = vmatpush1.msra.mxu0 0.0
    %2756 = vmatprep.subr.mxu0 0.0
    %2757 = vmatpush1.msra.mxu0 0.0
    %2758 = vmatprep.subr.mxu0 0.0
    %2759 = vmatpush1.msra.mxu0 0.0
    %2760 = vmatprep.subr.mxu0 0.0
    %2761 = vmatpush1.msra.mxu0 0.0
    %2762 = vmatprep.subr.mxu0 0.0
    %2763 = vmatpush1.msra.mxu0 0.0
    %2764 = vmatprep.subr.mxu0 0.0
    %2765 = vmatpush1.msra.mxu0 0.0
    %2766 = vmatprep.subr.mxu0 0.0
    %2767 = vmatpush1.msra.mxu0 0.0
    %2768 = vmatprep.subr.mxu0 0.0
    %2769 = vmatpush1.msra.mxu0 0.0
    %2770 = vmatprep.subr.mxu0 0.0
    %2771 = vmatpush1.msra.mxu0 0.0
    %2772 = vmatprep.subr.mxu0 0.0
    %2773 = vmatpush1.msra.mxu0 0.0
    %2774 = vmatprep.subr.mxu0 0.0
    %2775 = vmatpush1.msra.mxu0 0.0
    %2776 = vmatprep.mubr.f32.mxu0 0.0
    %v2777 = vand.u32 %v2526, 4294901760
    %2778 = vmatmul.mubr.f32.gmra.mrb[0].mxu0 %v2777
    %v2779 = vpop.f32.mrb[0].mxu0
    %v2780 = vadd.f32 %v2624, %v2779
    %v2781 = vpop.f32.mrb[0].mxu0
    %2782 = vmatprep.mubr.f32.mxu0 0.0
    %v2783 = vand.u32 %v2529, 4294901760
    %2784 = vmatmul.mubr.f32.gmra.mrb[0].mxu0 %v2783
    %v2785 = vpop.f32.mrb[0].mxu0
    %v2786 = vadd.f32 %v2634, %v2785
    %v2787 = vpop.f32.mrb[0].mxu0
    %2788 = vmatprep.mubr.f32.mxu0 0.0
    %v2789 = vand.u32 %v2532, 4294901760
    %2790 = vmatmul.mubr.f32.gmra.mrb[0].mxu0 %v2789
    %v2791 = vpop.f32.mrb[0].mxu0
    %v2792 = vadd.f32 %v2644, %v2791
    %v2793 = vpop.f32.mrb[0].mxu0
    %2794 = vmatprep.mubr.f32.mxu0 0.0
    %v2795 = vand.u32 %v2535, 4294901760
    %2796 = vmatmul.mubr.f32.gmra.mrb[0].mxu0 %v2795
    %v2797 = vpop.f32.mrb[0].mxu0
    %v2798 = vadd.f32 %v2654, %v2797
    %v2799 = vpop.f32.mrb[0].mxu0
    %2800 = vmatprep.mubr.f32.mxu0 0.0
    %v2801 = vand.u32 %v2538, 4294901760
    %2802 = vmatmul.mubr.f32.gmra.mrb[0].mxu0 %v2801
    %v2803 = vpop.f32.mrb[0].mxu0
    %v2804 = vadd.f32 %v2664, %v2803
    %v2805 = vpop.f32.mrb[0].mxu0
    %2806 = vmatprep.mubr.f32.mxu0 0.0
    %v2807 = vand.u32 %v2541, 4294901760
    %2808 = vmatmul.mubr.f32.gmra.mrb[0].mxu0 %v2807
    %v2809 = vpop.f32.mrb[0].mxu0
    %v2810 = vadd.f32 %v2674, %v2809
    %v2811 = vpop.f32.mrb[0].mxu0
    %2812 = vmatprep.mubr.f32.mxu0 0.0
    %v2813 = vand.u32 %v2544, 4294901760
    %2814 = vmatmul.mubr.f32.gmra.mrb[0].mxu0 %v2813
    %v2815 = vpop.f32.mrb[0].mxu0
    %v2816 = vadd.f32 %v2684, %v2815
    %v2817 = vpop.f32.mrb[0].mxu0
    %2818 = vmatprep.mubr.f32.mxu0 0.0
    %v2819 = vand.u32 %v2547, 4294901760
    %2820 = vmatmul.mubr.f32.gmra.mrb[0].mxu0 %v2819
    %v2821 = vpop.f32.mrb[0].mxu0
    %v2822 = vadd.f32 %v2694, %v2821
    %v2823 = vpop.f32.mrb[0].mxu0
    %2824 = vdwg.mxu0
    %2825 = vmatprep.subr.mxu0 0.0
    %v2826 = vand.u32 %v2521, 4294901760
    %v2827 = vsub.f32 %v2521, %v2826
    %2828 = vmatpush1.msra.mxu0 %v2827
    %2829 = vmatprep.subr.mxu0 0.0
    %v2830 = vand.u32 %v2522, 4294901760
    %v2831 = vsub.f32 %v2522, %v2830
    %2832 = vmatpush1.msra.mxu0 %v2831
    %2833 = vmatprep.subr.mxu0 0.0
    %v2834 = vand.u32 %v2523, 4294901760
    %v2835 = vsub.f32 %v2523, %v2834
    %2836 = vmatpush1.msra.mxu0 %v2835
    %2837 = vmatprep.subr.mxu0 0.0
    %2838 = vmatpush1.msra.mxu0 0.0
    %2839 = vmatprep.subr.mxu0 0.0
    %2840 = vmatpush1.msra.mxu0 0.0
    %2841 = vmatprep.subr.mxu0 0.0
    %2842 = vmatpush1.msra.mxu0 0.0
    %2843 = vmatprep.subr.mxu0 0.0
    %2844 = vmatpush1.msra.mxu0 0.0
    %2845 = vmatprep.subr.mxu0 0.0
    %2846 = vmatpush1.msra.mxu0 0.0
    %2847 = vmatprep.subr.mxu0 0.0
    %2848 = vmatpush1.msra.mxu0 0.0
    %2849 = vmatprep.subr.mxu0 0.0
    %2850 = vmatpush1.msra.mxu0 0.0
    %2851 = vmatprep.subr.mxu0 0.0
    %2852 = vmatpush1.msra.mxu0 0.0
    %2853 = vmatprep.subr.mxu0 0.0
    %2854 = vmatpush1.msra.mxu0 0.0
    %2855 = vmatprep.subr.mxu0 0.0
    %2856 = vmatpush1.msra.mxu0 0.0
    %2857 = vmatprep.subr.mxu0 0.0
    %2858 = vmatpush1.msra.mxu0 0.0
    %2859 = vmatprep.subr.mxu0 0.0
    %2860 = vmatpush1.msra.mxu0 0.0
    %2861 = vmatprep.subr.mxu0 0.0
    %2862 = vmatpush1.msra.mxu0 0.0
    %2863 = vmatprep.subr.mxu0 0.0
    %2864 = vmatpush1.msra.mxu0 0.0
    %2865 = vmatprep.subr.mxu0 0.0
    %2866 = vmatpush1.msra.mxu0 0.0
    %2867 = vmatprep.subr.mxu0 0.0
    %2868 = vmatpush1.msra.mxu0 0.0
    %2869 = vmatprep.subr.mxu0 0.0
    %2870 = vmatpush1.msra.mxu0 0.0
    %2871 = vmatprep.subr.mxu0 0.0
    %2872 = vmatpush1.msra.mxu0 0.0
    %2873 = vmatprep.subr.mxu0 0.0
    %2874 = vmatpush1.msra.mxu0 0.0
    %2875 = vmatprep.subr.mxu0 0.0
    %2876 = vmatpush1.msra.mxu0 0.0
    %2877 = vmatprep.subr.mxu0 0.0
    %2878 = vmatpush1.msra.mxu0 0.0
    %2879 = vmatprep.subr.mxu0 0.0
    %2880 = vmatpush1.msra.mxu0 0.0
    %2881 = vmatprep.subr.mxu0 0.0
    %2882 = vmatpush1.msra.mxu0 0.0
    %2883 = vmatprep.subr.mxu0 0.0
    %2884 = vmatpush1.msra.mxu0 0.0
    %2885 = vmatprep.subr.mxu0 0.0
    %2886 = vmatpush1.msra.mxu0 0.0
    %2887 = vmatprep.subr.mxu0 0.0
    %2888 = vmatpush1.msra.mxu0 0.0
    %2889 = vmatprep.subr.mxu0 0.0
    %2890 = vmatpush1.msra.mxu0 0.0
    %2891 = vmatprep.subr.mxu0 0.0
    %2892 = vmatpush1.msra.mxu0 0.0
    %2893 = vmatprep.subr.mxu0 0.0
    %2894 = vmatpush1.msra.mxu0 0.0
    %2895 = vmatprep.mubr.f32.mxu0 0.0
    %v2896 = vand.u32 %v2526, 4294901760
    %v2897 = vsub.f32 %v2526, %v2896
    %2898 = vmatmul.mubr.f32.gmra.mrb[0].mxu0 %v2897
    %v2899 = vpop.f32.mrb[0].mxu0
    %v2900 = vadd.f32 %v2780, %v2899
    %v2901 = vpop.f32.mrb[0].mxu0
    %2902 = vmatprep.mubr.f32.mxu0 0.0
    %v2903 = vand.u32 %v2529, 4294901760
    %v2904 = vsub.f32 %v2529, %v2903
    %2905 = vmatmul.mubr.f32.gmra.mrb[0].mxu0 %v2904
    %v2906 = vpop.f32.mrb[0].mxu0
    %v2907 = vadd.f32 %v2786, %v2906
    %v2908 = vpop.f32.mrb[0].mxu0
    %2909 = vmatprep.mubr.f32.mxu0 0.0
    %v2910 = vand.u32 %v2532, 4294901760
    %v2911 = vsub.f32 %v2532, %v2910
    %2912 = vmatmul.mubr.f32.gmra.mrb[0].mxu0 %v2911
    %v2913 = vpop.f32.mrb[0].mxu0
    %v2914 = vadd.f32 %v2792, %v2913
    %v2915 = vpop.f32.mrb[0].mxu0
    %2916 = vmatprep.mubr.f32.mxu0 0.0
    %v2917 = vand.u32 %v2535, 4294901760
    %v2918 = vsub.f32 %v2535, %v2917
    %2919 = vmatmul.mubr.f32.gmra.mrb[0].mxu0 %v2918
    %v2920 = vpop.f32.mrb[0].mxu0
    %v2921 = vadd.f32 %v2798, %v2920
    %v2922 = vpop.f32.mrb[0].mxu0
    %2923 = vmatprep.mubr.f32.mxu0 0.0
    %v2924 = vand.u32 %v2538, 4294901760
    %v2925 = vsub.f32 %v2538, %v2924
    %2926 = vmatmul.mubr.f32.gmra.mrb[0].mxu0 %v2925
    %v2927 = vpop.f32.mrb[0].mxu0
    %v2928 = vadd.f32 %v2804, %v2927
    %v2929 = vpop.f32.mrb[0].mxu0
    %2930 = vmatprep.mubr.f32.mxu0 0.0
    %v2931 = vand.u32 %v2541, 4294901760
    %v2932 = vsub.f32 %v2541, %v2931
    %2933 = vmatmul.mubr.f32.gmra.mrb[0].mxu0 %v2932
    %v2934 = vpop.f32.mrb[0].mxu0
    %v2935 = vadd.f32 %v2810, %v2934
    %v2936 = vpop.f32.mrb[0].mxu0
    %2937 = vmatprep.mubr.f32.mxu0 0.0
    %v2938 = vand.u32 %v2544, 4294901760
    %v2939 = vsub.f32 %v2544, %v2938
    %2940 = vmatmul.mubr.f32.gmra.mrb[0].mxu0 %v2939
    %v2941 = vpop.f32.mrb[0].mxu0
    %v2942 = vadd.f32 %v2816, %v2941
    %v2943 = vpop.f32.mrb[0].mxu0
    %2944 = vmatprep.mubr.f32.mxu0 0.0
    %v2945 = vand.u32 %v2547, 4294901760
    %v2946 = vsub.f32 %v2547, %v2945
    %2947 = vmatmul.mubr.f32.gmra.mrb[0].mxu0 %v2946
    %v2948 = vpop.f32.mrb[0].mxu0
    %v2949 = vadd.f32 %v2822, %v2948
    %v2950 = vpop.f32.mrb[0].mxu0
    %2951 = vdwg.mxu0
    %2952 = vmatprep.subr.mxu0 0.0
    %v2953 = vand.u32 %v2521, 4294901760
    %2954 = vmatpush1.msra.mxu0 %v2953
    %2955 = vmatprep.subr.mxu0 0.0
    %v2956 = vand.u32 %v2522, 4294901760
    %2957 = vmatpush1.msra.mxu0 %v2956
    %2958 = vmatprep.subr.mxu0 0.0
    %v2959 = vand.u32 %v2523, 4294901760
    %2960 = vmatpush1.msra.mxu0 %v2959
    %2961 = vmatprep.subr.mxu0 0.0
    %2962 = vmatpush1.msra.mxu0 0.0
    %2963 = vmatprep.subr.mxu0 0.0
    %2964 = vmatpush1.msra.mxu0 0.0
    %2965 = vmatprep.subr.mxu0 0.0
    %2966 = vmatpush1.msra.mxu0 0.0
    %2967 = vmatprep.subr.mxu0 0.0
    %2968 = vmatpush1.msra.mxu0 0.0
    %2969 = vmatprep.subr.mxu0 0.0
    %2970 = vmatpush1.msra.mxu0 0.0
    %2971 = vmatprep.subr.mxu0 0.0
    %2972 = vmatpush1.msra.mxu0 0.0
    %2973 = vmatprep.subr.mxu0 0.0
    %2974 = vmatpush1.msra.mxu0 0.0
    %2975 = vmatprep.subr.mxu0 0.0
    %2976 = vmatpush1.msra.mxu0 0.0
    %2977 = vmatprep.subr.mxu0 0.0
    %2978 = vmatpush1.msra.mxu0 0.0
    %2979 = vmatprep.subr.mxu0 0.0
    %2980 = vmatpush1.msra.mxu0 0.0
    %2981 = vmatprep.subr.mxu0 0.0
    %2982 = vmatpush1.msra.mxu0 0.0
    %2983 = vmatprep.subr.mxu0 0.0
    %2984 = vmatpush1.msra.mxu0 0.0
    %2985 = vmatprep.subr.mxu0 0.0
    %2986 = vmatpush1.msra.mxu0 0.0
    %2987 = vmatprep.subr.mxu0 0.0
    %2988 = vmatpush1.msra.mxu0 0.0
    %2989 = vmatprep.subr.mxu0 0.0
    %2990 = vmatpush1.msra.mxu0 0.0
    %2991 = vmatprep.subr.mxu0 0.0
    %2992 = vmatpush1.msra.mxu0 0.0
    %2993 = vmatprep.subr.mxu0 0.0
    %2994 = vmatpush1.msra.mxu0 0.0
    %2995 = vmatprep.subr.mxu0 0.0
    %2996 = vmatpush1.msra.mxu0 0.0
    %2997 = vmatprep.subr.mxu0 0.0
    %2998 = vmatpush1.msra.mxu0 0.0
    %2999 = vmatprep.subr.mxu0 0.0
    %3000 = vmatpush1.msra.mxu0 0.0
    %3001 = vmatprep.subr.mxu0 0.0
    %3002 = vmatpush1.msra.mxu0 0.0
    %3003 = vmatprep.subr.mxu0 0.0
    %3004 = vmatpush1.msra.mxu0 0.0
    %3005 = vmatprep.subr.mxu0 0.0
    %3006 = vmatpush1.msra.mxu0 0.0
    %3007 = vmatprep.subr.mxu0 0.0
    %3008 = vmatpush1.msra.mxu0 0.0
    %3009 = vmatprep.subr.mxu0 0.0
    %3010 = vmatpush1.msra.mxu0 0.0
    %3011 = vmatprep.subr.mxu0 0.0
    %3012 = vmatpush1.msra.mxu0 0.0
    %3013 = vmatprep.subr.mxu0 0.0
    %3014 = vmatpush1.msra.mxu0 0.0
    %3015 = vmatprep.subr.mxu0 0.0
    %3016 = vmatpush1.msra.mxu0 0.0
    %3017 = vmatprep.subr.mxu0 0.0
    %3018 = vmatpush1.msra.mxu0 0.0
    %3019 = vmatprep.mubr.f32.mxu0 0.0
    %v3020 = vand.u32 %v2526, 4294901760
    %v3021 = vsub.f32 %v2526, %v3020
    %v3022 = vand.u32 %v3021, 4294901760
    %3023 = vmatmul.mubr.f32.gmra.mrb[0].mxu0 %v3022
    %v3024 = vpop.f32.mrb[0].mxu0
    %v3025 = vadd.f32 %v2900, %v3024
    %v3026 = vpop.f32.mrb[0].mxu0
    %3027 = vmatprep.mubr.f32.mxu0 0.0
    %v3028 = vand.u32 %v2529, 4294901760
    %v3029 = vsub.f32 %v2529, %v3028
    %v3030 = vand.u32 %v3029, 4294901760
    %3031 = vmatmul.mubr.f32.gmra.mrb[0].mxu0 %v3030
    %v3032 = vpop.f32.mrb[0].mxu0
    %v3033 = vadd.f32 %v2907, %v3032
    %v3034 = vpop.f32.mrb[0].mxu0
    %3035 = vmatprep.mubr.f32.mxu0 0.0
    %v3036 = vand.u32 %v2532, 4294901760
    %v3037 = vsub.f32 %v2532, %v3036
    %v3038 = vand.u32 %v3037, 4294901760
    %3039 = vmatmul.mubr.f32.gmra.mrb[0].mxu0 %v3038
    %v3040 = vpop.f32.mrb[0].mxu0
    %v3041 = vadd.f32 %v2914, %v3040
    %v3042 = vpop.f32.mrb[0].mxu0
    %3043 = vmatprep.mubr.f32.mxu0 0.0
    %v3044 = vand.u32 %v2535, 4294901760
    %v3045 = vsub.f32 %v2535, %v3044
    %v3046 = vand.u32 %v3045, 4294901760
    %3047 = vmatmul.mubr.f32.gmra.mrb[0].mxu0 %v3046
    %v3048 = vpop.f32.mrb[0].mxu0
    %v3049 = vadd.f32 %v2921, %v3048
    %v3050 = vpop.f32.mrb[0].mxu0
    %3051 = vmatprep.mubr.f32.mxu0 0.0
    %v3052 = vand.u32 %v2538, 4294901760
    %v3053 = vsub.f32 %v2538, %v3052
    %v3054 = vand.u32 %v3053, 4294901760
    %3055 = vmatmul.mubr.f32.gmra.mrb[0].mxu0 %v3054
    %v3056 = vpop.f32.mrb[0].mxu0
    %v3057 = vadd.f32 %v2928, %v3056
    %v3058 = vpop.f32.mrb[0].mxu0
    %3059 = vmatprep.mubr.f32.mxu0 0.0
    %v3060 = vand.u32 %v2541, 4294901760
    %v3061 = vsub.f32 %v2541, %v3060
    %v3062 = vand.u32 %v3061, 4294901760
    %3063 = vmatmul.mubr.f32.gmra.mrb[0].mxu0 %v3062
    %v3064 = vpop.f32.mrb[0].mxu0
    %v3065 = vadd.f32 %v2935, %v3064
    %v3066 = vpop.f32.mrb[0].mxu0
    %3067 = vmatprep.mubr.f32.mxu0 0.0
    %v3068 = vand.u32 %v2544, 4294901760
    %v3069 = vsub.f32 %v2544, %v3068
    %v3070 = vand.u32 %v3069, 4294901760
    %3071 = vmatmul.mubr.f32.gmra.mrb[0].mxu0 %v3070
    %v3072 = vpop.f32.mrb[0].mxu0
    %v3073 = vadd.f32 %v2942, %v3072
    %v3074 = vpop.f32.mrb[0].mxu0
    %3075 = vmatprep.mubr.f32.mxu0 0.0
    %v3076 = vand.u32 %v2547, 4294901760
    %v3077 = vsub.f32 %v2547, %v3076
    %v3078 = vand.u32 %v3077, 4294901760
    %3079 = vmatmul.mubr.f32.gmra.mrb[0].mxu0 %v3078
    %v3080 = vpop.f32.mrb[0].mxu0
    %v3081 = vadd.f32 %v2949, %v3080
    %v3082 = vpop.f32.mrb[0].mxu0
    %3083 = vdwg.mxu0
    %3084 = vmatprep.subr.mxu0 0.0
    %v3085 = vand.u32 %v2521, 4294901760
    %v3086 = vsub.f32 %v2521, %v3085
    %v3087 = vand.u32 %v3086, 4294901760
    %3088 = vmatpush1.msra.mxu0 %v3087
    %3089 = vmatprep.subr.mxu0 0.0
    %v3090 = vand.u32 %v2522, 4294901760
    %v3091 = vsub.f32 %v2522, %v3090
    %v3092 = vand.u32 %v3091, 4294901760
    %3093 = vmatpush1.msra.mxu0 %v3092
    %3094 = vmatprep.subr.mxu0 0.0
    %v3095 = vand.u32 %v2523, 4294901760
    %v3096 = vsub.f32 %v2523, %v3095
    %v3097 = vand.u32 %v3096, 4294901760
    %3098 = vmatpush1.msra.mxu0 %v3097
    %3099 = vmatprep.subr.mxu0 0.0
    %3100 = vmatpush1.msra.mxu0 0.0
    %3101 = vmatprep.subr.mxu0 0.0
    %3102 = vmatpush1.msra.mxu0 0.0
    %3103 = vmatprep.subr.mxu0 0.0
    %3104 = vmatpush1.msra.mxu0 0.0
    %3105 = vmatprep.subr.mxu0 0.0
    %3106 = vmatpush1.msra.mxu0 0.0
    %3107 = vmatprep.subr.mxu0 0.0
    %3108 = vmatpush1.msra.mxu0 0.0
    %3109 = vmatprep.subr.mxu0 0.0
    %3110 = vmatpush1.msra.mxu0 0.0
    %3111 = vmatprep.subr.mxu0 0.0
    %3112 = vmatpush1.msra.mxu0 0.0
    %3113 = vmatprep.subr.mxu0 0.0
    %3114 = vmatpush1.msra.mxu0 0.0
    %3115 = vmatprep.subr.mxu0 0.0
    %3116 = vmatpush1.msra.mxu0 0.0
    %3117 = vmatprep.subr.mxu0 0.0
    %3118 = vmatpush1.msra.mxu0 0.0
    %3119 = vmatprep.subr.mxu0 0.0
    %3120 = vmatpush1.msra.mxu0 0.0
    %3121 = vmatprep.subr.mxu0 0.0
    %3122 = vmatpush1.msra.mxu0 0.0
    %3123 = vmatprep.subr.mxu0 0.0
    %3124 = vmatpush1.msra.mxu0 0.0
    %3125 = vmatprep.subr.mxu0 0.0
    %3126 = vmatpush1.msra.mxu0 0.0
    %3127 = vmatprep.subr.mxu0 0.0
    %3128 = vmatpush1.msra.mxu0 0.0
    %3129 = vmatprep.subr.mxu0 0.0
    %3130 = vmatpush1.msra.mxu0 0.0
    %3131 = vmatprep.subr.mxu0 0.0
    %3132 = vmatpush1.msra.mxu0 0.0
    %3133 = vmatprep.subr.mxu0 0.0
    %3134 = vmatpush1.msra.mxu0 0.0
    %3135 = vmatprep.subr.mxu0 0.0
    %3136 = vmatpush1.msra.mxu0 0.0
    %3137 = vmatprep.subr.mxu0 0.0
    %3138 = vmatpush1.msra.mxu0 0.0
    %3139 = vmatprep.subr.mxu0 0.0
    %3140 = vmatpush1.msra.mxu0 0.0
    %3141 = vmatprep.subr.mxu0 0.0
    %3142 = vmatpush1.msra.mxu0 0.0
    %3143 = vmatprep.subr.mxu0 0.0
    %3144 = vmatpush1.msra.mxu0 0.0
    %3145 = vmatprep.subr.mxu0 0.0
    %3146 = vmatpush1.msra.mxu0 0.0
    %3147 = vmatprep.subr.mxu0 0.0
    %3148 = vmatpush1.msra.mxu0 0.0
    %3149 = vmatprep.subr.mxu0 0.0
    %3150 = vmatpush1.msra.mxu0 0.0
    %3151 = vmatprep.subr.mxu0 0.0
    %3152 = vmatpush1.msra.mxu0 0.0
    %3153 = vmatprep.subr.mxu0 0.0
    %3154 = vmatpush1.msra.mxu0 0.0
    %3155 = vmatprep.subr.mxu0 0.0
    %3156 = vmatpush1.msra.mxu0 0.0
    %3157 = vmatprep.mubr.f32.mxu0 0.0
    %v3158 = vand.u32 %v2526, 4294901760
    %3159 = vmatmul.mubr.f32.gmra.mrb[0].mxu0 %v3158
    %v3160 = vpop.f32.mrb[0].mxu0
    %v3161 = vadd.f32 %v3025, %v3160
    %v3162 = vpop.f32.mrb[0].mxu0
    %3163 = vmatprep.mubr.f32.mxu0 0.0
    %v3164 = vand.u32 %v2529, 4294901760
    %3165 = vmatmul.mubr.f32.gmra.mrb[0].mxu0 %v3164
    %v3166 = vpop.f32.mrb[0].mxu0
    %v3167 = vadd.f32 %v3033, %v3166
    %v3168 = vpop.f32.mrb[0].mxu0
    %3169 = vmatprep.mubr.f32.mxu0 0.0
    %v3170 = vand.u32 %v2532, 4294901760
    %3171 = vmatmul.mubr.f32.gmra.mrb[0].mxu0 %v3170
    %v3172 = vpop.f32.mrb[0].mxu0
    %v3173 = vadd.f32 %v3041, %v3172
    %v3174 = vpop.f32.mrb[0].mxu0
    %3175 = vmatprep.mubr.f32.mxu0 0.0
    %v3176 = vand.u32 %v2535, 4294901760
    %3177 = vmatmul.mubr.f32.gmra.mrb[0].mxu0 %v3176
    %v3178 = vpop.f32.mrb[0].mxu0
    %v3179 = vadd.f32 %v3049, %v3178
    %v3180 = vpop.f32.mrb[0].mxu0
    %3181 = vmatprep.mubr.f32.mxu0 0.0
    %v3182 = vand.u32 %v2538, 4294901760
    %3183 = vmatmul.mubr.f32.gmra.mrb[0].mxu0 %v3182
    %v3184 = vpop.f32.mrb[0].mxu0
    %v3185 = vadd.f32 %v3057, %v3184
    %v3186 = vpop.f32.mrb[0].mxu0
    %3187 = vmatprep.mubr.f32.mxu0 0.0
    %v3188 = vand.u32 %v2541, 4294901760
    %3189 = vmatmul.mubr.f32.gmra.mrb[0].mxu0 %v3188
    %v3190 = vpop.f32.mrb[0].mxu0
    %v3191 = vadd.f32 %v3065, %v3190
    %v3192 = vpop.f32.mrb[0].mxu0
    %3193 = vmatprep.mubr.f32.mxu0 0.0
    %v3194 = vand.u32 %v2544, 4294901760
    %3195 = vmatmul.mubr.f32.gmra.mrb[0].mxu0 %v3194
    %v3196 = vpop.f32.mrb[0].mxu0
    %v3197 = vadd.f32 %v3073, %v3196
    %v3198 = vpop.f32.mrb[0].mxu0
    %3199 = vmatprep.mubr.f32.mxu0 0.0
    %v3200 = vand.u32 %v2547, 4294901760
    %3201 = vmatmul.mubr.f32.gmra.mrb[0].mxu0 %v3200
    %v3202 = vpop.f32.mrb[0].mxu0
    %v3203 = vadd.f32 %v3081, %v3202
    %v3204 = vpop.f32.mrb[0].mxu0
    %3205 = vdwg.mxu0
    %3206 = vmatprep.subr.mxu0 0.0
    %v3207 = vand.u32 %v2521, 4294901760
    %3208 = vmatpush1.msra.mxu0 %v3207
    %3209 = vmatprep.subr.mxu0 0.0
    %v3210 = vand.u32 %v2522, 4294901760
    %3211 = vmatpush1.msra.mxu0 %v3210
    %3212 = vmatprep.subr.mxu0 0.0
    %v3213 = vand.u32 %v2523, 4294901760
    %3214 = vmatpush1.msra.mxu0 %v3213
    %3215 = vmatprep.subr.mxu0 0.0
    %3216 = vmatpush1.msra.mxu0 0.0
    %3217 = vmatprep.subr.mxu0 0.0
    %3218 = vmatpush1.msra.mxu0 0.0
    %3219 = vmatprep.subr.mxu0 0.0
    %3220 = vmatpush1.msra.mxu0 0.0
    %3221 = vmatprep.subr.mxu0 0.0
    %3222 = vmatpush1.msra.mxu0 0.0
    %3223 = vmatprep.subr.mxu0 0.0
    %3224 = vmatpush1.msra.mxu0 0.0
    %3225 = vmatprep.subr.mxu0 0.0
    %3226 = vmatpush1.msra.mxu0 0.0
    %3227 = vmatprep.subr.mxu0 0.0
    %3228 = vmatpush1.msra.mxu0 0.0
    %3229 = vmatprep.subr.mxu0 0.0
    %3230 = vmatpush1.msra.mxu0 0.0
    %3231 = vmatprep.subr.mxu0 0.0
    %3232 = vmatpush1.msra.mxu0 0.0
    %3233 = vmatprep.subr.mxu0 0.0
    %3234 = vmatpush1.msra.mxu0 0.0
    %3235 = vmatprep.subr.mxu0 0.0
    %3236 = vmatpush1.msra.mxu0 0.0
    %3237 = vmatprep.subr.mxu0 0.0
    %3238 = vmatpush1.msra.mxu0 0.0
    %3239 = vmatprep.subr.mxu0 0.0
    %3240 = vmatpush1.msra.mxu0 0.0
    %3241 = vmatprep.subr.mxu0 0.0
    %3242 = vmatpush1.msra.mxu0 0.0
    %3243 = vmatprep.subr.mxu0 0.0
    %3244 = vmatpush1.msra.mxu0 0.0
    %3245 = vmatprep.subr.mxu0 0.0
    %3246 = vmatpush1.msra.mxu0 0.0
    %3247 = vmatprep.subr.mxu0 0.0
    %3248 = vmatpush1.msra.mxu0 0.0
    %3249 = vmatprep.subr.mxu0 0.0
    %3250 = vmatpush1.msra.mxu0 0.0
    %3251 = vmatprep.subr.mxu0 0.0
    %3252 = vmatpush1.msra.mxu0 0.0
    %3253 = vmatprep.subr.mxu0 0.0
    %3254 = vmatpush1.msra.mxu0 0.0
    %3255 = vmatprep.subr.mxu0 0.0
    %3256 = vmatpush1.msra.mxu0 0.0
    %3257 = vmatprep.subr.mxu0 0.0
    %3258 = vmatpush1.msra.mxu0 0.0
    %3259 = vmatprep.subr.mxu0 0.0
    %3260 = vmatpush1.msra.mxu0 0.0
    %3261 = vmatprep.subr.mxu0 0.0
    %3262 = vmatpush1.msra.mxu0 0.0
    %3263 = vmatprep.subr.mxu0 0.0
    %3264 = vmatpush1.msra.mxu0 0.0
    %3265 = vmatprep.subr.mxu0 0.0
    %3266 = vmatpush1.msra.mxu0 0.0
    %3267 = vmatprep.subr.mxu0 0.0
    %3268 = vmatpush1.msra.mxu0 0.0
    %3269 = vmatprep.subr.mxu0 0.0
    %3270 = vmatpush1.msra.mxu0 0.0
    %3271 = vmatprep.subr.mxu0 0.0
    %3272 = vmatpush1.msra.mxu0 0.0
    %3273 = vmatprep.mubr.f32.mxu0 0.0
    %v3274 = vand.u32 %v2526, 4294901760
    %3275 = vmatmul.mubr.f32.gmra.mrb[0].mxu0 %v3274
    %v3276 = vpop.f32.mrb[0].mxu0
    %v3277 = vadd.f32 %v3161, %v3276
    %v3278 = vpop.f32.mrb[0].mxu0
    %3279 = vmatprep.mubr.f32.mxu0 0.0
    %v3280 = vand.u32 %v2529, 4294901760
    %3281 = vmatmul.mubr.f32.gmra.mrb[0].mxu0 %v3280
    %v3282 = vpop.f32.mrb[0].mxu0
    %v3283 = vadd.f32 %v3167, %v3282
    %v3284 = vpop.f32.mrb[0].mxu0
    %3285 = vmatprep.mubr.f32.mxu0 0.0
    %v3286 = vand.u32 %v2532, 4294901760
    %3287 = vmatmul.mubr.f32.gmra.mrb[0].mxu0 %v3286
    %v3288 = vpop.f32.mrb[0].mxu0
    %v3289 = vadd.f32 %v3173, %v3288
    %v3290 = vpop.f32.mrb[0].mxu0
    %3291 = vmatprep.mubr.f32.mxu0 0.0
    %v3292 = vand.u32 %v2535, 4294901760
    %3293 = vmatmul.mubr.f32.gmra.mrb[0].mxu0 %v3292
    %v3294 = vpop.f32.mrb[0].mxu0
    %v3295 = vadd.f32 %v3179, %v3294
    %v3296 = vpop.f32.mrb[0].mxu0
    %3297 = vmatprep.mubr.f32.mxu0 0.0
    %v3298 = vand.u32 %v2538, 4294901760
    %3299 = vmatmul.mubr.f32.gmra.mrb[0].mxu0 %v3298
    %v3300 = vpop.f32.mrb[0].mxu0
    %v3301 = vadd.f32 %v3185, %v3300
    %v3302 = vpop.f32.mrb[0].mxu0
    %3303 = vmatprep.mubr.f32.mxu0 0.0
    %v3304 = vand.u32 %v2541, 4294901760
    %3305 = vmatmul.mubr.f32.gmra.mrb[0].mxu0 %v3304
    %v3306 = vpop.f32.mrb[0].mxu0
    %v3307 = vadd.f32 %v3191, %v3306
    %v3308 = vpop.f32.mrb[0].mxu0
    %3309 = vmatprep.mubr.f32.mxu0 0.0
    %v3310 = vand.u32 %v2544, 4294901760
    %3311 = vmatmul.mubr.f32.gmra.mrb[0].mxu0 %v3310
    %v3312 = vpop.f32.mrb[0].mxu0
    %v3313 = vadd.f32 %v3197, %v3312
    %v3314 = vpop.f32.mrb[0].mxu0
    %3315 = vmatprep.mubr.f32.mxu0 0.0
    %v3316 = vand.u32 %v2547, 4294901760
    %3317 = vmatmul.mubr.f32.gmra.mrb[0].mxu0 %v3316
    %v3318 = vpop.f32.mrb[0].mxu0
    %v3319 = vadd.f32 %v3203, %v3318
    %v3320 = vpop.f32.mrb[0].mxu0
    %3321 = vdwg.mxu0
    %v3322 = vmul.f32 %v3277, %v2513
    %v3323 = vmul.f32 %v3283, %v2514
    %v3324 = vmul.f32 %v3289, %v2515
    %v3325 = vmul.f32 %v3295, %v2516
    %v3326 = vmul.f32 %v3301, %v2517
    %v3327 = vmul.f32 %v3307, %v2518
    %v3328 = vmul.f32 %v3313, %v2519
    %v3329 = vmul.f32 %v3319, %v2520
    %v3330 = vld [vmem:[%s9] sm:$0xff]
    %vm3331 = vcmask 523264
    %v3333 = vsel %vm3331, %v3330, 0
    %3335 = vmatprep.subr.mxu0 0.0
    %v3336 = vand.u32 %v3322, 4294901760
    %3337 = vmatpush1.msra.mxu0 %v3336
    %3338 = vmatprep.subr.mxu0 0.0
    %v3339 = vand.u32 %v3323, 4294901760
    %3340 = vmatpush1.msra.mxu0 %v3339
    %3341 = vmatprep.subr.mxu0 0.0
    %v3342 = vand.u32 %v3324, 4294901760
    %3343 = vmatpush1.msra.mxu0 %v3342
    %3344 = vmatprep.subr.mxu0 0.0
    %v3345 = vand.u32 %v3325, 4294901760
    %3346 = vmatpush1.msra.mxu0 %v3345
    %3347 = vmatprep.subr.mxu0 0.0
    %v3348 = vand.u32 %v3326, 4294901760
    %3349 = vmatpush1.msra.mxu0 %v3348
    %3350 = vmatprep.subr.mxu0 0.0
    %v3351 = vand.u32 %v3327, 4294901760
    %3352 = vmatpush1.msra.mxu0 %v3351
    %3353 = vmatprep.subr.mxu0 0.0
    %v3354 = vand.u32 %v3328, 4294901760
    %3355 = vmatpush1.msra.mxu0 %v3354
    %3356 = vmatprep.subr.mxu0 0.0
    %v3357 = vand.u32 %v3329, 4294901760
    %3358 = vmatpush1.msra.mxu0 %v3357
    %3359 = vmatprep.subr.mxu0 0.0
    %3360 = vmatpush1.msra.mxu0 0.0
    %3361 = vmatprep.subr.mxu0 0.0
    %3362 = vmatpush1.msra.mxu0 0.0
    %3363 = vmatprep.subr.mxu0 0.0
    %3364 = vmatpush1.msra.mxu0 0.0
    %3365 = vmatprep.subr.mxu0 0.0
    %3366 = vmatpush1.msra.mxu0 0.0
    %3367 = vmatprep.subr.mxu0 0.0
    %3368 = vmatpush1.msra.mxu0 0.0
    %3369 = vmatprep.subr.mxu0 0.0
    %3370 = vmatpush1.msra.mxu0 0.0
    %3371 = vmatprep.subr.mxu0 0.0
    %3372 = vmatpush1.msra.mxu0 0.0
    %3373 = vmatprep.subr.mxu0 0.0
    %3374 = vmatpush1.msra.mxu0 0.0
    %3375 = vmatprep.subr.mxu0 0.0
    %3376 = vmatpush1.msra.mxu0 0.0
    %3377 = vmatprep.subr.mxu0 0.0
    %3378 = vmatpush1.msra.mxu0 0.0
    %3379 = vmatprep.subr.mxu0 0.0
    %3380 = vmatpush1.msra.mxu0 0.0
    %3381 = vmatprep.subr.mxu0 0.0
    %3382 = vmatpush1.msra.mxu0 0.0
    %3383 = vmatprep.subr.mxu0 0.0
    %3384 = vmatpush1.msra.mxu0 0.0
    %3385 = vmatprep.subr.mxu0 0.0
    %3386 = vmatpush1.msra.mxu0 0.0
    %3387 = vmatprep.subr.mxu0 0.0
    %3388 = vmatpush1.msra.mxu0 0.0
    %3389 = vmatprep.subr.mxu0 0.0
    %3390 = vmatpush1.msra.mxu0 0.0
    %3391 = vmatprep.subr.mxu0 0.0
    %3392 = vmatpush1.msra.mxu0 0.0
    %3393 = vmatprep.subr.mxu0 0.0
    %3394 = vmatpush1.msra.mxu0 0.0
    %3395 = vmatprep.subr.mxu0 0.0
    %3396 = vmatpush1.msra.mxu0 0.0
    %3397 = vmatprep.subr.mxu0 0.0
    %3398 = vmatpush1.msra.mxu0 0.0
    %3399 = vmatprep.subr.mxu0 0.0
    %3400 = vmatpush1.msra.mxu0 0.0
    %3401 = vmatprep.subr.mxu0 0.0
    %3402 = vmatpush1.msra.mxu0 0.0
    %3403 = vmatprep.subr.mxu0 0.0
    %3404 = vmatpush1.msra.mxu0 0.0
    %3405 = vmatprep.subr.mxu0 0.0
    %3406 = vmatpush1.msra.mxu0 0.0
    %3407 = vmatprep.mubr.f32.mxu0 0.0
    %v3408 = vand.u32 %v3333, 4294901760
    %v3409 = vsub.f32 %v3333, %v3408
    %v3410 = vand.u32 %v3409, 4294901760
    %v3411 = vsub.f32 %v3409, %v3410
    %v3412 = vand.u32 %v3411, 4294901760
    %3413 = vmatmul.mubr.f32.gmra.mrb[0].mxu0 %v3412
    %v3414 = vpop.f32.mrb[0].mxu0
    %v3415 = vadd.f32 0.0, %v3414
    %v3416 = vpop.f32.mrb[0].mxu0
    %3417 = vdwg.mxu0
    %3418 = vmatprep.subr.mxu0 0.0
    %v3419 = vand.u32 %v3322, 4294901760
    %v3420 = vsub.f32 %v3322, %v3419
    %v3421 = vand.u32 %v3420, 4294901760
    %v3422 = vsub.f32 %v3420, %v3421
    %v3423 = vand.u32 %v3422, 4294901760
    %3424 = vmatpush1.msra.mxu0 %v3423
    %3425 = vmatprep.subr.mxu0 0.0
    %v3426 = vand.u32 %v3323, 4294901760
    %v3427 = vsub.f32 %v3323, %v3426
    %v3428 = vand.u32 %v3427, 4294901760
    %v3429 = vsub.f32 %v3427, %v3428
    %v3430 = vand.u32 %v3429, 4294901760
    %3431 = vmatpush1.msra.mxu0 %v3430
    %3432 = vmatprep.subr.mxu0 0.0
    %v3433 = vand.u32 %v3324, 4294901760
    %v3434 = vsub.f32 %v3324, %v3433
    %v3435 = vand.u32 %v3434, 4294901760
    %v3436 = vsub.f32 %v3434, %v3435
    %v3437 = vand.u32 %v3436, 4294901760
    %3438 = vmatpush1.msra.mxu0 %v3437
    %3439 = vmatprep.subr.mxu0 0.0
    %v3440 = vand.u32 %v3325, 4294901760
    %v3441 = vsub.f32 %v3325, %v3440
    %v3442 = vand.u32 %v3441, 4294901760
    %v3443 = vsub.f32 %v3441, %v3442
    %v3444 = vand.u32 %v3443, 4294901760
    %3445 = vmatpush1.msra.mxu0 %v3444
    %3446 = vmatprep.subr.mxu0 0.0
    %v3447 = vand.u32 %v3326, 4294901760
    %v3448 = vsub.f32 %v3326, %v3447
    %v3449 = vand.u32 %v3448, 4294901760
    %v3450 = vsub.f32 %v3448, %v3449
    %v3451 = vand.u32 %v3450, 4294901760
    %3452 = vmatpush1.msra.mxu0 %v3451
    %3453 = vmatprep.subr.mxu0 0.0
    %v3454 = vand.u32 %v3327, 4294901760
    %v3455 = vsub.f32 %v3327, %v3454
    %v3456 = vand.u32 %v3455, 4294901760
    %v3457 = vsub.f32 %v3455, %v3456
    %v3458 = vand.u32 %v3457, 4294901760
    %3459 = vmatpush1.msra.mxu0 %v3458
    %3460 = vmatprep.subr.mxu0 0.0
    %v3461 = vand.u32 %v3328, 4294901760
    %v3462 = vsub.f32 %v3328, %v3461
    %v3463 = vand.u32 %v3462, 4294901760
    %v3464 = vsub.f32 %v3462, %v3463
    %v3465 = vand.u32 %v3464, 4294901760
    %3466 = vmatpush1.msra.mxu0 %v3465
    %3467 = vmatprep.subr.mxu0 0.0
    %v3468 = vand.u32 %v3329, 4294901760
    %v3469 = vsub.f32 %v3329, %v3468
    %v3470 = vand.u32 %v3469, 4294901760
    %v3471 = vsub.f32 %v3469, %v3470
    %v3472 = vand.u32 %v3471, 4294901760
    %3473 = vmatpush1.msra.mxu0 %v3472
    %3474 = vmatprep.subr.mxu0 0.0
    %3475 = vmatpush1.msra.mxu0 0.0
    %3476 = vmatprep.subr.mxu0 0.0
    %3477 = vmatpush1.msra.mxu0 0.0
    %3478 = vmatprep.subr.mxu0 0.0
    %3479 = vmatpush1.msra.mxu0 0.0
    %3480 = vmatprep.subr.mxu0 0.0
    %3481 = vmatpush1.msra.mxu0 0.0
    %3482 = vmatprep.subr.mxu0 0.0
    %3483 = vmatpush1.msra.mxu0 0.0
    %3484 = vmatprep.subr.mxu0 0.0
    %3485 = vmatpush1.msra.mxu0 0.0
    %3486 = vmatprep.subr.mxu0 0.0
    %3487 = vmatpush1.msra.mxu0 0.0
    %3488 = vmatprep.subr.mxu0 0.0
    %3489 = vmatpush1.msra.mxu0 0.0
    %3490 = vmatprep.subr.mxu0 0.0
    %3491 = vmatpush1.msra.mxu0 0.0
    %3492 = vmatprep.subr.mxu0 0.0
    %3493 = vmatpush1.msra.mxu0 0.0
    %3494 = vmatprep.subr.mxu0 0.0
    %3495 = vmatpush1.msra.mxu0 0.0
    %3496 = vmatprep.subr.mxu0 0.0
    %3497 = vmatpush1.msra.mxu0 0.0
    %3498 = vmatprep.subr.mxu0 0.0
    %3499 = vmatpush1.msra.mxu0 0.0
    %3500 = vmatprep.subr.mxu0 0.0
    %3501 = vmatpush1.msra.mxu0 0.0
    %3502 = vmatprep.subr.mxu0 0.0
    %3503 = vmatpush1.msra.mxu0 0.0
    %3504 = vmatprep.subr.mxu0 0.0
    %3505 = vmatpush1.msra.mxu0 0.0
    %3506 = vmatprep.subr.mxu0 0.0
    %3507 = vmatpush1.msra.mxu0 0.0
    %3508 = vmatprep.subr.mxu0 0.0
    %3509 = vmatpush1.msra.mxu0 0.0
    %3510 = vmatprep.subr.mxu0 0.0
    %3511 = vmatpush1.msra.mxu0 0.0
    %3512 = vmatprep.subr.mxu0 0.0
    %3513 = vmatpush1.msra.mxu0 0.0
    %3514 = vmatprep.subr.mxu0 0.0
    %3515 = vmatpush1.msra.mxu0 0.0
    %3516 = vmatprep.subr.mxu0 0.0
    %3517 = vmatpush1.msra.mxu0 0.0
    %3518 = vmatprep.subr.mxu0 0.0
    %3519 = vmatpush1.msra.mxu0 0.0
    %3520 = vmatprep.subr.mxu0 0.0
    %3521 = vmatpush1.msra.mxu0 0.0
    %3522 = vmatprep.mubr.f32.mxu0 0.0
    %v3523 = vand.u32 %v3333, 4294901760
    %3524 = vmatmul.mubr.f32.gmra.mrb[0].mxu0 %v3523
    %v3525 = vpop.f32.mrb[0].mxu0
    %v3526 = vadd.f32 %v3415, %v3525
    %v3527 = vpop.f32.mrb[0].mxu0
    %3528 = vdwg.mxu0
    %3529 = vmatprep.subr.mxu0 0.0
    %v3530 = vand.u32 %v3322, 4294901760
    %v3531 = vsub.f32 %v3322, %v3530
    %3532 = vmatpush1.msra.mxu0 %v3531
    %3533 = vmatprep.subr.mxu0 0.0
    %v3534 = vand.u32 %v3323, 4294901760
    %v3535 = vsub.f32 %v3323, %v3534
    %3536 = vmatpush1.msra.mxu0 %v3535
    %3537 = vmatprep.subr.mxu0 0.0
    %v3538 = vand.u32 %v3324, 4294901760
    %v3539 = vsub.f32 %v3324, %v3538
    %3540 = vmatpush1.msra.mxu0 %v3539
    %3541 = vmatprep.subr.mxu0 0.0
    %v3542 = vand.u32 %v3325, 4294901760
    %v3543 = vsub.f32 %v3325, %v3542
    %3544 = vmatpush1.msra.mxu0 %v3543
    %3545 = vmatprep.subr.mxu0 0.0
    %v3546 = vand.u32 %v3326, 4294901760
    %v3547 = vsub.f32 %v3326, %v3546
    %3548 = vmatpush1.msra.mxu0 %v3547
    %3549 = vmatprep.subr.mxu0 0.0
    %v3550 = vand.u32 %v3327, 4294901760
    %v3551 = vsub.f32 %v3327, %v3550
    %3552 = vmatpush1.msra.mxu0 %v3551
    %3553 = vmatprep.subr.mxu0 0.0
    %v3554 = vand.u32 %v3328, 4294901760
    %v3555 = vsub.f32 %v3328, %v3554
    %3556 = vmatpush1.msra.mxu0 %v3555
    %3557 = vmatprep.subr.mxu0 0.0
    %v3558 = vand.u32 %v3329, 4294901760
    %v3559 = vsub.f32 %v3329, %v3558
    %3560 = vmatpush1.msra.mxu0 %v3559
    %3561 = vmatprep.subr.mxu0 0.0
    %3562 = vmatpush1.msra.mxu0 0.0
    %3563 = vmatprep.subr.mxu0 0.0
    %3564 = vmatpush1.msra.mxu0 0.0
    %3565 = vmatprep.subr.mxu0 0.0
    %3566 = vmatpush1.msra.mxu0 0.0
    %3567 = vmatprep.subr.mxu0 0.0
    %3568 = vmatpush1.msra.mxu0 0.0
    %3569 = vmatprep.subr.mxu0 0.0
    %3570 = vmatpush1.msra.mxu0 0.0
    %3571 = vmatprep.subr.mxu0 0.0
    %3572 = vmatpush1.msra.mxu0 0.0
    %3573 = vmatprep.subr.mxu0 0.0
    %3574 = vmatpush1.msra.mxu0 0.0
    %3575 = vmatprep.subr.mxu0 0.0
    %3576 = vmatpush1.msra.mxu0 0.0
    %3577 = vmatprep.subr.mxu0 0.0
    %3578 = vmatpush1.msra.mxu0 0.0
    %3579 = vmatprep.subr.mxu0 0.0
    %3580 = vmatpush1.msra.mxu0 0.0
    %3581 = vmatprep.subr.mxu0 0.0
    %3582 = vmatpush1.msra.mxu0 0.0
    %3583 = vmatprep.subr.mxu0 0.0
    %3584 = vmatpush1.msra.mxu0 0.0
    %3585 = vmatprep.subr.mxu0 0.0
    %3586 = vmatpush1.msra.mxu0 0.0
    %3587 = vmatprep.subr.mxu0 0.0
    %3588 = vmatpush1.msra.mxu0 0.0
    %3589 = vmatprep.subr.mxu0 0.0
    %3590 = vmatpush1.msra.mxu0 0.0
    %3591 = vmatprep.subr.mxu0 0.0
    %3592 = vmatpush1.msra.mxu0 0.0
    %3593 = vmatprep.subr.mxu0 0.0
    %3594 = vmatpush1.msra.mxu0 0.0
    %3595 = vmatprep.subr.mxu0 0.0
    %3596 = vmatpush1.msra.mxu0 0.0
    %3597 = vmatprep.subr.mxu0 0.0
    %3598 = vmatpush1.msra.mxu0 0.0
    %3599 = vmatprep.subr.mxu0 0.0
    %3600 = vmatpush1.msra.mxu0 0.0
    %3601 = vmatprep.subr.mxu0 0.0
    %3602 = vmatpush1.msra.mxu0 0.0
    %3603 = vmatprep.subr.mxu0 0.0
    %3604 = vmatpush1.msra.mxu0 0.0
    %3605 = vmatprep.subr.mxu0 0.0
    %3606 = vmatpush1.msra.mxu0 0.0
    %3607 = vmatprep.subr.mxu0 0.0
    %3608 = vmatpush1.msra.mxu0 0.0
    %3609 = vmatprep.mubr.f32.mxu0 0.0
    %v3610 = vand.u32 %v3333, 4294901760
    %v3611 = vsub.f32 %v3333, %v3610
    %3612 = vmatmul.mubr.f32.gmra.mrb[0].mxu0 %v3611
    %v3613 = vpop.f32.mrb[0].mxu0
    %v3614 = vadd.f32 %v3526, %v3613
    %v3615 = vpop.f32.mrb[0].mxu0
    %3616 = vdwg.mxu0
    %3617 = vmatprep.subr.mxu0 0.0
    %v3618 = vand.u32 %v3322, 4294901760
    %3619 = vmatpush1.msra.mxu0 %v3618
    %3620 = vmatprep.subr.mxu0 0.0
    %v3621 = vand.u32 %v3323, 4294901760
    %3622 = vmatpush1.msra.mxu0 %v3621
    %3623 = vmatprep.subr.mxu0 0.0
    %v3624 = vand.u32 %v3324, 4294901760
    %3625 = vmatpush1.msra.mxu0 %v3624
    %3626 = vmatprep.subr.mxu0 0.0
    %v3627 = vand.u32 %v3325, 4294901760
    %3628 = vmatpush1.msra.mxu0 %v3627
    %3629 = vmatprep.subr.mxu0 0.0
    %v3630 = vand.u32 %v3326, 4294901760
    %3631 = vmatpush1.msra.mxu0 %v3630
    %3632 = vmatprep.subr.mxu0 0.0
    %v3633 = vand.u32 %v3327, 4294901760
    %3634 = vmatpush1.msra.mxu0 %v3633
    %3635 = vmatprep.subr.mxu0 0.0
    %v3636 = vand.u32 %v3328, 4294901760
    %3637 = vmatpush1.msra.mxu0 %v3636
    %3638 = vmatprep.subr.mxu0 0.0
    %v3639 = vand.u32 %v3329, 4294901760
    %3640 = vmatpush1.msra.mxu0 %v3639
    %3641 = vmatprep.subr.mxu0 0.0
    %3642 = vmatpush1.msra.mxu0 0.0
    %3643 = vmatprep.subr.mxu0 0.0
    %3644 = vmatpush1.msra.mxu0 0.0
    %3645 = vmatprep.subr.mxu0 0.0
    %3646 = vmatpush1.msra.mxu0 0.0
    %3647 = vmatprep.subr.mxu0 0.0
    %3648 = vmatpush1.msra.mxu0 0.0
    %3649 = vmatprep.subr.mxu0 0.0
    %3650 = vmatpush1.msra.mxu0 0.0
    %3651 = vmatprep.subr.mxu0 0.0
    %3652 = vmatpush1.msra.mxu0 0.0
    %3653 = vmatprep.subr.mxu0 0.0
    %3654 = vmatpush1.msra.mxu0 0.0
    %3655 = vmatprep.subr.mxu0 0.0
    %3656 = vmatpush1.msra.mxu0 0.0
    %3657 = vmatprep.subr.mxu0 0.0
    %3658 = vmatpush1.msra.mxu0 0.0
    %3659 = vmatprep.subr.mxu0 0.0
    %3660 = vmatpush1.msra.mxu0 0.0
    %3661 = vmatprep.subr.mxu0 0.0
    %3662 = vmatpush1.msra.mxu0 0.0
    %3663 = vmatprep.subr.mxu0 0.0
    %3664 = vmatpush1.msra.mxu0 0.0
    %3665 = vmatprep.subr.mxu0 0.0
    %3666 = vmatpush1.msra.mxu0 0.0
    %3667 = vmatprep.subr.mxu0 0.0
    %3668 = vmatpush1.msra.mxu0 0.0
    %3669 = vmatprep.subr.mxu0 0.0
    %3670 = vmatpush1.msra.mxu0 0.0
    %3671 = vmatprep.subr.mxu0 0.0
    %3672 = vmatpush1.msra.mxu0 0.0
    %3673 = vmatprep.subr.mxu0 0.0
    %3674 = vmatpush1.msra.mxu0 0.0
    %3675 = vmatprep.subr.mxu0 0.0
    %3676 = vmatpush1.msra.mxu0 0.0
    %3677 = vmatprep.subr.mxu0 0.0
    %3678 = vmatpush1.msra.mxu0 0.0
    %3679 = vmatprep.subr.mxu0 0.0
    %3680 = vmatpush1.msra.mxu0 0.0
    %3681 = vmatprep.subr.mxu0 0.0
    %3682 = vmatpush1.msra.mxu0 0.0
    %3683 = vmatprep.subr.mxu0 0.0
    %3684 = vmatpush1.msra.mxu0 0.0
    %3685 = vmatprep.subr.mxu0 0.0
    %3686 = vmatpush1.msra.mxu0 0.0
    %3687 = vmatprep.subr.mxu0 0.0
    %3688 = vmatpush1.msra.mxu0 0.0
    %3689 = vmatprep.mubr.f32.mxu0 0.0
    %v3690 = vand.u32 %v3333, 4294901760
    %v3691 = vsub.f32 %v3333, %v3690
    %v3692 = vand.u32 %v3691, 4294901760
    %3693 = vmatmul.mubr.f32.gmra.mrb[0].mxu0 %v3692
    %v3694 = vpop.f32.mrb[0].mxu0
    %v3695 = vadd.f32 %v3614, %v3694
    %v3696 = vpop.f32.mrb[0].mxu0
    %3697 = vdwg.mxu0
    %3698 = vmatprep.subr.mxu0 0.0
    %v3699 = vand.u32 %v3322, 4294901760
    %v3700 = vsub.f32 %v3322, %v3699
    %v3701 = vand.u32 %v3700, 4294901760
    %3702 = vmatpush1.msra.mxu0 %v3701
    %3703 = vmatprep.subr.mxu0 0.0
    %v3704 = vand.u32 %v3323, 4294901760
    %v3705 = vsub.f32 %v3323, %v3704
    %v3706 = vand.u32 %v3705, 4294901760
    %3707 = vmatpush1.msra.mxu0 %v3706
    %3708 = vmatprep.subr.mxu0 0.0
    %v3709 = vand.u32 %v3324, 4294901760
    %v3710 = vsub.f32 %v3324, %v3709
    %v3711 = vand.u32 %v3710, 4294901760
    %3712 = vmatpush1.msra.mxu0 %v3711
    %3713 = vmatprep.subr.mxu0 0.0
    %v3714 = vand.u32 %v3325, 4294901760
    %v3715 = vsub.f32 %v3325, %v3714
    %v3716 = vand.u32 %v3715, 4294901760
    %3717 = vmatpush1.msra.mxu0 %v3716
    %3718 = vmatprep.subr.mxu0 0.0
    %v3719 = vand.u32 %v3326, 4294901760
    %v3720 = vsub.f32 %v3326, %v3719
    %v3721 = vand.u32 %v3720, 4294901760
    %3722 = vmatpush1.msra.mxu0 %v3721
    %3723 = vmatprep.subr.mxu0 0.0
    %v3724 = vand.u32 %v3327, 4294901760
    %v3725 = vsub.f32 %v3327, %v3724
    %v3726 = vand.u32 %v3725, 4294901760
    %3727 = vmatpush1.msra.mxu0 %v3726
    %3728 = vmatprep.subr.mxu0 0.0
    %v3729 = vand.u32 %v3328, 4294901760
    %v3730 = vsub.f32 %v3328, %v3729
    %v3731 = vand.u32 %v3730, 4294901760
    %3732 = vmatpush1.msra.mxu0 %v3731
    %3733 = vmatprep.subr.mxu0 0.0
    %v3734 = vand.u32 %v3329, 4294901760
    %v3735 = vsub.f32 %v3329, %v3734
    %v3736 = vand.u32 %v3735, 4294901760
    %3737 = vmatpush1.msra.mxu0 %v3736
    %3738 = vmatprep.subr.mxu0 0.0
    %3739 = vmatpush1.msra.mxu0 0.0
    %3740 = vmatprep.subr.mxu0 0.0
    %3741 = vmatpush1.msra.mxu0 0.0
    %3742 = vmatprep.subr.mxu0 0.0
    %3743 = vmatpush1.msra.mxu0 0.0
    %3744 = vmatprep.subr.mxu0 0.0
    %3745 = vmatpush1.msra.mxu0 0.0
    %3746 = vmatprep.subr.mxu0 0.0
    %3747 = vmatpush1.msra.mxu0 0.0
    %3748 = vmatprep.subr.mxu0 0.0
    %3749 = vmatpush1.msra.mxu0 0.0
    %3750 = vmatprep.subr.mxu0 0.0
    %3751 = vmatpush1.msra.mxu0 0.0
    %3752 = vmatprep.subr.mxu0 0.0
    %3753 = vmatpush1.msra.mxu0 0.0
    %3754 = vmatprep.subr.mxu0 0.0
    %3755 = vmatpush1.msra.mxu0 0.0
    %3756 = vmatprep.subr.mxu0 0.0
    %3757 = vmatpush1.msra.mxu0 0.0
    %3758 = vmatprep.subr.mxu0 0.0
    %3759 = vmatpush1.msra.mxu0 0.0
    %3760 = vmatprep.subr.mxu0 0.0
    %3761 = vmatpush1.msra.mxu0 0.0
    %3762 = vmatprep.subr.mxu0 0.0
    %3763 = vmatpush1.msra.mxu0 0.0
    %3764 = vmatprep.subr.mxu0 0.0
    %3765 = vmatpush1.msra.mxu0 0.0
    %3766 = vmatprep.subr.mxu0 0.0
    %3767 = vmatpush1.msra.mxu0 0.0
    %3768 = vmatprep.subr.mxu0 0.0
    %3769 = vmatpush1.msra.mxu0 0.0
    %3770 = vmatprep.subr.mxu0 0.0
    %3771 = vmatpush1.msra.mxu0 0.0
    %3772 = vmatprep.subr.mxu0 0.0
    %3773 = vmatpush1.msra.mxu0 0.0
    %3774 = vmatprep.subr.mxu0 0.0
    %3775 = vmatpush1.msra.mxu0 0.0
    %3776 = vmatprep.subr.mxu0 0.0
    %3777 = vmatpush1.msra.mxu0 0.0
    %3778 = vmatprep.subr.mxu0 0.0
    %3779 = vmatpush1.msra.mxu0 0.0
    %3780 = vmatprep.subr.mxu0 0.0
    %3781 = vmatpush1.msra.mxu0 0.0
    %3782 = vmatprep.subr.mxu0 0.0
    %3783 = vmatpush1.msra.mxu0 0.0
    %3784 = vmatprep.subr.mxu0 0.0
    %3785 = vmatpush1.msra.mxu0 0.0
    %3786 = vmatprep.mubr.f32.mxu0 0.0
    %v3787 = vand.u32 %v3333, 4294901760
    %3788 = vmatmul.mubr.f32.gmra.mrb[0].mxu0 %v3787
    %v3789 = vpop.f32.mrb[0].mxu0
    %v3790 = vadd.f32 %v3695, %v3789
    %v3791 = vpop.f32.mrb[0].mxu0
    %3792 = vdwg.mxu0
    %3793 = vmatprep.subr.mxu0 0.0
    %v3794 = vand.u32 %v3322, 4294901760
    %3795 = vmatpush1.msra.mxu0 %v3794
    %3796 = vmatprep.subr.mxu0 0.0
    %v3797 = vand.u32 %v3323, 4294901760
    %3798 = vmatpush1.msra.mxu0 %v3797
    %3799 = vmatprep.subr.mxu0 0.0
    %v3800 = vand.u32 %v3324, 4294901760
    %3801 = vmatpush1.msra.mxu0 %v3800
    %3802 = vmatprep.subr.mxu0 0.0
    %v3803 = vand.u32 %v3325, 4294901760
    %3804 = vmatpush1.msra.mxu0 %v3803
    %3805 = vmatprep.subr.mxu0 0.0
    %v3806 = vand.u32 %v3326, 4294901760
    %3807 = vmatpush1.msra.mxu0 %v3806
    %3808 = vmatprep.subr.mxu0 0.0
    %v3809 = vand.u32 %v3327, 4294901760
    %3810 = vmatpush1.msra.mxu0 %v3809
    %3811 = vmatprep.subr.mxu0 0.0
    %v3812 = vand.u32 %v3328, 4294901760
    %3813 = vmatpush1.msra.mxu0 %v3812
    %3814 = vmatprep.subr.mxu0 0.0
    %v3815 = vand.u32 %v3329, 4294901760
    %3816 = vmatpush1.msra.mxu0 %v3815
    %3817 = vmatprep.subr.mxu0 0.0
    %3818 = vmatpush1.msra.mxu0 0.0
    %3819 = vmatprep.subr.mxu0 0.0
    %3820 = vmatpush1.msra.mxu0 0.0
    %3821 = vmatprep.subr.mxu0 0.0
    %3822 = vmatpush1.msra.mxu0 0.0
    %3823 = vmatprep.subr.mxu0 0.0
    %3824 = vmatpush1.msra.mxu0 0.0
    %3825 = vmatprep.subr.mxu0 0.0
    %3826 = vmatpush1.msra.mxu0 0.0
    %3827 = vmatprep.subr.mxu0 0.0
    %3828 = vmatpush1.msra.mxu0 0.0
    %3829 = vmatprep.subr.mxu0 0.0
    %3830 = vmatpush1.msra.mxu0 0.0
    %3831 = vmatprep.subr.mxu0 0.0
    %3832 = vmatpush1.msra.mxu0 0.0
    %3833 = vmatprep.subr.mxu0 0.0
    %3834 = vmatpush1.msra.mxu0 0.0
    %3835 = vmatprep.subr.mxu0 0.0
    %3836 = vmatpush1.msra.mxu0 0.0
    %3837 = vmatprep.subr.mxu0 0.0
    %3838 = vmatpush1.msra.mxu0 0.0
    %3839 = vmatprep.subr.mxu0 0.0
    %3840 = vmatpush1.msra.mxu0 0.0
    %3841 = vmatprep.subr.mxu0 0.0
    %3842 = vmatpush1.msra.mxu0 0.0
    %3843 = vmatprep.subr.mxu0 0.0
    %3844 = vmatpush1.msra.mxu0 0.0
    %3845 = vmatprep.subr.mxu0 0.0
    %3846 = vmatpush1.msra.mxu0 0.0
    %3847 = vmatprep.subr.mxu0 0.0
    %3848 = vmatpush1.msra.mxu0 0.0
    %3849 = vmatprep.subr.mxu0 0.0
    %3850 = vmatpush1.msra.mxu0 0.0
    %3851 = vmatprep.subr.mxu0 0.0
    %3852 = vmatpush1.msra.mxu0 0.0
    %3853 = vmatprep.subr.mxu0 0.0
    %3854 = vmatpush1.msra.mxu0 0.0
    %3855 = vmatprep.subr.mxu0 0.0
    %3856 = vmatpush1.msra.mxu0 0.0
    %3857 = vmatprep.subr.mxu0 0.0
    %3858 = vmatpush1.msra.mxu0 0.0
    %3859 = vmatprep.subr.mxu0 0.0
    %3860 = vmatpush1.msra.mxu0 0.0
    %3861 = vmatprep.subr.mxu0 0.0
    %3862 = vmatpush1.msra.mxu0 0.0
    %3863 = vmatprep.subr.mxu0 0.0
    %3864 = vmatpush1.msra.mxu0 0.0
    %3865 = vmatprep.mubr.f32.mxu0 0.0
    %v3866 = vand.u32 %v3333, 4294901760
    %3867 = vmatmul.mubr.f32.gmra.mrb[0].mxu0 %v3866
    %v3868 = vpop.f32.mrb[0].mxu0
    %v3869 = vadd.f32 %v3790, %v3868
    %v3870 = vpop.f32.mrb[0].mxu0
    %3871 = vdwg.mxu0
    %vm3872 = vcmask 588800
    %3873 = vst.msk [vmem:[#allocation2] sm:$0xff] %vm3872, %v3869
    // Predicated region
    $region42: #{tpu_custom_call.1} parent=1 // pred_check
      _
    $region43: #{tpu_custom_call.1} parent=1 // pred_check_branch
      %3875 = sbr.rel (0) target = $region45
    $region44: #{tpu_custom_call.1} parent=1 // pred_region
      %s3877 = ssub.s32 128, 128
      %3878 = vsyncadd [#allocation3], %s3877
      %s3880 = sshll.u32 [#allocation2], 4
      %s3881 = int_to_ptr.vmem [resolvable:$true] %s3880
      %3883 = dma.vmem_to_hbm [thread:$0]  %s3881, 128, %s10, [#allocation3]
    $region45: #{tpu_custom_call.1} parent=1 // pred_fallthru
      _
    // Predicated region
    $region46: #{tpu_custom_call.1} parent=1 // pred_check
      _
    $region47: #{tpu_custom_call.1} parent=1 // pred_check_branch
      %3885 = sbr.rel (0) target = $region49
    $region48: #{tpu_custom_call.1} parent=1 // pred_region
      %3886 = dma.done [#allocation3], 128
    $region49: #{tpu_custom_call.1} parent=1 // pred_fallthru
      _
    %3887 = vsyncpa [#allocation3], 1

</llo_original>
